<compile_context>
chip_gen: v7x
topology: tpu7x:2x2x1
jax: 0.10.0
libtpu: 0.0.40
codegen_flags: <defaults>
</compile_context>

<pallas_src>
import functools

import jax
import jax.numpy as jnp
from jax.experimental import pallas as pl
from jax.experimental.pallas import tpu as pltpu


# ---------------------------------------------------------------- fused Pallas kernel

def _reslv2_fused_kernel(x_ref, ws_ref, bs_ref,
                         w1_ref, b1_ref, w2_ref, b2_ref,
                         w3_ref, b3_ref, wd_ref, bd_ref,
                         sh_ref, bh_ref,
                         o_ref, y1_pad_ref, *, wo, hw, pad):
    g = x_ref.shape[0]           # images merged into this grid step
    c = x_ref.shape[2]           # raw input channels
    cf = ws_ref.shape[1]         # backbone feature channels
    c3 = w1_ref.shape[1]         # 3 * planes  (three necks packed along cout)
    cout3 = w3_ref.shape[1]      # 3 * c_out
    ghw = g * hw

    # ---- stem: (pixel-norm + 1x1 conv + BN) folded into (ws, bs); ReLU; 2x2 maxpool.
    # One MXU pass over all 4 window positions of all merged images (M = 4*g*hw); the pool
    # is an elementwise max over the 4 slabs (exact: the per-position affine map is shared
    # and ReLU is monotone, so max commutes with both).
    xs = x_ref[...].reshape(g * 4 * hw, c).astype(jnp.bfloat16)
    y = jnp.dot(xs, ws_ref[...], preferred_element_type=jnp.float32) + bs_ref[...]
    y = y.reshape(g, 4, hw, cf)
    pooled = jnp.maximum(jnp.maximum(y[:, 0], y[:, 1]),
                         jnp.maximum(y[:, 2], y[:, 3]))
    feat = jnp.maximum(pooled, 0.0).reshape(ghw, cf)     # (g*hw, cf) backbone output
    feat_bf = feat.astype(jnp.bfloat16)

    # DropBlock2D is identity at inference.

    # ---- three Bottleneck necks, packed along the output-channel axis.
    # conv1 1x1 + BN + ReLU
    y1 = jnp.dot(feat_bf, w1_ref[...], preferred_element_type=jnp.float32) + b1_ref[...]
    y1 = jnp.maximum(y1, 0.0)                            # (g*hw, c3)

    # 3x3 conv (stride 1, pad 1) fully in VMEM: each merged image gets its own vertically
    # zero-padded slab of the bf16 scratch; the 9 taps are shifted reads + matmul-acc.
    # Only the halo rows are zeroed; the hw interior rows are fully overwritten below.
    zero_halo = jnp.zeros((g, pad, c3), jnp.bfloat16)
    y1_pad_ref[:, pl.ds(0, pad), :] = zero_halo
    y1_pad_ref[:, pl.ds(pad + hw, pad), :] = zero_halo
    y1_pad_ref[:, pl.ds(pad, hw), :] = y1.reshape(g, hw, c3).astype(jnp.bfloat16)

    # horizontal wrap masks, hoisted out of the tap loop (0/1 multiplicative, bf16)
    col = jax.lax.broadcasted_iota(jnp.int32, (ghw, c3), 0) % wo
    mask_l = (col >= 1).astype(jnp.bfloat16)             # source column w-1 must exist
    mask_r = (col <= wo - 2).astype(jnp.bfloat16)        # source column w+1 must exist

    acc = jnp.zeros((ghw, c3), jnp.float32)
    for t in range(9):                                   # tap order: dh-major, dw-minor
        dh, dw = t // 3, t % 3
        shift = (dh - 1) * wo + (dw - 1)
        tap = y1_pad_ref[:, pl.ds(pad + shift, hw), :].reshape(ghw, c3)
        if dw == 0:
            tap = tap * mask_l
        elif dw == 2:
            tap = tap * mask_r
        acc = acc + jnp.dot(tap, w2_ref[t], preferred_element_type=jnp.float32)
    y2 = jnp.maximum(acc + b2_ref[...], 0.0)             # (g*hw, c3)  conv2 + BN + ReLU

    # conv3 1x1 + BN, downsample 1x1 + BN, residual add, ReLU (lane-dense: 3*c_out >= 128)
    y3 = jnp.dot(y2.astype(jnp.bfloat16), w3_ref[...],
                 preferred_element_type=jnp.float32) + b3_ref[...]
    ds = jnp.dot(feat_bf, wd_ref[...],
                 preferred_element_type=jnp.float32) + bd_ref[...]
    z = jnp.maximum(y3 + ds, 0.0)                        # (g*hw, 3*c_out)

    # ---- heads: per-image global average pool + BN neck, packed for the three branches.
    pooled_feat = jnp.mean(z.reshape(g, hw, cout3), axis=1)   # (g, 3*c_out)
    o_ref[0] = (pooled_feat * sh_ref[...] + bh_ref[...]).astype(o_ref.dtype)


# ---------------------------------------------------------------- wrapper

def _default_images_per_step(batch):
    """Single-TC chips (v5e/v6e): merge the whole batch into the matmul M dim, grid=(1,).
    Multi-TC chips (v7x, and v4/v5p megacore): keep >=2 'parallel' grid steps."""
    try:
        kind = jax.devices()[0].device_kind.lower()
    except Exception:
        kind = ""
    multi_core = any(tag in kind for tag in ("v7", "7x", "v4", "v5p"))
    if multi_core and batch % 2 == 0:
        return batch // 2
    return batch


def reslv2_forward(x_nchw, p, *, images_per_step=None):
    B, C, H, W = x_nchw.shape
    assert H % 2 == 0 and W % 2 == 0
    Ho, Wo = H // 2, W // 2
    HW = Ho * Wo
    assert HW % 16 == 0, "spatial size after pooling must be sublane-tile aligned"
    pad = ((Wo + 1 + 15) // 16) * 16                     # bf16 sublane-tile aligned halo
    c3 = p["w1"].shape[1]
    c_out3 = p["w3"].shape[1]

    G = images_per_step if images_per_step is not None else _default_images_per_step(B)
    assert B % G == 0
    steps = B // G

    # Layout plumbing on the tiny raw input only: NCHW -> (B, 4*Ho*Wo, C) where the row
    # index is (window-position k, spatial) so the kernel can fuse the 2x2 maxpool and
    # run the stem as a single M = 4*G*HW matmul.
    x_win = (jnp.transpose(x_nchw, (0, 2, 3, 1))
             .reshape(B, Ho, 2, Wo, 2, C)
             .transpose(0, 2, 4, 1, 3, 5)
             .reshape(B, 4 * HW, C))

    full = lambda shape: pl.BlockSpec(shape, lambda b, _s=shape: (0,) * len(_s))

    out = pl.pallas_call(
        functools.partial(_reslv2_fused_kernel, wo=Wo, hw=HW, pad=pad),
        out_shape=jax.ShapeDtypeStruct((steps, G, c_out3), jnp.float32),
        grid=(steps,),
        in_specs=[
            pl.BlockSpec((G, 4 * HW, C), lambda b: (b, 0, 0)),
            full(p["stem_w"].shape), full(p["stem_b"].shape),
            full(p["w1"].shape), full(p["b1"].shape),
            full(p["w2"].shape), full(p["b2"].shape),
            full(p["w3"].shape), full(p["b3"].shape),
            full(p["wd"].shape), full(p["bd"].shape),
            full(p["head_s"].shape), full(p["head_b"].shape),
        ],
        out_specs=pl.BlockSpec((1, G, c_out3), lambda b: (b, 0, 0)),
        scratch_shapes=[pltpu.VMEM((G, HW + 2 * pad, c3), jnp.bfloat16)],
        compiler_params=pltpu.CompilerParams(dimension_semantics=("parallel",)),
    )(x_win, p["stem_w"], p["stem_b"],
      p["w1"], p["b1"], p["w2"], p["b2"],
      p["w3"], p["b3"], p["wd"], p["bd"],
      p["head_s"], p["head_b"])

    # pred_feat = torch.cat([b1_pool_feat, b2_pool_feat, b3_pool_feat], dim=1)
    return out.reshape(B, c_out3)


# ---------------------------------------------------------------- parameters

def make_raw_params(key, c_in=3, c_feat=32, planes=16, c_out=64):
    """Per-layer parameters in the PyTorch layout (conv weight + separate BN scale/bias),
    before any folding/packing."""
    ks = jax.random.split(key, 16)
    w = lambda k, shape: 0.05 * jax.random.normal(k, shape, jnp.float32)
    ones = lambda n: jnp.ones((n,), jnp.float32)
    zeros = lambda n: jnp.zeros((n,), jnp.float32)
    raw = {
        "pixel_mean": jnp.array([123.675, 116.28, 103.53], jnp.float32),
        "pixel_std": jnp.array([58.395, 57.12, 57.375], jnp.float32),
        "stem": {"w": w(ks[0], (c_in, c_feat)), "s": ones(c_feat), "b": zeros(c_feat)},
        "necks": [], "heads": [],
    }
    for i in range(3):
        kk = jax.random.split(ks[1 + i], 4)
        raw["necks"].append({
            "w1": w(kk[0], (c_feat, planes)),      "s1": ones(planes), "b1": zeros(planes),
            "w2": w(kk[1], (9, planes, planes)),   "s2": ones(planes), "b2": zeros(planes),
            "w3": w(kk[2], (planes, c_out)),       "s3": ones(c_out),  "b3": zeros(c_out),
            "wd": w(kk[3], (c_feat, c_out)),       "sd": ones(c_out),  "bd": zeros(c_out),
        })
        raw["heads"].append({
            "s": 1.0 + 0.05 * jax.random.normal(ks[8 + i], (c_out,), jnp.float32),
            "b": zeros(c_out),
        })
    return raw


def _block_diag(blocks):
    rows = sum(b.shape[0] for b in blocks)
    cols = sum(b.shape[1] for b in blocks)
    out = jnp.zeros((rows, cols), blocks[0].dtype)
    r = c = 0
    for b in blocks:
        out = out.at[r:r + b.shape[0], c:c + b.shape[1]].set(b)
        r += b.shape[0]
        c += b.shape[1]
    return out


def fold_and_pack(raw):
    """Fold pixel normalization + BN scale into conv weights and pack the three necks
    along the output-channel axis so the whole forward is one fused Pallas kernel."""
    mean, std = raw["pixel_mean"], raw["pixel_std"]

    # stem: relu(((x - mean)/std) @ W * s + b)  ==  relu(x @ W'' + b'')
    ws = raw["stem"]["w"] * raw["stem"]["s"][None, :]
    stem_w = ws / std[:, None]
    stem_b = raw["stem"]["b"][None, :] - (mean / std)[None, :] @ ws

    necks, heads = raw["necks"], raw["heads"]
    fold = lambda w, s: w * s[None, :]                 # BN scale -> weight columns
    w1 = jnp.concatenate([fold(n["w1"], n["s1"]) for n in necks], axis=1)
    b1 = jnp.concatenate([n["b1"] for n in necks])[None, :]
    w2 = jnp.stack([_block_diag([fold(n["w2"][t], n["s2"]) for n in necks])
                    for t in range(9)])
    b2 = jnp.concatenate([n["b2"] for n in necks])[None, :]
    w3 = _block_diag([fold(n["w3"], n["s3"]) for n in necks])
    b3 = jnp.concatenate([n["b3"] for n in necks])[None, :]
    wd = jnp.concatenate([fold(n["wd"], n["sd"]) for n in necks], axis=1)
    bd = jnp.concatenate([n["bd"] for n in necks])[None, :]
    head_s = jnp.concatenate([h["s"] for h in heads])[None, :]
    head_b = jnp.concatenate([h["b"] for h in heads])[None, :]

    bf = lambda x: x.astype(jnp.bfloat16)              # bf16 MXU inputs, f32 accumulation
    return {
        "stem_w": bf(stem_w), "stem_b": stem_b,
        "w1": bf(w1), "b1": b1,
        "w2": bf(w2), "b2": b2,
        "w3": bf(w3), "b3": b3,
        "wd": bf(wd), "bd": bd,
        "head_s": head_s, "head_b": head_b,
    }


# ---------------------------------------------------------------- demo

if __name__ == "__main__":
    key = jax.random.PRNGKey(0)
    k_img, k_par = jax.random.split(key)

    B, C, H, W = 2, 3, 16, 16   # small NCHW image batch, like the PyTorch module expects
    images = 255.0 * jax.random.uniform(k_img, (B, C, H, W), jnp.float32)

    raw_params = make_raw_params(k_par)
    params = fold_and_pack(raw_params)

    pred_feat = jax.jit(reslv2_forward)(images, params)
    pred_feat = jax.block_until_ready(pred_feat)

    assert pred_feat.shape == (B, 3 * 64), pred_feat.shape
    assert bool(jnp.all(jnp.isfinite(pred_feat)))
    print("KERNEL_OK")
</pallas_src>

<mosaic_0001>
module attributes {stable_mosaic.version = 11 : i64} {
  func.func @_reslv2_fused_kernel(%arg0: i32, %arg1: memref<2x256x3xf32, #tpu.memory_space<vmem>>, %arg2: memref<3x32xbf16, #tpu.memory_space<vmem>>, %arg3: memref<1x32xf32, #tpu.memory_space<vmem>>, %arg4: memref<32x48xbf16, #tpu.memory_space<vmem>>, %arg5: memref<1x48xf32, #tpu.memory_space<vmem>>, %arg6: memref<9x48x48xbf16, #tpu.memory_space<vmem>>, %arg7: memref<1x48xf32, #tpu.memory_space<vmem>>, %arg8: memref<48x192xbf16, #tpu.memory_space<vmem>>, %arg9: memref<1x192xf32, #tpu.memory_space<vmem>>, %arg10: memref<32x192xbf16, #tpu.memory_space<vmem>>, %arg11: memref<1x192xf32, #tpu.memory_space<vmem>>, %arg12: memref<1x192xf32, #tpu.memory_space<vmem>>, %arg13: memref<1x192xf32, #tpu.memory_space<vmem>>, %arg14: memref<1x2x192xf32, #tpu.memory_space<vmem>>, %arg15: memref<2x96x48xbf16, #tpu.memory_space<vmem>>) attributes {dimension_semantics = [#tpu.dimension_semantics<parallel>], iteration_bounds = array<i64: 1>, scalar_prefetch = 0 : i64, scratch_operands = 1 : i64, tpu.core_type = #tpu.core_type<tc>, window_params = [{transform_indices = @transform_0, window_bounds = array<i64: 2, 256, 3>}, {pipeline_mode = #tpu.pipeline_mode<synchronous>, transform_indices = @transform_1, window_bounds = array<i64: 3, 32>}, {pipeline_mode = #tpu.pipeline_mode<synchronous>, transform_indices = @transform_2, window_bounds = array<i64: 1, 32>}, {pipeline_mode = #tpu.pipeline_mode<synchronous>, transform_indices = @transform_3, window_bounds = array<i64: 32, 48>}, {pipeline_mode = #tpu.pipeline_mode<synchronous>, transform_indices = @transform_4, window_bounds = array<i64: 1, 48>}, {pipeline_mode = #tpu.pipeline_mode<synchronous>, transform_indices = @transform_5, window_bounds = array<i64: 9, 48, 48>}, {pipeline_mode = #tpu.pipeline_mode<synchronous>, transform_indices = @transform_6, window_bounds = array<i64: 1, 48>}, {pipeline_mode = #tpu.pipeline_mode<synchronous>, transform_indices = @transform_7, window_bounds = array<i64: 48, 192>}, {pipeline_mode = #tpu.pipeline_mode<synchronous>, transform_indices = @transform_8, window_bounds = array<i64: 1, 192>}, {pipeline_mode = #tpu.pipeline_mode<synchronous>, transform_indices = @transform_9, window_bounds = array<i64: 32, 192>}, {pipeline_mode = #tpu.pipeline_mode<synchronous>, transform_indices = @transform_10, window_bounds = array<i64: 1, 192>}, {pipeline_mode = #tpu.pipeline_mode<synchronous>, transform_indices = @transform_11, window_bounds = array<i64: 1, 192>}, {pipeline_mode = #tpu.pipeline_mode<synchronous>, transform_indices = @transform_12, window_bounds = array<i64: 1, 192>}, {transform_indices = @transform_13, window_bounds = array<i64: 1, 2, 192>}]} {
    %c0 = arith.constant 0 : index
    %c0_0 = arith.constant 0 : index
    %c0_1 = arith.constant 0 : index
    %0 = vector.load %arg1[%c0, %c0_0, %c0_1] : memref<2x256x3xf32, #tpu.memory_space<vmem>>, vector<2x256x3xf32>
    %1 = vector.shape_cast %0 : vector<2x256x3xf32> to vector<512x3xf32>
    %2 = arith.truncf %1 : vector<512x3xf32> to vector<512x3xbf16>
    %c0_2 = arith.constant 0 : index
    %c0_3 = arith.constant 0 : index
    %3 = vector.load %arg2[%c0_2, %c0_3] : memref<3x32xbf16, #tpu.memory_space<vmem>>, vector<3x32xbf16>
    %cst = arith.constant dense<0.000000e+00> : vector<512x32xf32>
    %4 = tpu.matmul %2, %3, %cst {dimension_numbers = #tpu.dot_dimension_numbers<[1], [0], [0], [1], [0, 0, 1, 1], [], []>} : vector<512x3xbf16>, vector<3x32xbf16>, vector<512x32xf32> -> vector<512x32xf32>
    %c0_4 = arith.constant 0 : index
    %c0_5 = arith.constant 0 : index
    %5 = vector.load %arg3[%c0_4, %c0_5] : memref<1x32xf32, #tpu.memory_space<vmem>>, vector<1x32xf32>
    %6 = vector.broadcast %5 : vector<1x32xf32> to vector<512x32xf32>
    %7 = arith.addf %4, %6 : vector<512x32xf32>
    %8 = vector.shape_cast %7 : vector<512x32xf32> to vector<2x4x64x32xf32>
    %9 = vector.extract_strided_slice %8 {offsets = [0, 0, 0, 0], sizes = [2, 1, 64, 32], strides = [1, 1, 1, 1]} : vector<2x4x64x32xf32> to vector<2x1x64x32xf32>
    %10 = vector.shape_cast %9 : vector<2x1x64x32xf32> to vector<2x64x32xf32>
    %11 = vector.extract_strided_slice %8 {offsets = [0, 1, 0, 0], sizes = [2, 1, 64, 32], strides = [1, 1, 1, 1]} : vector<2x4x64x32xf32> to vector<2x1x64x32xf32>
    %12 = vector.shape_cast %11 : vector<2x1x64x32xf32> to vector<2x64x32xf32>
    %13 = arith.maximumf %10, %12 : vector<2x64x32xf32>
    %14 = vector.extract_strided_slice %8 {offsets = [0, 2, 0, 0], sizes = [2, 1, 64, 32], strides = [1, 1, 1, 1]} : vector<2x4x64x32xf32> to vector<2x1x64x32xf32>
    %15 = vector.shape_cast %14 : vector<2x1x64x32xf32> to vector<2x64x32xf32>
    %16 = vector.extract_strided_slice %8 {offsets = [0, 3, 0, 0], sizes = [2, 1, 64, 32], strides = [1, 1, 1, 1]} : vector<2x4x64x32xf32> to vector<2x1x64x32xf32>
    %17 = vector.shape_cast %16 : vector<2x1x64x32xf32> to vector<2x64x32xf32>
    %18 = arith.maximumf %15, %17 : vector<2x64x32xf32>
    %19 = arith.maximumf %13, %18 : vector<2x64x32xf32>
    %cst_6 = arith.constant 0.000000e+00 : f32
    %20 = vector.broadcast %cst_6 : f32 to vector<2x64x32xf32>
    %21 = arith.maximumf %19, %20 : vector<2x64x32xf32>
    %22 = vector.shape_cast %21 : vector<2x64x32xf32> to vector<128x32xf32>
    %23 = arith.truncf %22 : vector<128x32xf32> to vector<128x32xbf16>
    %c0_7 = arith.constant 0 : index
    %c0_8 = arith.constant 0 : index
    %24 = vector.load %arg4[%c0_7, %c0_8] : memref<32x48xbf16, #tpu.memory_space<vmem>>, vector<32x48xbf16>
    %cst_9 = arith.constant dense<0.000000e+00> : vector<128x48xf32>
    %25 = tpu.matmul %23, %24, %cst_9 {dimension_numbers = #tpu.dot_dimension_numbers<[1], [0], [0], [1], [0, 0, 1, 1], [], []>} : vector<128x32xbf16>, vector<32x48xbf16>, vector<128x48xf32> -> vector<128x48xf32>
    %c0_10 = arith.constant 0 : index
    %c0_11 = arith.constant 0 : index
    %26 = vector.load %arg5[%c0_10, %c0_11] : memref<1x48xf32, #tpu.memory_space<vmem>>, vector<1x48xf32>
    %27 = vector.broadcast %26 : vector<1x48xf32> to vector<128x48xf32>
    %28 = arith.addf %25, %27 : vector<128x48xf32>
    %cst_12 = arith.constant 0.000000e+00 : f32
    %29 = vector.broadcast %cst_12 : f32 to vector<128x48xf32>
    %30 = arith.maximumf %28, %29 : vector<128x48xf32>
    %cst_13 = arith.constant 0.000000e+00 : bf16
    %31 = vector.broadcast %cst_13 : bf16 to vector<2x16x48xbf16>
    %c0_14 = arith.constant 0 : index
    %c0_15 = arith.constant 0 : index
    %c0_16 = arith.constant 0 : index
    %32 = vector.load %arg15[%c0_14, %c0_15, %c0_16] : memref<2x96x48xbf16, #tpu.memory_space<vmem>>, vector<2x16x48xbf16>
    tpu.vector_store %arg15[%c0_14, %c0_15, %c0_16], %31 {strides = array<i32>} : memref<2x96x48xbf16, #tpu.memory_space<vmem>>, vector<2x16x48xbf16>,
    %c0_17 = arith.constant 0 : index
    %c80 = arith.constant 80 : index
    %c0_18 = arith.constant 0 : index
    %33 = vector.load %arg15[%c0_17, %c80, %c0_18] : memref<2x96x48xbf16, #tpu.memory_space<vmem>>, vector<2x16x48xbf16>
    tpu.vector_store %arg15[%c0_17, %c80, %c0_18], %31 {strides = array<i32>} : memref<2x96x48xbf16, #tpu.memory_space<vmem>>, vector<2x16x48xbf16>,
    %34 = vector.shape_cast %30 : vector<128x48xf32> to vector<2x64x48xf32>
    %35 = arith.truncf %34 : vector<2x64x48xf32> to vector<2x64x48xbf16>
    %c0_19 = arith.constant 0 : index
    %c16 = arith.constant 16 : index
    %c0_20 = arith.constant 0 : index
    %36 = vector.load %arg15[%c0_19, %c16, %c0_20] : memref<2x96x48xbf16, #tpu.memory_space<vmem>>, vector<2x64x48xbf16>
    tpu.vector_store %arg15[%c0_19, %c16, %c0_20], %35 {strides = array<i32>} : memref<2x96x48xbf16, #tpu.memory_space<vmem>>, vector<2x64x48xbf16>,
    %37 = tpu.iota {dimensions = array<i32: 0>} : vector<128x48xi32>
    %c8_i32 = arith.constant 8 : i32
    %c0_i32 = arith.constant 0 : i32
    %38 = arith.cmpi eq, %c8_i32, %c0_i32 : i32
    %c1_i32 = arith.constant 1 : i32
    %39 = arith.select %38, %c1_i32, %c8_i32 : i32
    %40 = vector.broadcast %39 : i32 to vector<128x48xi32>
    %41 = arith.remsi %37, %40 : vector<128x48xi32>
    %c0_i32_21 = arith.constant 0 : i32
    %42 = vector.broadcast %c0_i32_21 : i32 to vector<128x48xi32>
    %43 = arith.cmpi ne, %41, %42 : vector<128x48xi32>
    %c0_i32_22 = arith.constant 0 : i32
    %44 = vector.broadcast %c0_i32_22 : i32 to vector<128x48xi32>
    %45 = arith.cmpi slt, %41, %44 : vector<128x48xi32>
    %c0_i32_23 = arith.constant 0 : i32
    %46 = arith.cmpi slt, %39, %c0_i32_23 : i32
    %47 = vector.broadcast %46 : i1 to vector<128x48xi1>
    %48 = vector.broadcast %47 : vector<128x48xi1> to vector<128x48xi1>
    %49 = arith.xori %45, %48 : vector<128x48xi1>
    %50 = arith.andi %49, %43 : vector<128x48xi1>
    %51 = vector.broadcast %39 : i32 to vector<128x48xi32>
    %52 = arith.addi %41, %51 : vector<128x48xi32>
    %53 = arith.select %50, %52, %41 : vector<128x48xi1>, vector<128x48xi32>
    %c1_i32_24 = arith.constant 1 : i32
    %54 = vector.broadcast %c1_i32_24 : i32 to vector<128x48xi32>
    %55 = arith.cmpi sge, %53, %54 : vector<128x48xi32>
    %56 = arith.extui %55 : vector<128x48xi1> to vector<128x48xi32>
    %57 = arith.sitofp %56 : vector<128x48xi32> to vector<128x48xf32>
    %58 = arith.truncf %57 : vector<128x48xf32> to vector<128x48xbf16>
    %c6_i32 = arith.constant 6 : i32
    %59 = vector.broadcast %c6_i32 : i32 to vector<128x48xi32>
    %60 = arith.cmpi sle, %53, %59 : vector<128x48xi32>
    %61 = arith.extui %60 : vector<128x48xi1> to vector<128x48xi32>
    %62 = arith.sitofp %61 : vector<128x48xi32> to vector<128x48xf32>
    %63 = arith.truncf %62 : vector<128x48xf32> to vector<128x48xbf16>
    %cst_25 = arith.constant 0.000000e+00 : f32
    %64 = vector.broadcast %cst_25 : f32 to vector<128x48xf32>
    %c0_26 = arith.constant 0 : index
    %c7 = arith.constant 7 : index
    %c0_27 = arith.constant 0 : index
    %65 = vector.load %arg15[%c0_26, %c7, %c0_27] : memref<2x96x48xbf16, #tpu.memory_space<vmem>>, vector<2x64x48xbf16>
    %66 = vector.shape_cast %65 : vector<2x64x48xbf16> to vector<128x48xbf16>
    %67 = arith.mulf %66, %58 : vector<128x48xbf16>
    %c0_28 = arith.constant 0 : index
    %c0_29 = arith.constant 0 : index
    %c0_30 = arith.constant 0 : index
    %68 = vector.load %arg6[%c0_28, %c0_29, %c0_30] : memref<9x48x48xbf16, #tpu.memory_space<vmem>>, vector<1x48x48xbf16>
    %69 = vector.shape_cast %68 : vector<1x48x48xbf16> to vector<48x48xbf16>
    %cst_31 = arith.constant dense<0.000000e+00> : vector<128x48xf32>
    %70 = tpu.matmul %67, %69, %cst_31 {dimension_numbers = #tpu.dot_dimension_numbers<[1], [0], [0], [1], [0, 0, 1, 1], [], []>} : vector<128x48xbf16>, vector<48x48xbf16>, vector<128x48xf32> -> vector<128x48xf32>
    %71 = arith.addf %64, %70 : vector<128x48xf32>
    %c0_32 = arith.constant 0 : index
    %c8 = arith.constant 8 : index
    %c0_33 = arith.constant 0 : index
    %72 = vector.load %arg15[%c0_32, %c8, %c0_33] : memref<2x96x48xbf16, #tpu.memory_space<vmem>>, vector<2x64x48xbf16>
    %73 = vector.shape_cast %72 : vector<2x64x48xbf16> to vector<128x48xbf16>
    %c1 = arith.constant 1 : index
    %c0_34 = arith.constant 0 : index
    %c0_35 = arith.constant 0 : index
    %74 = vector.load %arg6[%c1, %c0_34, %c0_35] : memref<9x48x48xbf16, #tpu.memory_space<vmem>>, vector<1x48x48xbf16>
    %75 = vector.shape_cast %74 : vector<1x48x48xbf16> to vector<48x48xbf16>
    %cst_36 = arith.constant dense<0.000000e+00> : vector<128x48xf32>
    %76 = tpu.matmul %73, %75, %cst_36 {dimension_numbers = #tpu.dot_dimension_numbers<[1], [0], [0], [1], [0, 0, 1, 1], [], []>} : vector<128x48xbf16>, vector<48x48xbf16>, vector<128x48xf32> -> vector<128x48xf32>
    %77 = arith.addf %71, %76 : vector<128x48xf32>
    %c0_37 = arith.constant 0 : index
    %c9 = arith.constant 9 : index
    %c0_38 = arith.constant 0 : index
    %78 = vector.load %arg15[%c0_37, %c9, %c0_38] : memref<2x96x48xbf16, #tpu.memory_space<vmem>>, vector<2x64x48xbf16>
    %79 = vector.shape_cast %78 : vector<2x64x48xbf16> to vector<128x48xbf16>
    %80 = arith.mulf %79, %63 : vector<128x48xbf16>
    %c2 = arith.constant 2 : index
    %c0_39 = arith.constant 0 : index
    %c0_40 = arith.constant 0 : index
    %81 = vector.load %arg6[%c2, %c0_39, %c0_40] : memref<9x48x48xbf16, #tpu.memory_space<vmem>>, vector<1x48x48xbf16>
    %82 = vector.shape_cast %81 : vector<1x48x48xbf16> to vector<48x48xbf16>
    %cst_41 = arith.constant dense<0.000000e+00> : vector<128x48xf32>
    %83 = tpu.matmul %80, %82, %cst_41 {dimension_numbers = #tpu.dot_dimension_numbers<[1], [0], [0], [1], [0, 0, 1, 1], [], []>} : vector<128x48xbf16>, vector<48x48xbf16>, vector<128x48xf32> -> vector<128x48xf32>
    %84 = arith.addf %77, %83 : vector<128x48xf32>
    %c0_42 = arith.constant 0 : index
    %c15 = arith.constant 15 : index
    %c0_43 = arith.constant 0 : index
    %85 = vector.load %arg15[%c0_42, %c15, %c0_43] : memref<2x96x48xbf16, #tpu.memory_space<vmem>>, vector<2x64x48xbf16>
    %86 = vector.shape_cast %85 : vector<2x64x48xbf16> to vector<128x48xbf16>
    %87 = arith.mulf %86, %58 : vector<128x48xbf16>
    %c3 = arith.constant 3 : index
    %c0_44 = arith.constant 0 : index
    %c0_45 = arith.constant 0 : index
    %88 = vector.load %arg6[%c3, %c0_44, %c0_45] : memref<9x48x48xbf16, #tpu.memory_space<vmem>>, vector<1x48x48xbf16>
    %89 = vector.shape_cast %88 : vector<1x48x48xbf16> to vector<48x48xbf16>
    %cst_46 = arith.constant dense<0.000000e+00> : vector<128x48xf32>
    %90 = tpu.matmul %87, %89, %cst_46 {dimension_numbers = #tpu.dot_dimension_numbers<[1], [0], [0], [1], [0, 0, 1, 1], [], []>} : vector<128x48xbf16>, vector<48x48xbf16>, vector<128x48xf32> -> vector<128x48xf32>
    %91 = arith.addf %84, %90 : vector<128x48xf32>
    %c0_47 = arith.constant 0 : index
    %c16_48 = arith.constant 16 : index
    %c0_49 = arith.constant 0 : index
    %92 = vector.load %arg15[%c0_47, %c16_48, %c0_49] : memref<2x96x48xbf16, #tpu.memory_space<vmem>>, vector<2x64x48xbf16>
    %93 = vector.shape_cast %92 : vector<2x64x48xbf16> to vector<128x48xbf16>
    %c4 = arith.constant 4 : index
    %c0_50 = arith.constant 0 : index
    %c0_51 = arith.constant 0 : index
    %94 = vector.load %arg6[%c4, %c0_50, %c0_51] : memref<9x48x48xbf16, #tpu.memory_space<vmem>>, vector<1x48x48xbf16>
    %95 = vector.shape_cast %94 : vector<1x48x48xbf16> to vector<48x48xbf16>
    %cst_52 = arith.constant dense<0.000000e+00> : vector<128x48xf32>
    %96 = tpu.matmul %93, %95, %cst_52 {dimension_numbers = #tpu.dot_dimension_numbers<[1], [0], [0], [1], [0, 0, 1, 1], [], []>} : vector<128x48xbf16>, vector<48x48xbf16>, vector<128x48xf32> -> vector<128x48xf32>
    %97 = arith.addf %91, %96 : vector<128x48xf32>
    %c0_53 = arith.constant 0 : index
    %c17 = arith.constant 17 : index
    %c0_54 = arith.constant 0 : index
    %98 = vector.load %arg15[%c0_53, %c17, %c0_54] : memref<2x96x48xbf16, #tpu.memory_space<vmem>>, vector<2x64x48xbf16>
    %99 = vector.shape_cast %98 : vector<2x64x48xbf16> to vector<128x48xbf16>
    %100 = arith.mulf %99, %63 : vector<128x48xbf16>
    %c5 = arith.constant 5 : index
    %c0_55 = arith.constant 0 : index
    %c0_56 = arith.constant 0 : index
    %101 = vector.load %arg6[%c5, %c0_55, %c0_56] : memref<9x48x48xbf16, #tpu.memory_space<vmem>>, vector<1x48x48xbf16>
    %102 = vector.shape_cast %101 : vector<1x48x48xbf16> to vector<48x48xbf16>
    %cst_57 = arith.constant dense<0.000000e+00> : vector<128x48xf32>
    %103 = tpu.matmul %100, %102, %cst_57 {dimension_numbers = #tpu.dot_dimension_numbers<[1], [0], [0], [1], [0, 0, 1, 1], [], []>} : vector<128x48xbf16>, vector<48x48xbf16>, vector<128x48xf32> -> vector<128x48xf32>
    %104 = arith.addf %97, %103 : vector<128x48xf32>
    %c0_58 = arith.constant 0 : index
    %c23 = arith.constant 23 : index
    %c0_59 = arith.constant 0 : index
    %105 = vector.load %arg15[%c0_58, %c23, %c0_59] : memref<2x96x48xbf16, #tpu.memory_space<vmem>>, vector<2x64x48xbf16>
    %106 = vector.shape_cast %105 : vector<2x64x48xbf16> to vector<128x48xbf16>
    %107 = arith.mulf %106, %58 : vector<128x48xbf16>
    %c6 = arith.constant 6 : index
    %c0_60 = arith.constant 0 : index
    %c0_61 = arith.constant 0 : index
    %108 = vector.load %arg6[%c6, %c0_60, %c0_61] : memref<9x48x48xbf16, #tpu.memory_space<vmem>>, vector<1x48x48xbf16>
    %109 = vector.shape_cast %108 : vector<1x48x48xbf16> to vector<48x48xbf16>
    %cst_62 = arith.constant dense<0.000000e+00> : vector<128x48xf32>
    %110 = tpu.matmul %107, %109, %cst_62 {dimension_numbers = #tpu.dot_dimension_numbers<[1], [0], [0], [1], [0, 0, 1, 1], [], []>} : vector<128x48xbf16>, vector<48x48xbf16>, vector<128x48xf32> -> vector<128x48xf32>
    %111 = arith.addf %104, %110 : vector<128x48xf32>
    %c0_63 = arith.constant 0 : index
    %c24 = arith.constant 24 : index
    %c0_64 = arith.constant 0 : index
    %112 = vector.load %arg15[%c0_63, %c24, %c0_64] : memref<2x96x48xbf16, #tpu.memory_space<vmem>>, vector<2x64x48xbf16>
    %113 = vector.shape_cast %112 : vector<2x64x48xbf16> to vector<128x48xbf16>
    %c7_65 = arith.constant 7 : index
    %c0_66 = arith.constant 0 : index
    %c0_67 = arith.constant 0 : index
    %114 = vector.load %arg6[%c7_65, %c0_66, %c0_67] : memref<9x48x48xbf16, #tpu.memory_space<vmem>>, vector<1x48x48xbf16>
    %115 = vector.shape_cast %114 : vector<1x48x48xbf16> to vector<48x48xbf16>
    %cst_68 = arith.constant dense<0.000000e+00> : vector<128x48xf32>
    %116 = tpu.matmul %113, %115, %cst_68 {dimension_numbers = #tpu.dot_dimension_numbers<[1], [0], [0], [1], [0, 0, 1, 1], [], []>} : vector<128x48xbf16>, vector<48x48xbf16>, vector<128x48xf32> -> vector<128x48xf32>
    %117 = arith.addf %111, %116 : vector<128x48xf32>
    %c0_69 = arith.constant 0 : index
    %c25 = arith.constant 25 : index
    %c0_70 = arith.constant 0 : index
    %118 = vector.load %arg15[%c0_69, %c25, %c0_70] : memref<2x96x48xbf16, #tpu.memory_space<vmem>>, vector<2x64x48xbf16>
    %119 = vector.shape_cast %118 : vector<2x64x48xbf16> to vector<128x48xbf16>
    %120 = arith.mulf %119, %63 : vector<128x48xbf16>
    %c8_71 = arith.constant 8 : index
    %c0_72 = arith.constant 0 : index
    %c0_73 = arith.constant 0 : index
    %121 = vector.load %arg6[%c8_71, %c0_72, %c0_73] : memref<9x48x48xbf16, #tpu.memory_space<vmem>>, vector<1x48x48xbf16>
    %122 = vector.shape_cast %121 : vector<1x48x48xbf16> to vector<48x48xbf16>
    %cst_74 = arith.constant dense<0.000000e+00> : vector<128x48xf32>
    %123 = tpu.matmul %120, %122, %cst_74 {dimension_numbers = #tpu.dot_dimension_numbers<[1], [0], [0], [1], [0, 0, 1, 1], [], []>} : vector<128x48xbf16>, vector<48x48xbf16>, vector<128x48xf32> -> vector<128x48xf32>
    %124 = arith.addf %117, %123 : vector<128x48xf32>
    %c0_75 = arith.constant 0 : index
    %c0_76 = arith.constant 0 : index
    %125 = vector.load %arg7[%c0_75, %c0_76] : memref<1x48xf32, #tpu.memory_space<vmem>>, vector<1x48xf32>
    %126 = vector.broadcast %125 : vector<1x48xf32> to vector<128x48xf32>
    %127 = arith.addf %124, %126 : vector<128x48xf32>
    %cst_77 = arith.constant 0.000000e+00 : f32
    %128 = vector.broadcast %cst_77 : f32 to vector<128x48xf32>
    %129 = arith.maximumf %127, %128 : vector<128x48xf32>
    %130 = arith.truncf %129 : vector<128x48xf32> to vector<128x48xbf16>
    %c0_78 = arith.constant 0 : index
    %c0_79 = arith.constant 0 : index
    %131 = vector.load %arg8[%c0_78, %c0_79] : memref<48x192xbf16, #tpu.memory_space<vmem>>, vector<48x192xbf16>
    %cst_80 = arith.constant dense<0.000000e+00> : vector<128x192xf32>
    %132 = tpu.matmul %130, %131, %cst_80 {dimension_numbers = #tpu.dot_dimension_numbers<[1], [0], [0], [1], [0, 0, 1, 1], [], []>} : vector<128x48xbf16>, vector<48x192xbf16>, vector<128x192xf32> -> vector<128x192xf32>
    %c0_81 = arith.constant 0 : index
    %c0_82 = arith.constant 0 : index
    %133 = vector.load %arg9[%c0_81, %c0_82] : memref<1x192xf32, #tpu.memory_space<vmem>>, vector<1x192xf32>
    %134 = vector.broadcast %133 : vector<1x192xf32> to vector<128x192xf32>
    %135 = arith.addf %132, %134 : vector<128x192xf32>
    %c0_83 = arith.constant 0 : index
    %c0_84 = arith.constant 0 : index
    %136 = vector.load %arg10[%c0_83, %c0_84] : memref<32x192xbf16, #tpu.memory_space<vmem>>, vector<32x192xbf16>
    %cst_85 = arith.constant dense<0.000000e+00> : vector<128x192xf32>
    %137 = tpu.matmul %23, %136, %cst_85 {dimension_numbers = #tpu.dot_dimension_numbers<[1], [0], [0], [1], [0, 0, 1, 1], [], []>} : vector<128x32xbf16>, vector<32x192xbf16>, vector<128x192xf32> -> vector<128x192xf32>
    %c0_86 = arith.constant 0 : index
    %c0_87 = arith.constant 0 : index
    %138 = vector.load %arg11[%c0_86, %c0_87] : memref<1x192xf32, #tpu.memory_space<vmem>>, vector<1x192xf32>
    %139 = vector.broadcast %138 : vector<1x192xf32> to vector<128x192xf32>
    %140 = arith.addf %137, %139 : vector<128x192xf32>
    %141 = arith.addf %135, %140 : vector<128x192xf32>
    %cst_88 = arith.constant 0.000000e+00 : f32
    %142 = vector.broadcast %cst_88 : f32 to vector<128x192xf32>
    %143 = arith.maximumf %141, %142 : vector<128x192xf32>
    %144 = vector.shape_cast %143 : vector<128x192xf32> to vector<2x64x192xf32>
    %cst_89 = arith.constant dense<0.000000e+00> : vector<2x192xf32>
    %145 = vector.multi_reduction <add>, %144, %cst_89 [1] : vector<2x64x192xf32> to vector<2x192xf32>
    %cst_90 = arith.constant 6.400000e+01 : f32
    %146 = vector.broadcast %cst_90 : f32 to vector<2x192xf32>
    %147 = arith.divf %145, %146 : vector<2x192xf32>
    %c0_91 = arith.constant 0 : index
    %c0_92 = arith.constant 0 : index
    %148 = vector.load %arg12[%c0_91, %c0_92] : memref<1x192xf32, #tpu.memory_space<vmem>>, vector<1x192xf32>
    %149 = vector.broadcast %148 : vector<1x192xf32> to vector<2x192xf32>
    %150 = arith.mulf %147, %149 : vector<2x192xf32>
    %c0_93 = arith.constant 0 : index
    %c0_94 = arith.constant 0 : index
    %151 = vector.load %arg13[%c0_93, %c0_94] : memref<1x192xf32, #tpu.memory_space<vmem>>, vector<1x192xf32>
    %152 = vector.broadcast %151 : vector<1x192xf32> to vector<2x192xf32>
    %153 = arith.addf %150, %152 : vector<2x192xf32>
    %c0_95 = arith.constant 0 : index
    %c0_96 = arith.constant 0 : index
    %c0_97 = arith.constant 0 : index
    %154 = vector.load %arg14[%c0_95, %c0_96, %c0_97] : memref<1x2x192xf32, #tpu.memory_space<vmem>>, vector<1x2x192xf32>
    %155 = vector.shape_cast %154 : vector<1x2x192xf32> to vector<2x192xf32>
    %156 = vector.shape_cast %153 : vector<2x192xf32> to vector<1x2x192xf32>
    tpu.vector_store %arg14[%c0_95, %c0_96, %c0_97], %156 {strides = array<i32>} : memref<1x2x192xf32, #tpu.memory_space<vmem>>, vector<1x2x192xf32>,
    return
  }
  func.func @transform_0(%arg0: i32) -> (i32, i32, i32) {
    %c0_i32 = arith.constant 0 : i32
    %c0_i32_0 = arith.constant 0 : i32
    %c0_i32_1 = arith.constant 0 : i32
    return %arg0, %c0_i32, %c0_i32_0 : i32, i32, i32
  }
  func.func @transform_1(%arg0: i32) -> (i32, i32) {
    %c0_i32 = arith.constant 0 : i32
    %c0_i32_0 = arith.constant 0 : i32
    %c0_i32_1 = arith.constant 0 : i32
    return %c0_i32, %c0_i32_0 : i32, i32
  }
  func.func @transform_2(%arg0: i32) -> (i32, i32) {
    %c0_i32 = arith.constant 0 : i32
    %c0_i32_0 = arith.constant 0 : i32
    %c0_i32_1 = arith.constant 0 : i32
    return %c0_i32, %c0_i32_0 : i32, i32
  }
  func.func @transform_3(%arg0: i32) -> (i32, i32) {
    %c0_i32 = arith.constant 0 : i32
    %c0_i32_0 = arith.constant 0 : i32
    %c0_i32_1 = arith.constant 0 : i32
    return %c0_i32, %c0_i32_0 : i32, i32
  }
  func.func @transform_4(%arg0: i32) -> (i32, i32) {
    %c0_i32 = arith.constant 0 : i32
    %c0_i32_0 = arith.constant 0 : i32
    %c0_i32_1 = arith.constant 0 : i32
    return %c0_i32, %c0_i32_0 : i32, i32
  }
  func.func @transform_5(%arg0: i32) -> (i32, i32, i32) {
    %c0_i32 = arith.constant 0 : i32
    %c0_i32_0 = arith.constant 0 : i32
    %c0_i32_1 = arith.constant 0 : i32
    %c0_i32_2 = arith.constant 0 : i32
    return %c0_i32, %c0_i32_0, %c0_i32_1 : i32, i32, i32
  }
  func.func @transform_6(%arg0: i32) -> (i32, i32) {
    %c0_i32 = arith.constant 0 : i32
    %c0_i32_0 = arith.constant 0 : i32
    %c0_i32_1 = arith.constant 0 : i32
    return %c0_i32, %c0_i32_0 : i32, i32
  }
  func.func @transform_7(%arg0: i32) -> (i32, i32) {
    %c0_i32 = arith.constant 0 : i32
    %c0_i32_0 = arith.constant 0 : i32
    %c0_i32_1 = arith.constant 0 : i32
    return %c0_i32, %c0_i32_0 : i32, i32
  }
  func.func @transform_8(%arg0: i32) -> (i32, i32) {
    %c0_i32 = arith.constant 0 : i32
    %c0_i32_0 = arith.constant 0 : i32
    %c0_i32_1 = arith.constant 0 : i32
    return %c0_i32, %c0_i32_0 : i32, i32
  }
  func.func @transform_9(%arg0: i32) -> (i32, i32) {
    %c0_i32 = arith.constant 0 : i32
    %c0_i32_0 = arith.constant 0 : i32
    %c0_i32_1 = arith.constant 0 : i32
    return %c0_i32, %c0_i32_0 : i32, i32
  }
  func.func @transform_10(%arg0: i32) -> (i32, i32) {
    %c0_i32 = arith.constant 0 : i32
    %c0_i32_0 = arith.constant 0 : i32
    %c0_i32_1 = arith.constant 0 : i32
    return %c0_i32, %c0_i32_0 : i32, i32
  }
  func.func @transform_11(%arg0: i32) -> (i32, i32) {
    %c0_i32 = arith.constant 0 : i32
    %c0_i32_0 = arith.constant 0 : i32
    %c0_i32_1 = arith.constant 0 : i32
    return %c0_i32, %c0_i32_0 : i32, i32
  }
  func.func @transform_12(%arg0: i32) -> (i32, i32) {
    %c0_i32 = arith.constant 0 : i32
    %c0_i32_0 = arith.constant 0 : i32
    %c0_i32_1 = arith.constant 0 : i32
    return %c0_i32, %c0_i32_0 : i32, i32
  }
  func.func @transform_13(%arg0: i32) -> (i32, i32, i32) {
    %c0_i32 = arith.constant 0 : i32
    %c0_i32_0 = arith.constant 0 : i32
    %c0_i32_1 = arith.constant 0 : i32
    return %arg0, %c0_i32, %c0_i32_0 : i32, i32, i32
  }
}

</mosaic_0001>

<llo_original>
// kernel: reslv2_forward.1
$region0: #{reslv2_forward.1}
  #allocation0 [shape = 'u32[]', space=smem, size = 0x4, offset = 0x4, fixed_abs, tag = 'smem constant byte address 0x4 - core index']
  #allocation1 [shape = 'u32[144,128]{1,0:T(1,128)}', space=vmem, size = 0x12000, scoped, tag = 'internal scratch']
  #allocation2 [shape = 'bf16[2,96,48]{2,1,0:T(16,128)(2,1)}', space=vmem, size = 0xc000, scoped, tag = 'scratch operand']
  %s0 = inlined_call_operand.vmem [shape: f32[2,256,3], index: 0, kind: input, shape index: {}]
  %s1 = inlined_call_operand.vmem [shape: bf16[3,32], index: 1, kind: input, shape index: {}]
  %s2 = inlined_call_operand.vmem [shape: f32[1,32], index: 2, kind: input, shape index: {}]
  %s3 = inlined_call_operand.vmem [shape: bf16[32,48], index: 3, kind: input, shape index: {}]
  %s4 = inlined_call_operand.vmem [shape: f32[1,48], index: 4, kind: input, shape index: {}]
  %s5 = inlined_call_operand.vmem [shape: bf16[9,48,48], index: 5, kind: input, shape index: {}]
  %s6 = inlined_call_operand.vmem [shape: f32[1,48], index: 6, kind: input, shape index: {}]
  %s7 = inlined_call_operand.vmem [shape: bf16[48,192], index: 7, kind: input, shape index: {}]
  %s8 = inlined_call_operand.vmem [shape: f32[1,192], index: 8, kind: input, shape index: {}]
  %s9 = inlined_call_operand.vmem [shape: bf16[32,192], index: 9, kind: input, shape index: {}]
  %s10 = inlined_call_operand.vmem [shape: f32[1,192], index: 10, kind: input, shape index: {}]
  %s11 = inlined_call_operand.vmem [shape: f32[1,192], index: 11, kind: input, shape index: {}]
  %s12 = inlined_call_operand.vmem [shape: f32[1,192], index: 12, kind: input, shape index: {}]
  %s13 = inlined_call_operand.hbm [shape: f32[1,2,192], index: 13, kind: output, shape index: {}]
  %s14 = sld [smem:[#allocation0]]
  $region62: #{reslv2_forward.1} parent=0
    _
  %s16 = ssub.s32 1, %s14
  %s17 = scalar_select 0, %s16, %s14
  $region1: #{reslv2_forward.1} parent=0
    #allocation3 [shape = 'u8[2048]{0}', space=vmem, size = 0x800, scoped, tag = 'output window, operand 0, single buffered']
    #allocation4 [shape = 's32[1]{0}', space=sflag, size = 0x4, scoped, tag = 'scoped memory for reslv2_forward.1']
    %18 = vsyncpa [#allocation4], 0
    // Predicated region
    $region2: #{reslv2_forward.1} parent=1 // pred_check
      _
    $region3: #{reslv2_forward.1} parent=1 // pred_check_branch
      %20 = sbr.rel (0) target = $region5
    $region4: #{reslv2_forward.1} parent=1 // pred_region
      _
    $region5: #{reslv2_forward.1} parent=1 // pred_fallthru
      _
    // Predicated region
    $region6: #{reslv2_forward.1} parent=1 // pred_check
      _
    $region7: #{reslv2_forward.1} parent=1 // pred_check_branch
      %22 = sbr.rel (0) target = $region9
    $region8: #{reslv2_forward.1} parent=1 // pred_region
      _
    $region9: #{reslv2_forward.1} parent=1 // pred_fallthru
      _
    // Predicated region
    $region10: #{reslv2_forward.1} parent=1 // pred_check
      _
    $region11: #{reslv2_forward.1} parent=1 // pred_check_branch
      %24 = sbr.rel (0) target = $region13
    $region12: #{reslv2_forward.1} parent=1 // pred_region
      _
    $region13: #{reslv2_forward.1} parent=1 // pred_fallthru
      _
    // Predicated region
    $region14: #{reslv2_forward.1} parent=1 // pred_check
      _
    $region15: #{reslv2_forward.1} parent=1 // pred_check_branch
      %26 = sbr.rel (0) target = $region17
    $region16: #{reslv2_forward.1} parent=1 // pred_region
      _
    $region17: #{reslv2_forward.1} parent=1 // pred_fallthru
      _
    // Predicated region
    $region18: #{reslv2_forward.1} parent=1 // pred_check
      _
    $region19: #{reslv2_forward.1} parent=1 // pred_check_branch
      %28 = sbr.rel (0) target = $region21
    $region20: #{reslv2_forward.1} parent=1 // pred_region
      _
    $region21: #{reslv2_forward.1} parent=1 // pred_fallthru
      _
    // Predicated region
    $region22: #{reslv2_forward.1} parent=1 // pred_check
      _
    $region23: #{reslv2_forward.1} parent=1 // pred_check_branch
      %30 = sbr.rel (0) target = $region25
    $region24: #{reslv2_forward.1} parent=1 // pred_region
      _
    $region25: #{reslv2_forward.1} parent=1 // pred_fallthru
      _
    // Predicated region
    $region26: #{reslv2_forward.1} parent=1 // pred_check
      _
    $region27: #{reslv2_forward.1} parent=1 // pred_check_branch
      %32 = sbr.rel (0) target = $region29
    $region28: #{reslv2_forward.1} parent=1 // pred_region
      _
    $region29: #{reslv2_forward.1} parent=1 // pred_fallthru
      _
    // Predicated region
    $region30: #{reslv2_forward.1} parent=1 // pred_check
      _
    $region31: #{reslv2_forward.1} parent=1 // pred_check_branch
      %34 = sbr.rel (0) target = $region33
    $region32: #{reslv2_forward.1} parent=1 // pred_region
      _
    $region33: #{reslv2_forward.1} parent=1 // pred_fallthru
      _
    // Predicated region
    $region34: #{reslv2_forward.1} parent=1 // pred_check
      _
    $region35: #{reslv2_forward.1} parent=1 // pred_check_branch
      %36 = sbr.rel (0) target = $region37
    $region36: #{reslv2_forward.1} parent=1 // pred_region
      _
    $region37: #{reslv2_forward.1} parent=1 // pred_fallthru
      _
    // Predicated region
    $region38: #{reslv2_forward.1} parent=1 // pred_check
      _
    $region39: #{reslv2_forward.1} parent=1 // pred_check_branch
      %38 = sbr.rel (0) target = $region41
    $region40: #{reslv2_forward.1} parent=1 // pred_region
      _
    $region41: #{reslv2_forward.1} parent=1 // pred_fallthru
      _
    // Predicated region
    $region42: #{reslv2_forward.1} parent=1 // pred_check
      _
    $region43: #{reslv2_forward.1} parent=1 // pred_check_branch
      %40 = sbr.rel (0) target = $region45
    $region44: #{reslv2_forward.1} parent=1 // pred_region
      _
    $region45: #{reslv2_forward.1} parent=1 // pred_fallthru
      _
    // Predicated region
    $region46: #{reslv2_forward.1} parent=1 // pred_check
      _
    $region47: #{reslv2_forward.1} parent=1 // pred_check_branch
      %42 = sbr.rel (0) target = $region49
    $region48: #{reslv2_forward.1} parent=1 // pred_region
      _
    $region49: #{reslv2_forward.1} parent=1 // pred_fallthru
      _
    // Predicated region
    $region50: #{reslv2_forward.1} parent=1 // pred_check
      _
    $region51: #{reslv2_forward.1} parent=1 // pred_check_branch
      %44 = sbr.rel (0) target = $region53
    $region52: #{reslv2_forward.1} parent=1 // pred_region
      _
    $region53: #{reslv2_forward.1} parent=1 // pred_fallthru
      _
    %v46 = vld [vmem:[%s0] sm:$0xff]
    %v47 = vld [vmem:[%s0 + $0x8] sm:$0xff]
    %v48 = vld [vmem:[%s0 + $0x10] sm:$0xff]
    %v49 = vld [vmem:[%s0 + $0x18] sm:$0xff]
    %v50 = vld [vmem:[%s0 + $0x20] sm:$0xff]
    %v51 = vld [vmem:[%s0 + $0x28] sm:$0xff]
    %v52 = vld [vmem:[%s0 + $0x30] sm:$0xff]
    %v53 = vld [vmem:[%s0 + $0x38] sm:$0xff]
    %v54 = vld [vmem:[%s0 + $0x40] sm:$0xff]
    %v55 = vld [vmem:[%s0 + $0x48] sm:$0xff]
    %v56 = vld [vmem:[%s0 + $0x50] sm:$0xff]
    %v57 = vld [vmem:[%s0 + $0x58] sm:$0xff]
    %v58 = vld [vmem:[%s0 + $0x60] sm:$0xff]
    %v59 = vld [vmem:[%s0 + $0x68] sm:$0xff]
    %v60 = vld [vmem:[%s0 + $0x70] sm:$0xff]
    %v61 = vld [vmem:[%s0 + $0x78] sm:$0xff]
    %v62 = vld [vmem:[%s0 + $0x80] sm:$0xff]
    %v63 = vld [vmem:[%s0 + $0x88] sm:$0xff]
    %v64 = vld [vmem:[%s0 + $0x90] sm:$0xff]
    %v65 = vld [vmem:[%s0 + $0x98] sm:$0xff]
    %v66 = vld [vmem:[%s0 + $0xa0] sm:$0xff]
    %v67 = vld [vmem:[%s0 + $0xa8] sm:$0xff]
    %v68 = vld [vmem:[%s0 + $0xb0] sm:$0xff]
    %v69 = vld [vmem:[%s0 + $0xb8] sm:$0xff]
    %v70 = vld [vmem:[%s0 + $0xc0] sm:$0xff]
    %v71 = vld [vmem:[%s0 + $0xc8] sm:$0xff]
    %v72 = vld [vmem:[%s0 + $0xd0] sm:$0xff]
    %v73 = vld [vmem:[%s0 + $0xd8] sm:$0xff]
    %v74 = vld [vmem:[%s0 + $0xe0] sm:$0xff]
    %v75 = vld [vmem:[%s0 + $0xe8] sm:$0xff]
    %v76 = vld [vmem:[%s0 + $0xf0] sm:$0xff]
    %v77 = vld [vmem:[%s0 + $0xf8] sm:$0xff]
    %v78 = vld [vmem:[%s0 + $0x100] sm:$0xff]
    %v79 = vld [vmem:[%s0 + $0x108] sm:$0xff]
    %v80 = vld [vmem:[%s0 + $0x110] sm:$0xff]
    %v81 = vld [vmem:[%s0 + $0x118] sm:$0xff]
    %v82 = vld [vmem:[%s0 + $0x120] sm:$0xff]
    %v83 = vld [vmem:[%s0 + $0x128] sm:$0xff]
    %v84 = vld [vmem:[%s0 + $0x130] sm:$0xff]
    %v85 = vld [vmem:[%s0 + $0x138] sm:$0xff]
    %v86 = vld [vmem:[%s0 + $0x140] sm:$0xff]
    %v87 = vld [vmem:[%s0 + $0x148] sm:$0xff]
    %v88 = vld [vmem:[%s0 + $0x150] sm:$0xff]
    %v89 = vld [vmem:[%s0 + $0x158] sm:$0xff]
    %v90 = vld [vmem:[%s0 + $0x160] sm:$0xff]
    %v91 = vld [vmem:[%s0 + $0x168] sm:$0xff]
    %v92 = vld [vmem:[%s0 + $0x170] sm:$0xff]
    %v93 = vld [vmem:[%s0 + $0x178] sm:$0xff]
    %v94 = vld [vmem:[%s0 + $0x180] sm:$0xff]
    %v95 = vld [vmem:[%s0 + $0x188] sm:$0xff]
    %v96 = vld [vmem:[%s0 + $0x190] sm:$0xff]
    %v97 = vld [vmem:[%s0 + $0x198] sm:$0xff]
    %v98 = vld [vmem:[%s0 + $0x1a0] sm:$0xff]
    %v99 = vld [vmem:[%s0 + $0x1a8] sm:$0xff]
    %v100 = vld [vmem:[%s0 + $0x1b0] sm:$0xff]
    %v101 = vld [vmem:[%s0 + $0x1b8] sm:$0xff]
    %v102 = vld [vmem:[%s0 + $0x1c0] sm:$0xff]
    %v103 = vld [vmem:[%s0 + $0x1c8] sm:$0xff]
    %v104 = vld [vmem:[%s0 + $0x1d0] sm:$0xff]
    %v105 = vld [vmem:[%s0 + $0x1d8] sm:$0xff]
    %v106 = vld [vmem:[%s0 + $0x1e0] sm:$0xff]
    %v107 = vld [vmem:[%s0 + $0x1e8] sm:$0xff]
    %v108 = vld [vmem:[%s0 + $0x1f0] sm:$0xff]
    %v109 = vld [vmem:[%s0 + $0x1f8] sm:$0xff]
    %v110 = vpack.c.bf16 %v47, %v46
    %v111 = vpack.c.bf16 %v49, %v48
    %v112 = vpack.c.bf16 %v51, %v50
    %v113 = vpack.c.bf16 %v53, %v52
    %v114 = vpack.c.bf16 %v55, %v54
    %v115 = vpack.c.bf16 %v57, %v56
    %v116 = vpack.c.bf16 %v59, %v58
    %v117 = vpack.c.bf16 %v61, %v60
    %v118 = vpack.c.bf16 %v63, %v62
    %v119 = vpack.c.bf16 %v65, %v64
    %v120 = vpack.c.bf16 %v67, %v66
    %v121 = vpack.c.bf16 %v69, %v68
    %v122 = vpack.c.bf16 %v71, %v70
    %v123 = vpack.c.bf16 %v73, %v72
    %v124 = vpack.c.bf16 %v75, %v74
    %v125 = vpack.c.bf16 %v77, %v76
    %v126 = vpack.c.bf16 %v79, %v78
    %v127 = vpack.c.bf16 %v81, %v80
    %v128 = vpack.c.bf16 %v83, %v82
    %v129 = vpack.c.bf16 %v85, %v84
    %v130 = vpack.c.bf16 %v87, %v86
    %v131 = vpack.c.bf16 %v89, %v88
    %v132 = vpack.c.bf16 %v91, %v90
    %v133 = vpack.c.bf16 %v93, %v92
    %v134 = vpack.c.bf16 %v95, %v94
    %v135 = vpack.c.bf16 %v97, %v96
    %v136 = vpack.c.bf16 %v99, %v98
    %v137 = vpack.c.bf16 %v101, %v100
    %v138 = vpack.c.bf16 %v103, %v102
    %v139 = vpack.c.bf16 %v105, %v104
    %v140 = vpack.c.bf16 %v107, %v106
    %v141 = vpack.c.bf16 %v109, %v108
    %v142 = vld [vmem:[%s1] sm:$0x3]
    %v143 = vld [vmem:[%s2] sm:$0x1]
    %v145 = vlaneseq
    %v146 = vshrl.u32 %v145, 7
    %v147 = vsub.s32 0, %v146
    %v148 = vrot.slane %v143, %v147
    %vm150 = vcmask 23552
    %v152 = vsel %vm150, %v110, 0
    %v155 = vsel %vm150, %v111, 0
    %v158 = vsel %vm150, %v112, 0
    %v161 = vsel %vm150, %v113, 0
    %v164 = vsel %vm150, %v114, 0
    %v167 = vsel %vm150, %v115, 0
    %v170 = vsel %vm150, %v116, 0
    %v173 = vsel %vm150, %v117, 0
    %v176 = vsel %vm150, %v118, 0
    %v179 = vsel %vm150, %v119, 0
    %v182 = vsel %vm150, %v120, 0
    %v185 = vsel %vm150, %v121, 0
    %v188 = vsel %vm150, %v122, 0
    %v191 = vsel %vm150, %v123, 0
    %v194 = vsel %vm150, %v124, 0
    %v197 = vsel %vm150, %v125, 0
    %v200 = vsel %vm150, %v126, 0
    %v203 = vsel %vm150, %v127, 0
    %v206 = vsel %vm150, %v128, 0
    %v209 = vsel %vm150, %v129, 0
    %v212 = vsel %vm150, %v130, 0
    %v215 = vsel %vm150, %v131, 0
    %v218 = vsel %vm150, %v132, 0
    %v221 = vsel %vm150, %v133, 0
    %v224 = vsel %vm150, %v134, 0
    %v227 = vsel %vm150, %v135, 0
    %v230 = vsel %vm150, %v136, 0
    %v233 = vsel %vm150, %v137, 0
    %v236 = vsel %vm150, %v138, 0
    %v239 = vsel %vm150, %v139, 0
    %v242 = vsel %vm150, %v140, 0
    %v245 = vsel %vm150, %v141, 0
    %vm247 = vcmask 1040384
    %vm248 = vcmask 1041408
    %v249 = vsel %vm247, 4294967295, 65535
    %v250 = vsel %vm248, %v249, 0
    %v252 = vand.u32 %v142, %v250
    %254 = vmatprep.subr.bf16.mxu0 0
    %255 = vmatpush1.bf16.msra.mxu0 %v252
    %256 = vmatprep.subr.bf16.mxu0 0
    %257 = vmatpush1.bf16.msra.mxu0 0
    %258 = vmatprep.subr.bf16.mxu0 0
    %259 = vmatpush1.bf16.msra.mxu0 0
    %260 = vmatprep.subr.bf16.mxu0 0
    %261 = vmatpush1.bf16.msra.mxu0 0
    %262 = vmatprep.subr.bf16.mxu0 0
    %263 = vmatpush1.bf16.msra.mxu0 0
    %264 = vmatprep.subr.bf16.mxu0 0
    %265 = vmatpush1.bf16.msra.mxu0 0
    %266 = vmatprep.subr.bf16.mxu0 0
    %267 = vmatpush1.bf16.msra.mxu0 0
    %268 = vmatprep.subr.bf16.mxu0 0
    %269 = vmatpush1.bf16.msra.mxu0 0
    %270 = vmatprep.subr.bf16.mxu0 0
    %271 = vmatpush1.bf16.msra.mxu0 0
    %272 = vmatprep.subr.bf16.mxu0 0
    %273 = vmatpush1.bf16.msra.mxu0 0
    %274 = vmatprep.subr.bf16.mxu0 0
    %275 = vmatpush1.bf16.msra.mxu0 0
    %276 = vmatprep.subr.bf16.mxu0 0
    %277 = vmatpush1.bf16.msra.mxu0 0
    %278 = vmatprep.subr.bf16.mxu0 0
    %279 = vmatpush1.bf16.msra.mxu0 0
    %280 = vmatprep.subr.bf16.mxu0 0
    %281 = vmatpush1.bf16.msra.mxu0 0
    %282 = vmatprep.subr.bf16.mxu0 0
    %283 = vmatpush1.bf16.msra.mxu0 0
    %284 = vmatprep.subr.bf16.mxu0 0
    %285 = vmatpush1.bf16.msra.mxu0 0
    %286 = vmatprep.mubr.bf16.mxu0 0
    %287 = vmatmul.mubr.bf16.gmra.mrb[0].mxu0 %v152
    %v288 = vpop.f32.mrb[0].mxu0
    %v289 = vadd.f32 %v148, %v288
    %v290 = vpop.f32.mrb[0].mxu0
    %v291 = vpop.f32.mrb[0].mxu0
    %v292 = vadd.f32 %v148, %v291
    %v293 = vpop.f32.mrb[0].mxu0
    %294 = vmatprep.mubr.bf16.mxu0 0
    %295 = vmatmul.mubr.bf16.gmra.mrb[0].mxu0 %v155
    %v296 = vpop.f32.mrb[0].mxu0
    %v297 = vadd.f32 %v148, %v296
    %v298 = vpop.f32.mrb[0].mxu0
    %v299 = vpop.f32.mrb[0].mxu0
    %v300 = vadd.f32 %v148, %v299
    %v301 = vpop.f32.mrb[0].mxu0
    %302 = vmatprep.mubr.bf16.mxu0 0
    %303 = vmatmul.mubr.bf16.gmra.mrb[0].mxu0 %v158
    %v304 = vpop.f32.mrb[0].mxu0
    %v305 = vadd.f32 %v148, %v304
    %v306 = vpop.f32.mrb[0].mxu0
    %v307 = vpop.f32.mrb[0].mxu0
    %v308 = vadd.f32 %v148, %v307
    %v309 = vpop.f32.mrb[0].mxu0
    %310 = vmatprep.mubr.bf16.mxu0 0
    %311 = vmatmul.mubr.bf16.gmra.mrb[0].mxu0 %v161
    %v312 = vpop.f32.mrb[0].mxu0
    %v313 = vadd.f32 %v148, %v312
    %v314 = vpop.f32.mrb[0].mxu0
    %v315 = vpop.f32.mrb[0].mxu0
    %v316 = vadd.f32 %v148, %v315
    %v317 = vpop.f32.mrb[0].mxu0
    %318 = vmatprep.mubr.bf16.mxu0 0
    %319 = vmatmul.mubr.bf16.gmra.mrb[0].mxu0 %v164
    %v320 = vpop.f32.mrb[0].mxu0
    %v321 = vadd.f32 %v148, %v320
    %v322 = vpop.f32.mrb[0].mxu0
    %v323 = vpop.f32.mrb[0].mxu0
    %v324 = vadd.f32 %v148, %v323
    %v325 = vpop.f32.mrb[0].mxu0
    %326 = vmatprep.mubr.bf16.mxu0 0
    %327 = vmatmul.mubr.bf16.gmra.mrb[0].mxu0 %v167
    %v328 = vpop.f32.mrb[0].mxu0
    %v329 = vadd.f32 %v148, %v328
    %v330 = vpop.f32.mrb[0].mxu0
    %v331 = vpop.f32.mrb[0].mxu0
    %v332 = vadd.f32 %v148, %v331
    %v333 = vpop.f32.mrb[0].mxu0
    %334 = vmatprep.mubr.bf16.mxu0 0
    %335 = vmatmul.mubr.bf16.gmra.mrb[0].mxu0 %v170
    %v336 = vpop.f32.mrb[0].mxu0
    %v337 = vadd.f32 %v148, %v336
    %v338 = vpop.f32.mrb[0].mxu0
    %v339 = vpop.f32.mrb[0].mxu0
    %v340 = vadd.f32 %v148, %v339
    %v341 = vpop.f32.mrb[0].mxu0
    %342 = vmatprep.mubr.bf16.mxu0 0
    %343 = vmatmul.mubr.bf16.gmra.mrb[0].mxu0 %v173
    %v344 = vpop.f32.mrb[0].mxu0
    %v345 = vadd.f32 %v148, %v344
    %v346 = vpop.f32.mrb[0].mxu0
    %v347 = vpop.f32.mrb[0].mxu0
    %v348 = vadd.f32 %v148, %v347
    %v349 = vpop.f32.mrb[0].mxu0
    %350 = vmatprep.mubr.bf16.mxu0 0
    %351 = vmatmul.mubr.bf16.gmra.mrb[0].mxu0 %v176
    %v352 = vpop.f32.mrb[0].mxu0
    %v353 = vadd.f32 %v148, %v352
    %v354 = vpop.f32.mrb[0].mxu0
    %v355 = vpop.f32.mrb[0].mxu0
    %v356 = vadd.f32 %v148, %v355
    %v357 = vpop.f32.mrb[0].mxu0
    %358 = vmatprep.mubr.bf16.mxu0 0
    %359 = vmatmul.mubr.bf16.gmra.mrb[0].mxu0 %v179
    %v360 = vpop.f32.mrb[0].mxu0
    %v361 = vadd.f32 %v148, %v360
    %v362 = vpop.f32.mrb[0].mxu0
    %v363 = vpop.f32.mrb[0].mxu0
    %v364 = vadd.f32 %v148, %v363
    %v365 = vpop.f32.mrb[0].mxu0
    %366 = vmatprep.mubr.bf16.mxu0 0
    %367 = vmatmul.mubr.bf16.gmra.mrb[0].mxu0 %v182
    %v368 = vpop.f32.mrb[0].mxu0
    %v369 = vadd.f32 %v148, %v368
    %v370 = vpop.f32.mrb[0].mxu0
    %v371 = vpop.f32.mrb[0].mxu0
    %v372 = vadd.f32 %v148, %v371
    %v373 = vpop.f32.mrb[0].mxu0
    %374 = vmatprep.mubr.bf16.mxu0 0
    %375 = vmatmul.mubr.bf16.gmra.mrb[0].mxu0 %v185
    %v376 = vpop.f32.mrb[0].mxu0
    %v377 = vadd.f32 %v148, %v376
    %v378 = vpop.f32.mrb[0].mxu0
    %v379 = vpop.f32.mrb[0].mxu0
    %v380 = vadd.f32 %v148, %v379
    %v381 = vpop.f32.mrb[0].mxu0
    %382 = vmatprep.mubr.bf16.mxu0 0
    %383 = vmatmul.mubr.bf16.gmra.mrb[0].mxu0 %v188
    %v384 = vpop.f32.mrb[0].mxu0
    %v385 = vadd.f32 %v148, %v384
    %v386 = vpop.f32.mrb[0].mxu0
    %v387 = vpop.f32.mrb[0].mxu0
    %v388 = vadd.f32 %v148, %v387
    %v389 = vpop.f32.mrb[0].mxu0
    %390 = vmatprep.mubr.bf16.mxu0 0
    %391 = vmatmul.mubr.bf16.gmra.mrb[0].mxu0 %v191
    %v392 = vpop.f32.mrb[0].mxu0
    %v393 = vadd.f32 %v148, %v392
    %v394 = vpop.f32.mrb[0].mxu0
    %v395 = vpop.f32.mrb[0].mxu0
    %v396 = vadd.f32 %v148, %v395
    %v397 = vpop.f32.mrb[0].mxu0
    %398 = vmatprep.mubr.bf16.mxu0 0
    %399 = vmatmul.mubr.bf16.gmra.mrb[0].mxu0 %v194
    %v400 = vpop.f32.mrb[0].mxu0
    %v401 = vadd.f32 %v148, %v400
    %v402 = vpop.f32.mrb[0].mxu0
    %v403 = vpop.f32.mrb[0].mxu0
    %v404 = vadd.f32 %v148, %v403
    %v405 = vpop.f32.mrb[0].mxu0
    %406 = vmatprep.mubr.bf16.mxu0 0
    %407 = vmatmul.mubr.bf16.gmra.mrb[0].mxu0 %v197
    %v408 = vpop.f32.mrb[0].mxu0
    %v409 = vadd.f32 %v148, %v408
    %v410 = vpop.f32.mrb[0].mxu0
    %v411 = vpop.f32.mrb[0].mxu0
    %v412 = vadd.f32 %v148, %v411
    %v413 = vpop.f32.mrb[0].mxu0
    %414 = vmatprep.mubr.bf16.mxu0 0
    %415 = vmatmul.mubr.bf16.gmra.mrb[0].mxu0 %v200
    %v416 = vpop.f32.mrb[0].mxu0
    %v417 = vadd.f32 %v148, %v416
    %v418 = vpop.f32.mrb[0].mxu0
    %v419 = vpop.f32.mrb[0].mxu0
    %v420 = vadd.f32 %v148, %v419
    %v421 = vpop.f32.mrb[0].mxu0
    %422 = vmatprep.mubr.bf16.mxu0 0
    %423 = vmatmul.mubr.bf16.gmra.mrb[0].mxu0 %v203
    %v424 = vpop.f32.mrb[0].mxu0
    %v425 = vadd.f32 %v148, %v424
    %v426 = vpop.f32.mrb[0].mxu0
    %v427 = vpop.f32.mrb[0].mxu0
    %v428 = vadd.f32 %v148, %v427
    %v429 = vpop.f32.mrb[0].mxu0
    %430 = vmatprep.mubr.bf16.mxu0 0
    %431 = vmatmul.mubr.bf16.gmra.mrb[0].mxu0 %v206
    %v432 = vpop.f32.mrb[0].mxu0
    %v433 = vadd.f32 %v148, %v432
    %v434 = vpop.f32.mrb[0].mxu0
    %v435 = vpop.f32.mrb[0].mxu0
    %v436 = vadd.f32 %v148, %v435
    %v437 = vpop.f32.mrb[0].mxu0
    %438 = vmatprep.mubr.bf16.mxu0 0
    %439 = vmatmul.mubr.bf16.gmra.mrb[0].mxu0 %v209
    %v440 = vpop.f32.mrb[0].mxu0
    %v441 = vadd.f32 %v148, %v440
    %v442 = vpop.f32.mrb[0].mxu0
    %v443 = vpop.f32.mrb[0].mxu0
    %v444 = vadd.f32 %v148, %v443
    %v445 = vpop.f32.mrb[0].mxu0
    %446 = vmatprep.mubr.bf16.mxu0 0
    %447 = vmatmul.mubr.bf16.gmra.mrb[0].mxu0 %v212
    %v448 = vpop.f32.mrb[0].mxu0
    %v449 = vadd.f32 %v148, %v448
    %v450 = vpop.f32.mrb[0].mxu0
    %v451 = vpop.f32.mrb[0].mxu0
    %v452 = vadd.f32 %v148, %v451
    %v453 = vpop.f32.mrb[0].mxu0
    %454 = vmatprep.mubr.bf16.mxu0 0
    %455 = vmatmul.mubr.bf16.gmra.mrb[0].mxu0 %v215
    %v456 = vpop.f32.mrb[0].mxu0
    %v457 = vadd.f32 %v148, %v456
    %v458 = vpop.f32.mrb[0].mxu0
    %v459 = vpop.f32.mrb[0].mxu0
    %v460 = vadd.f32 %v148, %v459
    %v461 = vpop.f32.mrb[0].mxu0
    %462 = vmatprep.mubr.bf16.mxu0 0
    %463 = vmatmul.mubr.bf16.gmra.mrb[0].mxu0 %v218
    %v464 = vpop.f32.mrb[0].mxu0
    %v465 = vadd.f32 %v148, %v464
    %v466 = vpop.f32.mrb[0].mxu0
    %v467 = vpop.f32.mrb[0].mxu0
    %v468 = vadd.f32 %v148, %v467
    %v469 = vpop.f32.mrb[0].mxu0
    %470 = vmatprep.mubr.bf16.mxu0 0
    %471 = vmatmul.mubr.bf16.gmra.mrb[0].mxu0 %v221
    %v472 = vpop.f32.mrb[0].mxu0
    %v473 = vadd.f32 %v148, %v472
    %v474 = vpop.f32.mrb[0].mxu0
    %v475 = vpop.f32.mrb[0].mxu0
    %v476 = vadd.f32 %v148, %v475
    %v477 = vpop.f32.mrb[0].mxu0
    %478 = vmatprep.mubr.bf16.mxu0 0
    %479 = vmatmul.mubr.bf16.gmra.mrb[0].mxu0 %v224
    %v480 = vpop.f32.mrb[0].mxu0
    %v481 = vadd.f32 %v148, %v480
    %v482 = vpop.f32.mrb[0].mxu0
    %v483 = vpop.f32.mrb[0].mxu0
    %v484 = vadd.f32 %v148, %v483
    %v485 = vpop.f32.mrb[0].mxu0
    %486 = vmatprep.mubr.bf16.mxu0 0
    %487 = vmatmul.mubr.bf16.gmra.mrb[0].mxu0 %v227
    %v488 = vpop.f32.mrb[0].mxu0
    %v489 = vadd.f32 %v148, %v488
    %v490 = vpop.f32.mrb[0].mxu0
    %v491 = vpop.f32.mrb[0].mxu0
    %v492 = vadd.f32 %v148, %v491
    %v493 = vpop.f32.mrb[0].mxu0
    %494 = vmatprep.mubr.bf16.mxu0 0
    %495 = vmatmul.mubr.bf16.gmra.mrb[0].mxu0 %v230
    %v496 = vpop.f32.mrb[0].mxu0
    %v497 = vadd.f32 %v148, %v496
    %v498 = vpop.f32.mrb[0].mxu0
    %v499 = vpop.f32.mrb[0].mxu0
    %v500 = vadd.f32 %v148, %v499
    %v501 = vpop.f32.mrb[0].mxu0
    %502 = vmatprep.mubr.bf16.mxu0 0
    %503 = vmatmul.mubr.bf16.gmra.mrb[0].mxu0 %v233
    %v504 = vpop.f32.mrb[0].mxu0
    %v505 = vadd.f32 %v148, %v504
    %v506 = vpop.f32.mrb[0].mxu0
    %v507 = vpop.f32.mrb[0].mxu0
    %v508 = vadd.f32 %v148, %v507
    %v509 = vpop.f32.mrb[0].mxu0
    %510 = vmatprep.mubr.bf16.mxu0 0
    %511 = vmatmul.mubr.bf16.gmra.mrb[0].mxu0 %v236
    %v512 = vpop.f32.mrb[0].mxu0
    %v513 = vadd.f32 %v148, %v512
    %v514 = vpop.f32.mrb[0].mxu0
    %v515 = vpop.f32.mrb[0].mxu0
    %v516 = vadd.f32 %v148, %v515
    %v517 = vpop.f32.mrb[0].mxu0
    %518 = vmatprep.mubr.bf16.mxu0 0
    %519 = vmatmul.mubr.bf16.gmra.mrb[0].mxu0 %v239
    %v520 = vpop.f32.mrb[0].mxu0
    %v521 = vadd.f32 %v148, %v520
    %v522 = vpop.f32.mrb[0].mxu0
    %v523 = vpop.f32.mrb[0].mxu0
    %v524 = vadd.f32 %v148, %v523
    %v525 = vpop.f32.mrb[0].mxu0
    %526 = vmatprep.mubr.bf16.mxu0 0
    %527 = vmatmul.mubr.bf16.gmra.mrb[0].mxu0 %v242
    %v528 = vpop.f32.mrb[0].mxu0
    %v529 = vadd.f32 %v148, %v528
    %v530 = vpop.f32.mrb[0].mxu0
    %v531 = vpop.f32.mrb[0].mxu0
    %v532 = vadd.f32 %v148, %v531
    %v533 = vpop.f32.mrb[0].mxu0
    %534 = vmatprep.mubr.bf16.mxu0 0
    %535 = vmatmul.mubr.bf16.gmra.mrb[0].mxu0 %v245
    %v536 = vpop.f32.mrb[0].mxu0
    %v537 = vadd.f32 %v148, %v536
    %v538 = vpop.f32.mrb[0].mxu0
    %v539 = vpop.f32.mrb[0].mxu0
    %v540 = vadd.f32 %v148, %v539
    %v541 = vpop.f32.mrb[0].mxu0
    %542 = vdwg.mxu0
    %v543 = vmax.f32 %v289, %v321
    %v544 = vmax.f32 %v292, %v324
    %v545 = vmax.f32 %v297, %v329
    %v546 = vmax.f32 %v300, %v332
    %v547 = vmax.f32 %v305, %v337
    %v548 = vmax.f32 %v308, %v340
    %v549 = vmax.f32 %v313, %v345
    %v550 = vmax.f32 %v316, %v348
    %v551 = vmax.f32 %v417, %v449
    %v552 = vmax.f32 %v420, %v452
    %v553 = vmax.f32 %v425, %v457
    %v554 = vmax.f32 %v428, %v460
    %v555 = vmax.f32 %v433, %v465
    %v556 = vmax.f32 %v436, %v468
    %v557 = vmax.f32 %v441, %v473
    %v558 = vmax.f32 %v444, %v476
    %v559 = vmax.f32 %v353, %v385
    %v560 = vmax.f32 %v356, %v388
    %v561 = vmax.f32 %v361, %v393
    %v562 = vmax.f32 %v364, %v396
    %v563 = vmax.f32 %v369, %v401
    %v564 = vmax.f32 %v372, %v404
    %v565 = vmax.f32 %v377, %v409
    %v566 = vmax.f32 %v380, %v412
    %v567 = vmax.f32 %v481, %v513
    %v568 = vmax.f32 %v484, %v516
    %v569 = vmax.f32 %v489, %v521
    %v570 = vmax.f32 %v492, %v524
    %v571 = vmax.f32 %v497, %v529
    %v572 = vmax.f32 %v500, %v532
    %v573 = vmax.f32 %v505, %v537
    %v574 = vmax.f32 %v508, %v540
    %v575 = vmax.f32 %v543, %v559
    %v576 = vmax.f32 %v544, %v560
    %v577 = vmax.f32 %v545, %v561
    %v578 = vmax.f32 %v546, %v562
    %v579 = vmax.f32 %v547, %v563
    %v580 = vmax.f32 %v548, %v564
    %v581 = vmax.f32 %v549, %v565
    %v582 = vmax.f32 %v550, %v566
    %v583 = vmax.f32 %v551, %v567
    %v584 = vmax.f32 %v552, %v568
    %v585 = vmax.f32 %v553, %v569
    %v586 = vmax.f32 %v554, %v570
    %v587 = vmax.f32 %v555, %v571
    %v588 = vmax.f32 %v556, %v572
    %v589 = vmax.f32 %v557, %v573
    %v590 = vmax.f32 %v558, %v574
    %v591 = vmax.f32 %v575, 0.0
    %v592 = vmax.f32 %v576, 0.0
    %v593 = vmax.f32 %v577, 0.0
    %v594 = vmax.f32 %v578, 0.0
    %v595 = vmax.f32 %v579, 0.0
    %v596 = vmax.f32 %v580, 0.0
    %v597 = vmax.f32 %v581, 0.0
    %v598 = vmax.f32 %v582, 0.0
    %v599 = vmax.f32 %v583, 0.0
    %v600 = vmax.f32 %v584, 0.0
    %v601 = vmax.f32 %v585, 0.0
    %v602 = vmax.f32 %v586, 0.0
    %v603 = vmax.f32 %v587, 0.0
    %v604 = vmax.f32 %v588, 0.0
    %v605 = vmax.f32 %v589, 0.0
    %v606 = vmax.f32 %v590, 0.0
    %v607 = vpack.c.bf16 %v592, %v591
    %v608 = vpack.c.bf16 %v594, %v593
    %v609 = vpack.c.bf16 %v596, %v595
    %v610 = vpack.c.bf16 %v598, %v597
    %v611 = vpack.c.bf16 %v600, %v599
    %v612 = vpack.c.bf16 %v602, %v601
    %v613 = vpack.c.bf16 %v604, %v603
    %v614 = vpack.c.bf16 %v606, %v605
    %v615 = vld [vmem:[%s3] sm:$0xf]
    %v616 = vld [vmem:[%s3 + $0x4] sm:$0xf]
    %v617 = vld [vmem:[%s3 + $0x8] sm:$0xf]
    %v618 = vld [vmem:[%s3 + $0xc] sm:$0xf]
    %v619 = vld [vmem:[%s4] sm:$0x1]
    %v621 = vlaneseq
    %v622 = vshrl.u32 %v621, 7
    %v623 = vsub.s32 0, %v622
    %v624 = vrot.slane %v619, %v623
    %v630 = vunpack.c.l.b16 %v615
    %v631 = vunpack.c.l.b16 %v616
    %v632 = vunpack.c.l.b16 %v617
    %v633 = vunpack.c.l.b16 %v618
    %v634 = vpack.c.b16 %v631, %v630
    %v635 = vpack.c.b16 %v633, %v632
    %vm638 = vcmask 261120
    %v640 = vsel %vm638, %v607, 0
    %v643 = vsel %vm638, %v608, 0
    %v646 = vsel %vm638, %v609, 0
    %v649 = vsel %vm638, %v610, 0
    %v652 = vsel %vm638, %v611, 0
    %v655 = vsel %vm638, %v612, 0
    %v658 = vsel %vm638, %v613, 0
    %v661 = vsel %vm638, %v614, 0
    %663 = vmatprep.subr.bf16.mxu0 0
    %664 = vmatpush1.bf16.msra.mxu0 %v634
    %665 = vmatprep.subr.bf16.mxu0 0
    %666 = vmatpush1.bf16.msra.mxu0 %v635
    %667 = vmatprep.subr.bf16.mxu0 0
    %668 = vmatpush1.bf16.msra.mxu0 0
    %669 = vmatprep.subr.bf16.mxu0 0
    %670 = vmatpush1.bf16.msra.mxu0 0
    %671 = vmatprep.subr.bf16.mxu0 0
    %672 = vmatpush1.bf16.msra.mxu0 0
    %673 = vmatprep.subr.bf16.mxu0 0
    %674 = vmatpush1.bf16.msra.mxu0 0
    %675 = vmatprep.subr.bf16.mxu0 0
    %676 = vmatpush1.bf16.msra.mxu0 0
    %677 = vmatprep.subr.bf16.mxu0 0
    %678 = vmatpush1.bf16.msra.mxu0 0
    %679 = vmatprep.subr.bf16.mxu0 0
    %680 = vmatpush1.bf16.msra.mxu0 0
    %681 = vmatprep.subr.bf16.mxu0 0
    %682 = vmatpush1.bf16.msra.mxu0 0
    %683 = vmatprep.subr.bf16.mxu0 0
    %684 = vmatpush1.bf16.msra.mxu0 0
    %685 = vmatprep.subr.bf16.mxu0 0
    %686 = vmatpush1.bf16.msra.mxu0 0
    %687 = vmatprep.subr.bf16.mxu0 0
    %688 = vmatpush1.bf16.msra.mxu0 0
    %689 = vmatprep.subr.bf16.mxu0 0
    %690 = vmatpush1.bf16.msra.mxu0 0
    %691 = vmatprep.subr.bf16.mxu0 0
    %692 = vmatpush1.bf16.msra.mxu0 0
    %693 = vmatprep.subr.bf16.mxu0 0
    %694 = vmatpush1.bf16.msra.mxu0 0
    %695 = vmatprep.mubr.bf16.mxu0 0
    %696 = vmatmul.mubr.bf16.gmra.mrb[0].mxu0 %v640
    %v697 = vpop.f32.mrb[0].mxu0
    %v698 = vadd.f32 %v624, %v697
    %v699 = vpop.f32.mrb[0].mxu0
    %v700 = vpop.f32.mrb[0].mxu0
    %v701 = vadd.f32 %v624, %v700
    %v702 = vpop.f32.mrb[0].mxu0
    %703 = vmatprep.mubr.bf16.mxu0 0
    %704 = vmatmul.mubr.bf16.gmra.mrb[0].mxu0 %v643
    %v705 = vpop.f32.mrb[0].mxu0
    %v706 = vadd.f32 %v624, %v705
    %v707 = vpop.f32.mrb[0].mxu0
    %v708 = vpop.f32.mrb[0].mxu0
    %v709 = vadd.f32 %v624, %v708
    %v710 = vpop.f32.mrb[0].mxu0
    %711 = vmatprep.mubr.bf16.mxu0 0
    %712 = vmatmul.mubr.bf16.gmra.mrb[0].mxu0 %v646
    %v713 = vpop.f32.mrb[0].mxu0
    %v714 = vadd.f32 %v624, %v713
    %v715 = vpop.f32.mrb[0].mxu0
    %v716 = vpop.f32.mrb[0].mxu0
    %v717 = vadd.f32 %v624, %v716
    %v718 = vpop.f32.mrb[0].mxu0
    %719 = vmatprep.mubr.bf16.mxu0 0
    %720 = vmatmul.mubr.bf16.gmra.mrb[0].mxu0 %v649
    %v721 = vpop.f32.mrb[0].mxu0
    %v722 = vadd.f32 %v624, %v721
    %v723 = vpop.f32.mrb[0].mxu0
    %v724 = vpop.f32.mrb[0].mxu0
    %v725 = vadd.f32 %v624, %v724
    %v726 = vpop.f32.mrb[0].mxu0
    %727 = vmatprep.mubr.bf16.mxu0 0
    %728 = vmatmul.mubr.bf16.gmra.mrb[0].mxu0 %v652
    %v729 = vpop.f32.mrb[0].mxu0
    %v730 = vadd.f32 %v624, %v729
    %v731 = vpop.f32.mrb[0].mxu0
    %v732 = vpop.f32.mrb[0].mxu0
    %v733 = vadd.f32 %v624, %v732
    %v734 = vpop.f32.mrb[0].mxu0
    %735 = vmatprep.mubr.bf16.mxu0 0
    %736 = vmatmul.mubr.bf16.gmra.mrb[0].mxu0 %v655
    %v737 = vpop.f32.mrb[0].mxu0
    %v738 = vadd.f32 %v624, %v737
    %v739 = vpop.f32.mrb[0].mxu0
    %v740 = vpop.f32.mrb[0].mxu0
    %v741 = vadd.f32 %v624, %v740
    %v742 = vpop.f32.mrb[0].mxu0
    %743 = vmatprep.mubr.bf16.mxu0 0
    %744 = vmatmul.mubr.bf16.gmra.mrb[0].mxu0 %v658
    %v745 = vpop.f32.mrb[0].mxu0
    %v746 = vadd.f32 %v624, %v745
    %v747 = vpop.f32.mrb[0].mxu0
    %v748 = vpop.f32.mrb[0].mxu0
    %v749 = vadd.f32 %v624, %v748
    %v750 = vpop.f32.mrb[0].mxu0
    %751 = vmatprep.mubr.bf16.mxu0 0
    %752 = vmatmul.mubr.bf16.gmra.mrb[0].mxu0 %v661
    %v753 = vpop.f32.mrb[0].mxu0
    %v754 = vadd.f32 %v624, %v753
    %v755 = vpop.f32.mrb[0].mxu0
    %v756 = vpop.f32.mrb[0].mxu0
    %v757 = vadd.f32 %v624, %v756
    %v758 = vpop.f32.mrb[0].mxu0
    %759 = vdwg.mxu0
    %v760 = vmax.f32 %v698, 0.0
    %v761 = vmax.f32 %v701, 0.0
    %v762 = vmax.f32 %v706, 0.0
    %v763 = vmax.f32 %v709, 0.0
    %v764 = vmax.f32 %v714, 0.0
    %v765 = vmax.f32 %v717, 0.0
    %v766 = vmax.f32 %v722, 0.0
    %v767 = vmax.f32 %v725, 0.0
    %v768 = vmax.f32 %v730, 0.0
    %v769 = vmax.f32 %v733, 0.0
    %v770 = vmax.f32 %v738, 0.0
    %v771 = vmax.f32 %v741, 0.0
    %v772 = vmax.f32 %v746, 0.0
    %v773 = vmax.f32 %v749, 0.0
    %v774 = vmax.f32 %v754, 0.0
    %v775 = vmax.f32 %v757, 0.0
    %vm776 = vcmask 392192
    %777 = vst.msk [vmem:[#allocation2] sm:$0xff] %vm776, 0
    %778 = vst.msk [vmem:[#allocation2 + $0x30] sm:$0xff] %vm776, 0
    %779 = vst.msk [vmem:[#allocation2 + $0x28] sm:$0xff] %vm776, 0
    %780 = vst.msk [vmem:[#allocation2 + $0x58] sm:$0xff] %vm776, 0
    %v781 = vpack.c.bf16 %v761, %v760
    %v782 = vpack.c.bf16 %v763, %v762
    %v783 = vpack.c.bf16 %v765, %v764
    %v784 = vpack.c.bf16 %v767, %v766
    %v785 = vpack.c.bf16 %v769, %v768
    %v786 = vpack.c.bf16 %v771, %v770
    %v787 = vpack.c.bf16 %v773, %v772
    %v788 = vpack.c.bf16 %v775, %v774
    %789 = vst.msk [vmem:[#allocation2 + $0x8] sm:$0xff] %vm776, %v781
    %790 = vst.msk [vmem:[#allocation2 + $0x10] sm:$0xff] %vm776, %v782
    %791 = vst.msk [vmem:[#allocation2 + $0x18] sm:$0xff] %vm776, %v783
    %792 = vst.msk [vmem:[#allocation2 + $0x20] sm:$0xff] %vm776, %v784
    %793 = vst.msk [vmem:[#allocation2 + $0x38] sm:$0xff] %vm776, %v785
    %794 = vst.msk [vmem:[#allocation2 + $0x40] sm:$0xff] %vm776, %v786
    %795 = vst.msk [vmem:[#allocation2 + $0x48] sm:$0xff] %vm776, %v787
    %796 = vst.msk [vmem:[#allocation2 + $0x50] sm:$0xff] %vm776, %v788
    %v797 = vlaneseq
    %v798 = vshrl.u32 %v797, 7
    %v799 = vadd.s32 %v798, 8
    %v800 = vadd.s32 %v798, 16
    %v801 = vadd.s32 %v798, 24
    %v802 = vadd.s32 %v798, 32
    %v803 = vadd.s32 %v798, 40
    %v804 = vadd.s32 %v798, 48
    %v805 = vadd.s32 %v798, 56
    %v806 = vadd.s32 %v798, 64
    %v807 = vadd.s32 %v798, 72
    %v808 = vadd.s32 %v798, 80
    %v809 = vadd.s32 %v798, 88
    %v810 = vadd.s32 %v798, 96
    %v811 = vadd.s32 %v798, 104
    %v812 = vadd.s32 %v798, 112
    %v813 = vadd.s32 %v798, 120
    %vm814 = vcmp.lt.s32.totalorder %v798, 0
    %v815 = vsub.s32 0, %v798
    %v816 = vsel %vm814, %v815, %v798
    %v817 = vshrl.u32 %v816, 3
    %v818 = vand.u32 %v816, 7
    %v819 = vsub.s32 0, %v818
    %v820 = vsel %vm814, %v819, %v818
    %vm821 = vcmp.lt.s32.totalorder %v799, 0
    %v822 = vsub.s32 0, %v799
    %v823 = vsel %vm821, %v822, %v799
    %v824 = vshrl.u32 %v823, 3
    %v825 = vand.u32 %v823, 7
    %v826 = vsub.s32 0, %v825
    %v827 = vsel %vm821, %v826, %v825
    %vm828 = vcmp.lt.s32.totalorder %v800, 0
    %v829 = vsub.s32 0, %v800
    %v830 = vsel %vm828, %v829, %v800
    %v831 = vshrl.u32 %v830, 3
    %v832 = vand.u32 %v830, 7
    %v833 = vsub.s32 0, %v832
    %v834 = vsel %vm828, %v833, %v832
    %vm835 = vcmp.lt.s32.totalorder %v801, 0
    %v836 = vsub.s32 0, %v801
    %v837 = vsel %vm835, %v836, %v801
    %v838 = vshrl.u32 %v837, 3
    %v839 = vand.u32 %v837, 7
    %v840 = vsub.s32 0, %v839
    %v841 = vsel %vm835, %v840, %v839
    %vm842 = vcmp.lt.s32.totalorder %v802, 0
    %v843 = vsub.s32 0, %v802
    %v844 = vsel %vm842, %v843, %v802
    %v845 = vshrl.u32 %v844, 3
    %v846 = vand.u32 %v844, 7
    %v847 = vsub.s32 0, %v846
    %v848 = vsel %vm842, %v847, %v846
    %vm849 = vcmp.lt.s32.totalorder %v803, 0
    %v850 = vsub.s32 0, %v803
    %v851 = vsel %vm849, %v850, %v803
    %v852 = vshrl.u32 %v851, 3
    %v853 = vand.u32 %v851, 7
    %v854 = vsub.s32 0, %v853
    %v855 = vsel %vm849, %v854, %v853
    %vm856 = vcmp.lt.s32.totalorder %v804, 0
    %v857 = vsub.s32 0, %v804
    %v858 = vsel %vm856, %v857, %v804
    %v859 = vshrl.u32 %v858, 3
    %v860 = vand.u32 %v858, 7
    %v861 = vsub.s32 0, %v860
    %v862 = vsel %vm856, %v861, %v860
    %vm863 = vcmp.lt.s32.totalorder %v805, 0
    %v864 = vsub.s32 0, %v805
    %v865 = vsel %vm863, %v864, %v805
    %v866 = vshrl.u32 %v865, 3
    %v867 = vand.u32 %v865, 7
    %v868 = vsub.s32 0, %v867
    %v869 = vsel %vm863, %v868, %v867
    %vm870 = vcmp.lt.s32.totalorder %v806, 0
    %v871 = vsub.s32 0, %v806
    %v872 = vsel %vm870, %v871, %v806
    %v873 = vshrl.u32 %v872, 3
    %v874 = vand.u32 %v872, 7
    %v875 = vsub.s32 0, %v874
    %v876 = vsel %vm870, %v875, %v874
    %vm877 = vcmp.lt.s32.totalorder %v807, 0
    %v878 = vsub.s32 0, %v807
    %v879 = vsel %vm877, %v878, %v807
    %v880 = vshrl.u32 %v879, 3
    %v881 = vand.u32 %v879, 7
    %v882 = vsub.s32 0, %v881
    %v883 = vsel %vm877, %v882, %v881
    %vm884 = vcmp.lt.s32.totalorder %v808, 0
    %v885 = vsub.s32 0, %v808
    %v886 = vsel %vm884, %v885, %v808
    %v887 = vshrl.u32 %v886, 3
    %v888 = vand.u32 %v886, 7
    %v889 = vsub.s32 0, %v888
    %v890 = vsel %vm884, %v889, %v888
    %vm891 = vcmp.lt.s32.totalorder %v809, 0
    %v892 = vsub.s32 0, %v809
    %v893 = vsel %vm891, %v892, %v809
    %v894 = vshrl.u32 %v893, 3
    %v895 = vand.u32 %v893, 7
    %v896 = vsub.s32 0, %v895
    %v897 = vsel %vm891, %v896, %v895
    %vm898 = vcmp.lt.s32.totalorder %v810, 0
    %v899 = vsub.s32 0, %v810
    %v900 = vsel %vm898, %v899, %v810
    %v901 = vshrl.u32 %v900, 3
    %v902 = vand.u32 %v900, 7
    %v903 = vsub.s32 0, %v902
    %v904 = vsel %vm898, %v903, %v902
    %vm905 = vcmp.lt.s32.totalorder %v811, 0
    %v906 = vsub.s32 0, %v811
    %v907 = vsel %vm905, %v906, %v811
    %v908 = vshrl.u32 %v907, 3
    %v909 = vand.u32 %v907, 7
    %v910 = vsub.s32 0, %v909
    %v911 = vsel %vm905, %v910, %v909
    %vm912 = vcmp.lt.s32.totalorder %v812, 0
    %v913 = vsub.s32 0, %v812
    %v914 = vsel %vm912, %v913, %v812
    %v915 = vshrl.u32 %v914, 3
    %v916 = vand.u32 %v914, 7
    %v917 = vsub.s32 0, %v916
    %v918 = vsel %vm912, %v917, %v916
    %vm919 = vcmp.lt.s32.totalorder %v813, 0
    %v920 = vsub.s32 0, %v813
    %v921 = vsel %vm919, %v920, %v813
    %v922 = vshrl.u32 %v921, 3
    %v923 = vand.u32 %v921, 7
    %v924 = vsub.s32 0, %v923
    %v925 = vsel %vm919, %v924, %v923
    %vm926 = vcmp.ne.s32.totalorder %v820, 0
    %vm927 = vcmp.ne.s32.totalorder %v827, 0
    %vm928 = vcmp.ne.s32.totalorder %v834, 0
    %vm929 = vcmp.ne.s32.totalorder %v841, 0
    %vm930 = vcmp.ne.s32.totalorder %v848, 0
    %vm931 = vcmp.ne.s32.totalorder %v855, 0
    %vm932 = vcmp.ne.s32.totalorder %v862, 0
    %vm933 = vcmp.ne.s32.totalorder %v869, 0
    %vm934 = vcmp.ne.s32.totalorder %v876, 0
    %vm935 = vcmp.ne.s32.totalorder %v883, 0
    %vm936 = vcmp.ne.s32.totalorder %v890, 0
    %vm937 = vcmp.ne.s32.totalorder %v897, 0
    %vm938 = vcmp.ne.s32.totalorder %v904, 0
    %vm939 = vcmp.ne.s32.totalorder %v911, 0
    %vm940 = vcmp.ne.s32.totalorder %v918, 0
    %vm941 = vcmp.ne.s32.totalorder %v925, 0
    %vm942 = vcmp.lt.s32.totalorder %v820, 0
    %vm943 = vcmp.lt.s32.totalorder %v827, 0
    %vm944 = vcmp.lt.s32.totalorder %v834, 0
    %vm945 = vcmp.lt.s32.totalorder %v841, 0
    %vm946 = vcmp.lt.s32.totalorder %v848, 0
    %vm947 = vcmp.lt.s32.totalorder %v855, 0
    %vm948 = vcmp.lt.s32.totalorder %v862, 0
    %vm949 = vcmp.lt.s32.totalorder %v869, 0
    %vm950 = vcmp.lt.s32.totalorder %v876, 0
    %vm951 = vcmp.lt.s32.totalorder %v883, 0
    %vm952 = vcmp.lt.s32.totalorder %v890, 0
    %vm953 = vcmp.lt.s32.totalorder %v897, 0
    %vm954 = vcmp.lt.s32.totalorder %v904, 0
    %vm955 = vcmp.lt.s32.totalorder %v911, 0
    %vm956 = vcmp.lt.s32.totalorder %v918, 0
    %vm957 = vcmp.lt.s32.totalorder %v925, 0
    %vm958 = vmand %vm942, %vm926
    %vm959 = vmand %vm943, %vm927
    %vm960 = vmand %vm944, %vm928
    %vm961 = vmand %vm945, %vm929
    %vm962 = vmand %vm946, %vm930
    %vm963 = vmand %vm947, %vm931
    %vm964 = vmand %vm948, %vm932
    %vm965 = vmand %vm949, %vm933
    %vm966 = vmand %vm950, %vm934
    %vm967 = vmand %vm951, %vm935
    %vm968 = vmand %vm952, %vm936
    %vm969 = vmand %vm953, %vm937
    %vm970 = vmand %vm954, %vm938
    %vm971 = vmand %vm955, %vm939
    %vm972 = vmand %vm956, %vm940
    %vm973 = vmand %vm957, %vm941
    %v974 = vadd.s32 %v820, 8
    %v975 = vadd.s32 %v827, 8
    %v976 = vadd.s32 %v834, 8
    %v977 = vadd.s32 %v841, 8
    %v978 = vadd.s32 %v848, 8
    %v979 = vadd.s32 %v855, 8
    %v980 = vadd.s32 %v862, 8
    %v981 = vadd.s32 %v869, 8
    %v982 = vadd.s32 %v876, 8
    %v983 = vadd.s32 %v883, 8
    %v984 = vadd.s32 %v890, 8
    %v985 = vadd.s32 %v897, 8
    %v986 = vadd.s32 %v904, 8
    %v987 = vadd.s32 %v911, 8
    %v988 = vadd.s32 %v918, 8
    %v989 = vadd.s32 %v925, 8
    %v990 = vsel %vm958, %v974, %v820
    %v991 = vsel %vm959, %v975, %v827
    %v992 = vsel %vm960, %v976, %v834
    %v993 = vsel %vm961, %v977, %v841
    %v994 = vsel %vm962, %v978, %v848
    %v995 = vsel %vm963, %v979, %v855
    %v996 = vsel %vm964, %v980, %v862
    %v997 = vsel %vm965, %v981, %v869
    %v998 = vsel %vm966, %v982, %v876
    %v999 = vsel %vm967, %v983, %v883
    %v1000 = vsel %vm968, %v984, %v890
    %v1001 = vsel %vm969, %v985, %v897
    %v1002 = vsel %vm970, %v986, %v904
    %v1003 = vsel %vm971, %v987, %v911
    %v1004 = vsel %vm972, %v988, %v918
    %v1005 = vsel %vm973, %v989, %v925
    %vm1006 = vcmp.ge.s32.totalorder %v990, 1
    %vm1007 = vcmp.ge.s32.totalorder %v991, 1
    %vm1008 = vcmp.ge.s32.totalorder %v992, 1
    %vm1009 = vcmp.ge.s32.totalorder %v993, 1
    %vm1010 = vcmp.ge.s32.totalorder %v994, 1
    %vm1011 = vcmp.ge.s32.totalorder %v995, 1
    %vm1012 = vcmp.ge.s32.totalorder %v996, 1
    %vm1013 = vcmp.ge.s32.totalorder %v997, 1
    %vm1014 = vcmp.ge.s32.totalorder %v998, 1
    %vm1015 = vcmp.ge.s32.totalorder %v999, 1
    %vm1016 = vcmp.ge.s32.totalorder %v1000, 1
    %vm1017 = vcmp.ge.s32.totalorder %v1001, 1
    %vm1018 = vcmp.ge.s32.totalorder %v1002, 1
    %vm1019 = vcmp.ge.s32.totalorder %v1003, 1
    %vm1020 = vcmp.ge.s32.totalorder %v1004, 1
    %vm1021 = vcmp.ge.s32.totalorder %v1005, 1
    %v1022 = vsel %vm1006, 1, 0
    %v1023 = vsel %vm1007, 1, 0
    %v1024 = vsel %vm1008, 1, 0
    %v1025 = vsel %vm1009, 1, 0
    %v1026 = vsel %vm1010, 1, 0
    %v1027 = vsel %vm1011, 1, 0
    %v1028 = vsel %vm1012, 1, 0
    %v1029 = vsel %vm1013, 1, 0
    %v1030 = vsel %vm1014, 1, 0
    %v1031 = vsel %vm1015, 1, 0
    %v1032 = vsel %vm1016, 1, 0
    %v1033 = vsel %vm1017, 1, 0
    %v1034 = vsel %vm1018, 1, 0
    %v1035 = vsel %vm1019, 1, 0
    %v1036 = vsel %vm1020, 1, 0
    %v1037 = vsel %vm1021, 1, 0
    %v1038 = vcvt.s32.f32 %v1022
    %v1039 = vcvt.s32.f32 %v1023
    %v1040 = vcvt.s32.f32 %v1024
    %v1041 = vcvt.s32.f32 %v1025
    %v1042 = vcvt.s32.f32 %v1026
    %v1043 = vcvt.s32.f32 %v1027
    %v1044 = vcvt.s32.f32 %v1028
    %v1045 = vcvt.s32.f32 %v1029
    %v1046 = vcvt.s32.f32 %v1030
    %v1047 = vcvt.s32.f32 %v1031
    %v1048 = vcvt.s32.f32 %v1032
    %v1049 = vcvt.s32.f32 %v1033
    %v1050 = vcvt.s32.f32 %v1034
    %v1051 = vcvt.s32.f32 %v1035
    %v1052 = vcvt.s32.f32 %v1036
    %v1053 = vcvt.s32.f32 %v1037
    %v1054 = vpack.c.bf16 %v1039, %v1038
    %v1055 = vpack.c.bf16 %v1041, %v1040
    %v1056 = vpack.c.bf16 %v1043, %v1042
    %v1057 = vpack.c.bf16 %v1045, %v1044
    %v1058 = vpack.c.bf16 %v1047, %v1046
    %v1059 = vpack.c.bf16 %v1049, %v1048
    %v1060 = vpack.c.bf16 %v1051, %v1050
    %v1061 = vpack.c.bf16 %v1053, %v1052
    %vm1062 = vcmp.le.s32.totalorder %v990, 6
    %vm1063 = vcmp.le.s32.totalorder %v991, 6
    %vm1064 = vcmp.le.s32.totalorder %v992, 6
    %vm1065 = vcmp.le.s32.totalorder %v993, 6
    %vm1066 = vcmp.le.s32.totalorder %v994, 6
    %vm1067 = vcmp.le.s32.totalorder %v995, 6
    %vm1068 = vcmp.le.s32.totalorder %v996, 6
    %vm1069 = vcmp.le.s32.totalorder %v997, 6
    %vm1070 = vcmp.le.s32.totalorder %v998, 6
    %vm1071 = vcmp.le.s32.totalorder %v999, 6
    %vm1072 = vcmp.le.s32.totalorder %v1000, 6
    %vm1073 = vcmp.le.s32.totalorder %v1001, 6
    %vm1074 = vcmp.le.s32.totalorder %v1002, 6
    %vm1075 = vcmp.le.s32.totalorder %v1003, 6
    %vm1076 = vcmp.le.s32.totalorder %v1004, 6
    %vm1077 = vcmp.le.s32.totalorder %v1005, 6
    %v1078 = vsel %vm1062, 1, 0
    %v1079 = vsel %vm1063, 1, 0
    %v1080 = vsel %vm1064, 1, 0
    %v1081 = vsel %vm1065, 1, 0
    %v1082 = vsel %vm1066, 1, 0
    %v1083 = vsel %vm1067, 1, 0
    %v1084 = vsel %vm1068, 1, 0
    %v1085 = vsel %vm1069, 1, 0
    %v1086 = vsel %vm1070, 1, 0
    %v1087 = vsel %vm1071, 1, 0
    %v1088 = vsel %vm1072, 1, 0
    %v1089 = vsel %vm1073, 1, 0
    %v1090 = vsel %vm1074, 1, 0
    %v1091 = vsel %vm1075, 1, 0
    %v1092 = vsel %vm1076, 1, 0
    %v1093 = vsel %vm1077, 1, 0
    %v1094 = vcvt.s32.f32 %v1078
    %v1095 = vcvt.s32.f32 %v1079
    %v1096 = vcvt.s32.f32 %v1080
    %v1097 = vcvt.s32.f32 %v1081
    %v1098 = vcvt.s32.f32 %v1082
    %v1099 = vcvt.s32.f32 %v1083
    %v1100 = vcvt.s32.f32 %v1084
    %v1101 = vcvt.s32.f32 %v1085
    %v1102 = vcvt.s32.f32 %v1086
    %v1103 = vcvt.s32.f32 %v1087
    %v1104 = vcvt.s32.f32 %v1088
    %v1105 = vcvt.s32.f32 %v1089
    %v1106 = vcvt.s32.f32 %v1090
    %v1107 = vcvt.s32.f32 %v1091
    %v1108 = vcvt.s32.f32 %v1092
    %v1109 = vcvt.s32.f32 %v1093
    %v1110 = vpack.c.bf16 %v1095, %v1094
    %v1111 = vpack.c.bf16 %v1097, %v1096
    %v1112 = vpack.c.bf16 %v1099, %v1098
    %v1113 = vpack.c.bf16 %v1101, %v1100
    %v1114 = vpack.c.bf16 %v1103, %v1102
    %v1115 = vpack.c.bf16 %v1105, %v1104
    %v1116 = vpack.c.bf16 %v1107, %v1106
    %v1117 = vpack.c.bf16 %v1109, %v1108
    %v1118 = vld [vmem:[#allocation2] sm:$0xf8]
    %v1119 = vld [vmem:[#allocation2 + $0x8] sm:$0xff]
    %v1120 = vld [vmem:[#allocation2 + $0x10] sm:$0xff]
    %v1121 = vld [vmem:[#allocation2 + $0x18] sm:$0xff]
    %v1122 = vld [vmem:[#allocation2 + $0x20] sm:$0xf]
    %v1123 = vld [vmem:[#allocation2 + $0x30] sm:$0xf8]
    %v1124 = vld [vmem:[#allocation2 + $0x38] sm:$0xff]
    %v1125 = vld [vmem:[#allocation2 + $0x40] sm:$0xff]
    %v1126 = vld [vmem:[#allocation2 + $0x48] sm:$0xff]
    %v1127 = vld [vmem:[#allocation2 + $0x50] sm:$0xf]
    %vm1128 = vsmask.f32 4352
    %v1130 = vshrl.u32 %v1118, 16
    %v1132 = vrot.slane %v1130, 3
    %v1133 = vshll.u32 %v1118, 16
    %v1135 = vrot.slane %v1133, 4
    %v1136 = vor.u32 %v1132, %v1135
    %v1138 = vshrl.u32 %v1119, 16
    %v1140 = vrot.slane %v1138, 3
    %v1141 = vshll.u32 %v1119, 16
    %v1143 = vrot.slane %v1141, 4
    %v1144 = vor.u32 %v1140, %v1143
    %v1145 = vsel %vm1128, %v1136, %v1144
    %v1147 = vshrl.u32 %v1120, 16
    %v1149 = vrot.slane %v1147, 3
    %v1150 = vshll.u32 %v1120, 16
    %v1152 = vrot.slane %v1150, 4
    %v1153 = vor.u32 %v1149, %v1152
    %v1154 = vsel %vm1128, %v1144, %v1153
    %v1156 = vshrl.u32 %v1121, 16
    %v1158 = vrot.slane %v1156, 3
    %v1159 = vshll.u32 %v1121, 16
    %v1161 = vrot.slane %v1159, 4
    %v1162 = vor.u32 %v1158, %v1161
    %v1163 = vsel %vm1128, %v1153, %v1162
    %v1165 = vshrl.u32 %v1122, 16
    %v1167 = vrot.slane %v1165, 3
    %v1168 = vshll.u32 %v1122, 16
    %v1170 = vrot.slane %v1168, 4
    %v1171 = vor.u32 %v1167, %v1170
    %v1172 = vsel %vm1128, %v1162, %v1171
    %v1174 = vshrl.u32 %v1123, 16
    %v1176 = vrot.slane %v1174, 3
    %v1177 = vshll.u32 %v1123, 16
    %v1179 = vrot.slane %v1177, 4
    %v1180 = vor.u32 %v1176, %v1179
    %v1182 = vshrl.u32 %v1124, 16
    %v1184 = vrot.slane %v1182, 3
    %v1185 = vshll.u32 %v1124, 16
    %v1187 = vrot.slane %v1185, 4
    %v1188 = vor.u32 %v1184, %v1187
    %v1189 = vsel %vm1128, %v1180, %v1188
    %v1191 = vshrl.u32 %v1125, 16
    %v1193 = vrot.slane %v1191, 3
    %v1194 = vshll.u32 %v1125, 16
    %v1196 = vrot.slane %v1194, 4
    %v1197 = vor.u32 %v1193, %v1196
    %v1198 = vsel %vm1128, %v1188, %v1197
    %v1200 = vshrl.u32 %v1126, 16
    %v1202 = vrot.slane %v1200, 3
    %v1203 = vshll.u32 %v1126, 16
    %v1205 = vrot.slane %v1203, 4
    %v1206 = vor.u32 %v1202, %v1205
    %v1207 = vsel %vm1128, %v1197, %v1206
    %v1209 = vshrl.u32 %v1127, 16
    %v1211 = vrot.slane %v1209, 3
    %v1212 = vshll.u32 %v1127, 16
    %v1214 = vrot.slane %v1212, 4
    %v1215 = vor.u32 %v1211, %v1214
    %v1216 = vsel %vm1128, %v1206, %v1215
    %v1225 = vmul.bf16 %v1145, %v1054
    %v1226 = vmul.bf16 %v1154, %v1055
    %v1227 = vmul.bf16 %v1163, %v1056
    %v1228 = vmul.bf16 %v1172, %v1057
    %v1229 = vmul.bf16 %v1189, %v1058
    %v1230 = vmul.bf16 %v1198, %v1059
    %v1231 = vmul.bf16 %v1207, %v1060
    %v1232 = vmul.bf16 %v1216, %v1061
    %v1233 = vld [vmem:[%s5] sm:$0xf]
    %v1234 = vld [vmem:[%s5 + $0x4] sm:$0xf]
    %v1235 = vld [vmem:[%s5 + $0x8] sm:$0xf]
    %v1236 = vld [vmem:[%s5 + $0xc] sm:$0xf]
    %v1237 = vld [vmem:[%s5 + $0x10] sm:$0xf]
    %v1238 = vld [vmem:[%s5 + $0x14] sm:$0xf]
    %v1239 = vld [vmem:[#allocation2] sm:$0xf0]
    %v1240 = vld [vmem:[#allocation2 + $0x30] sm:$0xf0]
    %vm1251 = vcmask 1043456
    %v1252 = vrot.slane %v1239, 4
    %v1253 = vrot.slane %v1119, 4
    %v1254 = vsel %vm1251, %v1252, %v1253
    %v1255 = vrot.slane %v1120, 4
    %v1256 = vsel %vm1251, %v1253, %v1255
    %v1257 = vrot.slane %v1121, 4
    %v1258 = vsel %vm1251, %v1255, %v1257
    %v1259 = vrot.slane %v1122, 4
    %v1260 = vsel %vm1251, %v1257, %v1259
    %v1261 = vrot.slane %v1240, 4
    %v1262 = vrot.slane %v1124, 4
    %v1263 = vsel %vm1251, %v1261, %v1262
    %v1264 = vrot.slane %v1125, 4
    %v1265 = vsel %vm1251, %v1262, %v1264
    %v1266 = vrot.slane %v1126, 4
    %v1267 = vsel %vm1251, %v1264, %v1266
    %v1268 = vrot.slane %v1127, 4
    %v1269 = vsel %vm1251, %v1266, %v1268
    %s1270 = scalar_lea.vmem %s5, 24
    %v1271 = vld [vmem:[%s1270] sm:$0xf]
    %v1272 = vld [vmem:[%s1270 + $0x4] sm:$0xf]
    %v1273 = vld [vmem:[%s1270 + $0x8] sm:$0xf]
    %v1274 = vld [vmem:[%s1270 + $0xc] sm:$0xf]
    %v1275 = vld [vmem:[%s1270 + $0x10] sm:$0xf]
    %v1276 = vld [vmem:[%s1270 + $0x14] sm:$0xf]
    %v1283 = vunpack.c.l.b16 %v1271
    %v1284 = vunpack.c.l.b16 %v1272
    %v1285 = vunpack.c.l.b16 %v1273
    %v1286 = vunpack.c.l.b16 %v1274
    %v1287 = vunpack.c.l.b16 %v1275
    %v1288 = vunpack.c.l.b16 %v1276
    %v1289 = vpack.c.b16 %v1284, %v1283
    %v1290 = vpack.c.b16 %v1286, %v1285
    %v1291 = vpack.c.b16 %v1288, %v1287
    %v1296 = vsel %vm776, %v1254, 0
    %v1299 = vsel %vm776, %v1256, 0
    %v1302 = vsel %vm776, %v1258, 0
    %v1305 = vsel %vm776, %v1260, 0
    %v1308 = vsel %vm776, %v1263, 0
    %v1311 = vsel %vm776, %v1265, 0
    %v1314 = vsel %vm776, %v1267, 0
    %v1317 = vsel %vm776, %v1269, 0
    %1319 = vmatprep.subr.bf16.mxu0 0
    %1320 = vmatpush1.bf16.msra.mxu0 %v1289
    %1321 = vmatprep.subr.bf16.mxu0 0
    %1322 = vmatpush1.bf16.msra.mxu0 %v1290
    %1323 = vmatprep.subr.bf16.mxu0 0
    %1324 = vmatpush1.bf16.msra.mxu0 %v1291
    %1325 = vmatprep.subr.bf16.mxu0 0
    %1326 = vmatpush1.bf16.msra.mxu0 0
    %1327 = vmatprep.subr.bf16.mxu0 0
    %1328 = vmatpush1.bf16.msra.mxu0 0
    %1329 = vmatprep.subr.bf16.mxu0 0
    %1330 = vmatpush1.bf16.msra.mxu0 0
    %1331 = vmatprep.subr.bf16.mxu0 0
    %1332 = vmatpush1.bf16.msra.mxu0 0
    %1333 = vmatprep.subr.bf16.mxu0 0
    %1334 = vmatpush1.bf16.msra.mxu0 0
    %1335 = vmatprep.subr.bf16.mxu0 0
    %1336 = vmatpush1.bf16.msra.mxu0 0
    %1337 = vmatprep.subr.bf16.mxu0 0
    %1338 = vmatpush1.bf16.msra.mxu0 0
    %1339 = vmatprep.subr.bf16.mxu0 0
    %1340 = vmatpush1.bf16.msra.mxu0 0
    %1341 = vmatprep.subr.bf16.mxu0 0
    %1342 = vmatpush1.bf16.msra.mxu0 0
    %1343 = vmatprep.subr.bf16.mxu0 0
    %1344 = vmatpush1.bf16.msra.mxu0 0
    %1345 = vmatprep.subr.bf16.mxu0 0
    %1346 = vmatpush1.bf16.msra.mxu0 0
    %1347 = vmatprep.subr.bf16.mxu0 0
    %1348 = vmatpush1.bf16.msra.mxu0 0
    %1349 = vmatprep.subr.bf16.mxu0 0
    %1350 = vmatpush1.bf16.msra.mxu0 0
    %1351 = vmatprep.mubr.bf16.mxu0 0
    %1352 = vmatmul.mubr.bf16.gmra.mrb[0].mxu0 %v1296
    %v1353 = vpop.f32.mrb[0].mxu0
    %v1354 = vadd.f32 0.0, %v1353
    %v1355 = vpop.f32.mrb[0].mxu0
    %v1356 = vpop.f32.mrb[0].mxu0
    %v1357 = vadd.f32 0.0, %v1356
    %v1358 = vpop.f32.mrb[0].mxu0
    %1359 = vmatprep.mubr.bf16.mxu0 0
    %1360 = vmatmul.mubr.bf16.gmra.mrb[0].mxu0 %v1299
    %v1361 = vpop.f32.mrb[0].mxu0
    %v1362 = vadd.f32 0.0, %v1361
    %v1363 = vpop.f32.mrb[0].mxu0
    %v1364 = vpop.f32.mrb[0].mxu0
    %v1365 = vadd.f32 0.0, %v1364
    %v1366 = vpop.f32.mrb[0].mxu0
    %1367 = vmatprep.mubr.bf16.mxu0 0
    %1368 = vmatmul.mubr.bf16.gmra.mrb[0].mxu0 %v1302
    %v1369 = vpop.f32.mrb[0].mxu0
    %v1370 = vadd.f32 0.0, %v1369
    %v1371 = vpop.f32.mrb[0].mxu0
    %v1372 = vpop.f32.mrb[0].mxu0
    %v1373 = vadd.f32 0.0, %v1372
    %v1374 = vpop.f32.mrb[0].mxu0
    %1375 = vmatprep.mubr.bf16.mxu0 0
    %1376 = vmatmul.mubr.bf16.gmra.mrb[0].mxu0 %v1305
    %v1377 = vpop.f32.mrb[0].mxu0
    %v1378 = vadd.f32 0.0, %v1377
    %v1379 = vpop.f32.mrb[0].mxu0
    %v1380 = vpop.f32.mrb[0].mxu0
    %v1381 = vadd.f32 0.0, %v1380
    %v1382 = vpop.f32.mrb[0].mxu0
    %1383 = vmatprep.mubr.bf16.mxu0 0
    %1384 = vmatmul.mubr.bf16.gmra.mrb[0].mxu0 %v1308
    %v1385 = vpop.f32.mrb[0].mxu0
    %v1386 = vadd.f32 0.0, %v1385
    %v1387 = vpop.f32.mrb[0].mxu0
    %v1388 = vpop.f32.mrb[0].mxu0
    %v1389 = vadd.f32 0.0, %v1388
    %v1390 = vpop.f32.mrb[0].mxu0
    %1391 = vmatprep.mubr.bf16.mxu0 0
    %1392 = vmatmul.mubr.bf16.gmra.mrb[0].mxu0 %v1311
    %v1393 = vpop.f32.mrb[0].mxu0
    %v1394 = vadd.f32 0.0, %v1393
    %v1395 = vpop.f32.mrb[0].mxu0
    %v1396 = vpop.f32.mrb[0].mxu0
    %v1397 = vadd.f32 0.0, %v1396
    %v1398 = vpop.f32.mrb[0].mxu0
    %1399 = vmatprep.mubr.bf16.mxu0 0
    %1400 = vmatmul.mubr.bf16.gmra.mrb[0].mxu0 %v1314
    %v1401 = vpop.f32.mrb[0].mxu0
    %v1402 = vadd.f32 0.0, %v1401
    %v1403 = vpop.f32.mrb[0].mxu0
    %v1404 = vpop.f32.mrb[0].mxu0
    %v1405 = vadd.f32 0.0, %v1404
    %v1406 = vpop.f32.mrb[0].mxu0
    %1407 = vmatprep.mubr.bf16.mxu0 0
    %1408 = vmatmul.mubr.bf16.gmra.mrb[0].mxu0 %v1317
    %v1409 = vpop.f32.mrb[0].mxu0
    %v1410 = vadd.f32 0.0, %v1409
    %v1411 = vpop.f32.mrb[0].mxu0
    %v1412 = vpop.f32.mrb[0].mxu0
    %v1413 = vadd.f32 0.0, %v1412
    %v1414 = vpop.f32.mrb[0].mxu0
    %1415 = vdwg.mxu0
    %v1422 = vunpack.c.l.b16 %v1233
    %v1423 = vunpack.c.l.b16 %v1234
    %v1424 = vunpack.c.l.b16 %v1235
    %v1425 = vunpack.c.l.b16 %v1236
    %v1426 = vunpack.c.l.b16 %v1237
    %v1427 = vunpack.c.l.b16 %v1238
    %v1428 = vpack.c.b16 %v1423, %v1422
    %v1429 = vpack.c.b16 %v1425, %v1424
    %v1430 = vpack.c.b16 %v1427, %v1426
    %v1435 = vsel %vm776, %v1225, 0
    %v1438 = vsel %vm776, %v1226, 0
    %v1441 = vsel %vm776, %v1227, 0
    %v1444 = vsel %vm776, %v1228, 0
    %v1447 = vsel %vm776, %v1229, 0
    %v1450 = vsel %vm776, %v1230, 0
    %v1453 = vsel %vm776, %v1231, 0
    %v1456 = vsel %vm776, %v1232, 0
    %1458 = vmatprep.subr.bf16.mxu0 0
    %1459 = vmatpush1.bf16.msra.mxu0 %v1428
    %1460 = vmatprep.subr.bf16.mxu0 0
    %1461 = vmatpush1.bf16.msra.mxu0 %v1429
    %1462 = vmatprep.subr.bf16.mxu0 0
    %1463 = vmatpush1.bf16.msra.mxu0 %v1430
    %1464 = vmatprep.subr.bf16.mxu0 0
    %1465 = vmatpush1.bf16.msra.mxu0 0
    %1466 = vmatprep.subr.bf16.mxu0 0
    %1467 = vmatpush1.bf16.msra.mxu0 0
    %1468 = vmatprep.subr.bf16.mxu0 0
    %1469 = vmatpush1.bf16.msra.mxu0 0
    %1470 = vmatprep.subr.bf16.mxu0 0
    %1471 = vmatpush1.bf16.msra.mxu0 0
    %1472 = vmatprep.subr.bf16.mxu0 0
    %1473 = vmatpush1.bf16.msra.mxu0 0
    %1474 = vmatprep.subr.bf16.mxu0 0
    %1475 = vmatpush1.bf16.msra.mxu0 0
    %1476 = vmatprep.subr.bf16.mxu0 0
    %1477 = vmatpush1.bf16.msra.mxu0 0
    %1478 = vmatprep.subr.bf16.mxu0 0
    %1479 = vmatpush1.bf16.msra.mxu0 0
    %1480 = vmatprep.subr.bf16.mxu0 0
    %1481 = vmatpush1.bf16.msra.mxu0 0
    %1482 = vmatprep.subr.bf16.mxu0 0
    %1483 = vmatpush1.bf16.msra.mxu0 0
    %1484 = vmatprep.subr.bf16.mxu0 0
    %1485 = vmatpush1.bf16.msra.mxu0 0
    %1486 = vmatprep.subr.bf16.mxu0 0
    %1487 = vmatpush1.bf16.msra.mxu0 0
    %1488 = vmatprep.subr.bf16.mxu0 0
    %1489 = vmatpush1.bf16.msra.mxu0 0
    %1490 = vmatprep.mubr.bf16.mxu0 0
    %1491 = vmatmul.mubr.bf16.gmra.mrb[0].mxu0 %v1435
    %v1492 = vpop.f32.mrb[0].mxu0
    %v1493 = vadd.f32 %v1354, %v1492
    %v1494 = vpop.f32.mrb[0].mxu0
    %v1495 = vpop.f32.mrb[0].mxu0
    %v1496 = vadd.f32 %v1357, %v1495
    %v1497 = vpop.f32.mrb[0].mxu0
    %1498 = vmatprep.mubr.bf16.mxu0 0
    %1499 = vmatmul.mubr.bf16.gmra.mrb[0].mxu0 %v1438
    %v1500 = vpop.f32.mrb[0].mxu0
    %v1501 = vadd.f32 %v1362, %v1500
    %v1502 = vpop.f32.mrb[0].mxu0
    %v1503 = vpop.f32.mrb[0].mxu0
    %v1504 = vadd.f32 %v1365, %v1503
    %v1505 = vpop.f32.mrb[0].mxu0
    %1506 = vmatprep.mubr.bf16.mxu0 0
    %1507 = vmatmul.mubr.bf16.gmra.mrb[0].mxu0 %v1441
    %v1508 = vpop.f32.mrb[0].mxu0
    %v1509 = vadd.f32 %v1370, %v1508
    %v1510 = vpop.f32.mrb[0].mxu0
    %v1511 = vpop.f32.mrb[0].mxu0
    %v1512 = vadd.f32 %v1373, %v1511
    %v1513 = vpop.f32.mrb[0].mxu0
    %1514 = vmatprep.mubr.bf16.mxu0 0
    %1515 = vmatmul.mubr.bf16.gmra.mrb[0].mxu0 %v1444
    %v1516 = vpop.f32.mrb[0].mxu0
    %v1517 = vadd.f32 %v1378, %v1516
    %v1518 = vpop.f32.mrb[0].mxu0
    %v1519 = vpop.f32.mrb[0].mxu0
    %v1520 = vadd.f32 %v1381, %v1519
    %v1521 = vpop.f32.mrb[0].mxu0
    %1522 = vmatprep.mubr.bf16.mxu0 0
    %1523 = vmatmul.mubr.bf16.gmra.mrb[0].mxu0 %v1447
    %v1524 = vpop.f32.mrb[0].mxu0
    %v1525 = vadd.f32 %v1386, %v1524
    %v1526 = vpop.f32.mrb[0].mxu0
    %v1527 = vpop.f32.mrb[0].mxu0
    %v1528 = vadd.f32 %v1389, %v1527
    %v1529 = vpop.f32.mrb[0].mxu0
    %1530 = vmatprep.mubr.bf16.mxu0 0
    %1531 = vmatmul.mubr.bf16.gmra.mrb[0].mxu0 %v1450
    %v1532 = vpop.f32.mrb[0].mxu0
    %v1533 = vadd.f32 %v1394, %v1532
    %v1534 = vpop.f32.mrb[0].mxu0
    %v1535 = vpop.f32.mrb[0].mxu0
    %v1536 = vadd.f32 %v1397, %v1535
    %v1537 = vpop.f32.mrb[0].mxu0
    %1538 = vmatprep.mubr.bf16.mxu0 0
    %1539 = vmatmul.mubr.bf16.gmra.mrb[0].mxu0 %v1453
    %v1540 = vpop.f32.mrb[0].mxu0
    %v1541 = vadd.f32 %v1402, %v1540
    %v1542 = vpop.f32.mrb[0].mxu0
    %v1543 = vpop.f32.mrb[0].mxu0
    %v1544 = vadd.f32 %v1405, %v1543
    %v1545 = vpop.f32.mrb[0].mxu0
    %1546 = vmatprep.mubr.bf16.mxu0 0
    %1547 = vmatmul.mubr.bf16.gmra.mrb[0].mxu0 %v1456
    %v1548 = vpop.f32.mrb[0].mxu0
    %v1549 = vadd.f32 %v1410, %v1548
    %v1550 = vpop.f32.mrb[0].mxu0
    %v1551 = vpop.f32.mrb[0].mxu0
    %v1552 = vadd.f32 %v1413, %v1551
    %v1553 = vpop.f32.mrb[0].mxu0
    %1554 = vdwg.mxu0
    %v1555 = vld [vmem:[#allocation2 + $0x20] sm:$0x1f]
    %v1556 = vld [vmem:[#allocation2 + $0x50] sm:$0x1f]
    %vm1557 = vsmask.f32 3328
    %v1559 = vshrl.u32 %v1239, 16
    %v1561 = vrot.slane %v1559, 4
    %v1562 = vshll.u32 %v1239, 16
    %v1564 = vrot.slane %v1562, 5
    %v1565 = vor.u32 %v1561, %v1564
    %v1566 = vrot.slane %v1138, 4
    %v1567 = vrot.slane %v1141, 5
    %v1568 = vor.u32 %v1566, %v1567
    %v1569 = vsel %vm1557, %v1565, %v1568
    %v1570 = vrot.slane %v1147, 4
    %v1571 = vrot.slane %v1150, 5
    %v1572 = vor.u32 %v1570, %v1571
    %v1573 = vsel %vm1557, %v1568, %v1572
    %v1574 = vrot.slane %v1156, 4
    %v1575 = vrot.slane %v1159, 5
    %v1576 = vor.u32 %v1574, %v1575
    %v1577 = vsel %vm1557, %v1572, %v1576
    %v1579 = vshrl.u32 %v1555, 16
    %v1581 = vrot.slane %v1579, 4
    %v1582 = vshll.u32 %v1555, 16
    %v1584 = vrot.slane %v1582, 5
    %v1585 = vor.u32 %v1581, %v1584
    %v1586 = vsel %vm1557, %v1576, %v1585
    %v1588 = vshrl.u32 %v1240, 16
    %v1590 = vrot.slane %v1588, 4
    %v1591 = vshll.u32 %v1240, 16
    %v1593 = vrot.slane %v1591, 5
    %v1594 = vor.u32 %v1590, %v1593
    %v1595 = vrot.slane %v1182, 4
    %v1596 = vrot.slane %v1185, 5
    %v1597 = vor.u32 %v1595, %v1596
    %v1598 = vsel %vm1557, %v1594, %v1597
    %v1599 = vrot.slane %v1191, 4
    %v1600 = vrot.slane %v1194, 5
    %v1601 = vor.u32 %v1599, %v1600
    %v1602 = vsel %vm1557, %v1597, %v1601
    %v1603 = vrot.slane %v1200, 4
    %v1604 = vrot.slane %v1203, 5
    %v1605 = vor.u32 %v1603, %v1604
    %v1606 = vsel %vm1557, %v1601, %v1605
    %v1608 = vshrl.u32 %v1556, 16
    %v1610 = vrot.slane %v1608, 4
    %v1611 = vshll.u32 %v1556, 16
    %v1613 = vrot.slane %v1611, 5
    %v1614 = vor.u32 %v1610, %v1613
    %v1615 = vsel %vm1557, %v1605, %v1614
    %v1624 = vmul.bf16 %v1569, %v1110
    %v1625 = vmul.bf16 %v1573, %v1111
    %v1626 = vmul.bf16 %v1577, %v1112
    %v1627 = vmul.bf16 %v1586, %v1113
    %v1628 = vmul.bf16 %v1598, %v1114
    %v1629 = vmul.bf16 %v1602, %v1115
    %v1630 = vmul.bf16 %v1606, %v1116
    %v1631 = vmul.bf16 %v1615, %v1117
    %s1632 = scalar_lea.vmem %s5, 48
    %v1633 = vld [vmem:[%s1632] sm:$0xf]
    %v1634 = vld [vmem:[%s1632 + $0x4] sm:$0xf]
    %v1635 = vld [vmem:[%s1632 + $0x8] sm:$0xf]
    %v1636 = vld [vmem:[%s1632 + $0xc] sm:$0xf]
    %v1637 = vld [vmem:[%s1632 + $0x10] sm:$0xf]
    %v1638 = vld [vmem:[%s1632 + $0x14] sm:$0xf]
    %v1645 = vunpack.c.l.b16 %v1633
    %v1646 = vunpack.c.l.b16 %v1634
    %v1647 = vunpack.c.l.b16 %v1635
    %v1648 = vunpack.c.l.b16 %v1636
    %v1649 = vunpack.c.l.b16 %v1637
    %v1650 = vunpack.c.l.b16 %v1638
    %v1651 = vpack.c.b16 %v1646, %v1645
    %v1652 = vpack.c.b16 %v1648, %v1647
    %v1653 = vpack.c.b16 %v1650, %v1649
    %v1658 = vsel %vm776, %v1624, 0
    %v1661 = vsel %vm776, %v1625, 0
    %v1664 = vsel %vm776, %v1626, 0
    %v1667 = vsel %vm776, %v1627, 0
    %v1670 = vsel %vm776, %v1628, 0
    %v1673 = vsel %vm776, %v1629, 0
    %v1676 = vsel %vm776, %v1630, 0
    %v1679 = vsel %vm776, %v1631, 0
    %1681 = vmatprep.subr.bf16.mxu0 0
    %1682 = vmatpush1.bf16.msra.mxu0 %v1651
    %1683 = vmatprep.subr.bf16.mxu0 0
    %1684 = vmatpush1.bf16.msra.mxu0 %v1652
    %1685 = vmatprep.subr.bf16.mxu0 0
    %1686 = vmatpush1.bf16.msra.mxu0 %v1653
    %1687 = vmatprep.subr.bf16.mxu0 0
    %1688 = vmatpush1.bf16.msra.mxu0 0
    %1689 = vmatprep.subr.bf16.mxu0 0
    %1690 = vmatpush1.bf16.msra.mxu0 0
    %1691 = vmatprep.subr.bf16.mxu0 0
    %1692 = vmatpush1.bf16.msra.mxu0 0
    %1693 = vmatprep.subr.bf16.mxu0 0
    %1694 = vmatpush1.bf16.msra.mxu0 0
    %1695 = vmatprep.subr.bf16.mxu0 0
    %1696 = vmatpush1.bf16.msra.mxu0 0
    %1697 = vmatprep.subr.bf16.mxu0 0
    %1698 = vmatpush1.bf16.msra.mxu0 0
    %1699 = vmatprep.subr.bf16.mxu0 0
    %1700 = vmatpush1.bf16.msra.mxu0 0
    %1701 = vmatprep.subr.bf16.mxu0 0
    %1702 = vmatpush1.bf16.msra.mxu0 0
    %1703 = vmatprep.subr.bf16.mxu0 0
    %1704 = vmatpush1.bf16.msra.mxu0 0
    %1705 = vmatprep.subr.bf16.mxu0 0
    %1706 = vmatpush1.bf16.msra.mxu0 0
    %1707 = vmatprep.subr.bf16.mxu0 0
    %1708 = vmatpush1.bf16.msra.mxu0 0
    %1709 = vmatprep.subr.bf16.mxu0 0
    %1710 = vmatpush1.bf16.msra.mxu0 0
    %1711 = vmatprep.subr.bf16.mxu0 0
    %1712 = vmatpush1.bf16.msra.mxu0 0
    %1713 = vmatprep.mubr.bf16.mxu0 0
    %1714 = vmatmul.mubr.bf16.gmra.mrb[0].mxu0 %v1658
    %v1715 = vpop.f32.mrb[0].mxu0
    %v1716 = vadd.f32 0.0, %v1715
    %v1717 = vpop.f32.mrb[0].mxu0
    %v1718 = vpop.f32.mrb[0].mxu0
    %v1719 = vadd.f32 0.0, %v1718
    %v1720 = vpop.f32.mrb[0].mxu0
    %1721 = vmatprep.mubr.bf16.mxu0 0
    %1722 = vmatmul.mubr.bf16.gmra.mrb[0].mxu0 %v1661
    %v1723 = vpop.f32.mrb[0].mxu0
    %v1724 = vadd.f32 0.0, %v1723
    %v1725 = vpop.f32.mrb[0].mxu0
    %v1726 = vpop.f32.mrb[0].mxu0
    %v1727 = vadd.f32 0.0, %v1726
    %v1728 = vpop.f32.mrb[0].mxu0
    %1729 = vmatprep.mubr.bf16.mxu0 0
    %1730 = vmatmul.mubr.bf16.gmra.mrb[0].mxu0 %v1664
    %v1731 = vpop.f32.mrb[0].mxu0
    %v1732 = vadd.f32 0.0, %v1731
    %v1733 = vpop.f32.mrb[0].mxu0
    %v1734 = vpop.f32.mrb[0].mxu0
    %v1735 = vadd.f32 0.0, %v1734
    %v1736 = vpop.f32.mrb[0].mxu0
    %1737 = vmatprep.mubr.bf16.mxu0 0
    %1738 = vmatmul.mubr.bf16.gmra.mrb[0].mxu0 %v1667
    %v1739 = vpop.f32.mrb[0].mxu0
    %v1740 = vadd.f32 0.0, %v1739
    %v1741 = vpop.f32.mrb[0].mxu0
    %v1742 = vpop.f32.mrb[0].mxu0
    %v1743 = vadd.f32 0.0, %v1742
    %v1744 = vpop.f32.mrb[0].mxu0
    %1745 = vmatprep.mubr.bf16.mxu0 0
    %1746 = vmatmul.mubr.bf16.gmra.mrb[0].mxu0 %v1670
    %v1747 = vpop.f32.mrb[0].mxu0
    %v1748 = vadd.f32 0.0, %v1747
    %v1749 = vpop.f32.mrb[0].mxu0
    %v1750 = vpop.f32.mrb[0].mxu0
    %v1751 = vadd.f32 0.0, %v1750
    %v1752 = vpop.f32.mrb[0].mxu0
    %1753 = vmatprep.mubr.bf16.mxu0 0
    %1754 = vmatmul.mubr.bf16.gmra.mrb[0].mxu0 %v1673
    %v1755 = vpop.f32.mrb[0].mxu0
    %v1756 = vadd.f32 0.0, %v1755
    %v1757 = vpop.f32.mrb[0].mxu0
    %v1758 = vpop.f32.mrb[0].mxu0
    %v1759 = vadd.f32 0.0, %v1758
    %v1760 = vpop.f32.mrb[0].mxu0
    %1761 = vmatprep.mubr.bf16.mxu0 0
    %1762 = vmatmul.mubr.bf16.gmra.mrb[0].mxu0 %v1676
    %v1763 = vpop.f32.mrb[0].mxu0
    %v1764 = vadd.f32 0.0, %v1763
    %v1765 = vpop.f32.mrb[0].mxu0
    %v1766 = vpop.f32.mrb[0].mxu0
    %v1767 = vadd.f32 0.0, %v1766
    %v1768 = vpop.f32.mrb[0].mxu0
    %1769 = vmatprep.mubr.bf16.mxu0 0
    %1770 = vmatmul.mubr.bf16.gmra.mrb[0].mxu0 %v1679
    %v1771 = vpop.f32.mrb[0].mxu0
    %v1772 = vadd.f32 0.0, %v1771
    %v1773 = vpop.f32.mrb[0].mxu0
    %v1774 = vpop.f32.mrb[0].mxu0
    %v1775 = vadd.f32 0.0, %v1774
    %v1776 = vpop.f32.mrb[0].mxu0
    %1777 = vdwg.mxu0
    %v1778 = vadd.f32 %v1493, %v1716
    %v1779 = vadd.f32 %v1496, %v1719
    %v1780 = vadd.f32 %v1501, %v1724
    %v1781 = vadd.f32 %v1504, %v1727
    %v1782 = vadd.f32 %v1509, %v1732
    %v1783 = vadd.f32 %v1512, %v1735
    %v1784 = vadd.f32 %v1517, %v1740
    %v1785 = vadd.f32 %v1520, %v1743
    %v1786 = vadd.f32 %v1525, %v1748
    %v1787 = vadd.f32 %v1528, %v1751
    %v1788 = vadd.f32 %v1533, %v1756
    %v1789 = vadd.f32 %v1536, %v1759
    %v1790 = vadd.f32 %v1541, %v1764
    %v1791 = vadd.f32 %v1544, %v1767
    %v1792 = vadd.f32 %v1549, %v1772
    %v1793 = vadd.f32 %v1552, %v1775
    %v1794 = vld [vmem:[#allocation2] sm:$0x80]
    %v1795 = vld [vmem:[#allocation2 + $0x20] sm:$0xff]
    %v1796 = vld [vmem:[#allocation2 + $0x30] sm:$0x80]
    %v1797 = vld [vmem:[#allocation2 + $0x50] sm:$0xff]
    %vm1798 = vsmask.f32 256
    %v1800 = vshrl.u32 %v1794, 16
    %v1802 = vrot.slane %v1800, 7
    %v1803 = vrot.slane %v1138, 7
    %v1804 = vor.u32 %v1803, %v1141
    %v1805 = vsel %vm1798, %v1802, %v1804
    %v1806 = vrot.slane %v1147, 7
    %v1807 = vor.u32 %v1806, %v1150
    %v1808 = vsel %vm1798, %v1803, %v1807
    %v1809 = vrot.slane %v1156, 7
    %v1810 = vor.u32 %v1809, %v1159
    %v1811 = vsel %vm1798, %v1806, %v1810
    %v1813 = vshrl.u32 %v1795, 16
    %v1815 = vrot.slane %v1813, 7
    %v1816 = vshll.u32 %v1795, 16
    %v1818 = vor.u32 %v1815, %v1816
    %v1819 = vsel %vm1798, %v1809, %v1818
    %v1821 = vshrl.u32 %v1796, 16
    %v1823 = vrot.slane %v1821, 7
    %v1824 = vrot.slane %v1182, 7
    %v1825 = vor.u32 %v1824, %v1185
    %v1826 = vsel %vm1798, %v1823, %v1825
    %v1827 = vrot.slane %v1191, 7
    %v1828 = vor.u32 %v1827, %v1194
    %v1829 = vsel %vm1798, %v1824, %v1828
    %v1830 = vrot.slane %v1200, 7
    %v1831 = vor.u32 %v1830, %v1203
    %v1832 = vsel %vm1798, %v1827, %v1831
    %v1834 = vshrl.u32 %v1797, 16
    %v1836 = vrot.slane %v1834, 7
    %v1837 = vshll.u32 %v1797, 16
    %v1839 = vor.u32 %v1836, %v1837
    %v1840 = vsel %vm1798, %v1830, %v1839
    %v1849 = vmul.bf16 %v1805, %v1054
    %v1850 = vmul.bf16 %v1808, %v1055
    %v1851 = vmul.bf16 %v1811, %v1056
    %v1852 = vmul.bf16 %v1819, %v1057
    %v1853 = vmul.bf16 %v1826, %v1058
    %v1854 = vmul.bf16 %v1829, %v1059
    %v1855 = vmul.bf16 %v1832, %v1060
    %v1856 = vmul.bf16 %v1840, %v1061
    %s1857 = scalar_lea.vmem %s5, 72
    %v1858 = vld [vmem:[%s1857] sm:$0xf]
    %v1859 = vld [vmem:[%s1857 + $0x4] sm:$0xf]
    %v1860 = vld [vmem:[%s1857 + $0x8] sm:$0xf]
    %v1861 = vld [vmem:[%s1857 + $0xc] sm:$0xf]
    %v1862 = vld [vmem:[%s1857 + $0x10] sm:$0xf]
    %v1863 = vld [vmem:[%s1857 + $0x14] sm:$0xf]
    %v1870 = vunpack.c.l.b16 %v1858
    %v1871 = vunpack.c.l.b16 %v1859
    %v1872 = vunpack.c.l.b16 %v1860
    %v1873 = vunpack.c.l.b16 %v1861
    %v1874 = vunpack.c.l.b16 %v1862
    %v1875 = vunpack.c.l.b16 %v1863
    %v1876 = vpack.c.b16 %v1871, %v1870
    %v1877 = vpack.c.b16 %v1873, %v1872
    %v1878 = vpack.c.b16 %v1875, %v1874
    %v1883 = vsel %vm776, %v1849, 0
    %v1886 = vsel %vm776, %v1850, 0
    %v1889 = vsel %vm776, %v1851, 0
    %v1892 = vsel %vm776, %v1852, 0
    %v1895 = vsel %vm776, %v1853, 0
    %v1898 = vsel %vm776, %v1854, 0
    %v1901 = vsel %vm776, %v1855, 0
    %v1904 = vsel %vm776, %v1856, 0
    %1906 = vmatprep.subr.bf16.mxu0 0
    %1907 = vmatpush1.bf16.msra.mxu0 %v1876
    %1908 = vmatprep.subr.bf16.mxu0 0
    %1909 = vmatpush1.bf16.msra.mxu0 %v1877
    %1910 = vmatprep.subr.bf16.mxu0 0
    %1911 = vmatpush1.bf16.msra.mxu0 %v1878
    %1912 = vmatprep.subr.bf16.mxu0 0
    %1913 = vmatpush1.bf16.msra.mxu0 0
    %1914 = vmatprep.subr.bf16.mxu0 0
    %1915 = vmatpush1.bf16.msra.mxu0 0
    %1916 = vmatprep.subr.bf16.mxu0 0
    %1917 = vmatpush1.bf16.msra.mxu0 0
    %1918 = vmatprep.subr.bf16.mxu0 0
    %1919 = vmatpush1.bf16.msra.mxu0 0
    %1920 = vmatprep.subr.bf16.mxu0 0
    %1921 = vmatpush1.bf16.msra.mxu0 0
    %1922 = vmatprep.subr.bf16.mxu0 0
    %1923 = vmatpush1.bf16.msra.mxu0 0
    %1924 = vmatprep.subr.bf16.mxu0 0
    %1925 = vmatpush1.bf16.msra.mxu0 0
    %1926 = vmatprep.subr.bf16.mxu0 0
    %1927 = vmatpush1.bf16.msra.mxu0 0
    %1928 = vmatprep.subr.bf16.mxu0 0
    %1929 = vmatpush1.bf16.msra.mxu0 0
    %1930 = vmatprep.subr.bf16.mxu0 0
    %1931 = vmatpush1.bf16.msra.mxu0 0
    %1932 = vmatprep.subr.bf16.mxu0 0
    %1933 = vmatpush1.bf16.msra.mxu0 0
    %1934 = vmatprep.subr.bf16.mxu0 0
    %1935 = vmatpush1.bf16.msra.mxu0 0
    %1936 = vmatprep.subr.bf16.mxu0 0
    %1937 = vmatpush1.bf16.msra.mxu0 0
    %1938 = vmatprep.mubr.bf16.mxu0 0
    %1939 = vmatmul.mubr.bf16.gmra.mrb[0].mxu0 %v1883
    %v1940 = vpop.f32.mrb[0].mxu0
    %v1941 = vadd.f32 0.0, %v1940
    %v1942 = vpop.f32.mrb[0].mxu0
    %v1943 = vpop.f32.mrb[0].mxu0
    %v1944 = vadd.f32 0.0, %v1943
    %v1945 = vpop.f32.mrb[0].mxu0
    %1946 = vmatprep.mubr.bf16.mxu0 0
    %1947 = vmatmul.mubr.bf16.gmra.mrb[0].mxu0 %v1886
    %v1948 = vpop.f32.mrb[0].mxu0
    %v1949 = vadd.f32 0.0, %v1948
    %v1950 = vpop.f32.mrb[0].mxu0
    %v1951 = vpop.f32.mrb[0].mxu0
    %v1952 = vadd.f32 0.0, %v1951
    %v1953 = vpop.f32.mrb[0].mxu0
    %1954 = vmatprep.mubr.bf16.mxu0 0
    %1955 = vmatmul.mubr.bf16.gmra.mrb[0].mxu0 %v1889
    %v1956 = vpop.f32.mrb[0].mxu0
    %v1957 = vadd.f32 0.0, %v1956
    %v1958 = vpop.f32.mrb[0].mxu0
    %v1959 = vpop.f32.mrb[0].mxu0
    %v1960 = vadd.f32 0.0, %v1959
    %v1961 = vpop.f32.mrb[0].mxu0
    %1962 = vmatprep.mubr.bf16.mxu0 0
    %1963 = vmatmul.mubr.bf16.gmra.mrb[0].mxu0 %v1892
    %v1964 = vpop.f32.mrb[0].mxu0
    %v1965 = vadd.f32 0.0, %v1964
    %v1966 = vpop.f32.mrb[0].mxu0
    %v1967 = vpop.f32.mrb[0].mxu0
    %v1968 = vadd.f32 0.0, %v1967
    %v1969 = vpop.f32.mrb[0].mxu0
    %1970 = vmatprep.mubr.bf16.mxu0 0
    %1971 = vmatmul.mubr.bf16.gmra.mrb[0].mxu0 %v1895
    %v1972 = vpop.f32.mrb[0].mxu0
    %v1973 = vadd.f32 0.0, %v1972
    %v1974 = vpop.f32.mrb[0].mxu0
    %v1975 = vpop.f32.mrb[0].mxu0
    %v1976 = vadd.f32 0.0, %v1975
    %v1977 = vpop.f32.mrb[0].mxu0
    %1978 = vmatprep.mubr.bf16.mxu0 0
    %1979 = vmatmul.mubr.bf16.gmra.mrb[0].mxu0 %v1898
    %v1980 = vpop.f32.mrb[0].mxu0
    %v1981 = vadd.f32 0.0, %v1980
    %v1982 = vpop.f32.mrb[0].mxu0
    %v1983 = vpop.f32.mrb[0].mxu0
    %v1984 = vadd.f32 0.0, %v1983
    %v1985 = vpop.f32.mrb[0].mxu0
    %1986 = vmatprep.mubr.bf16.mxu0 0
    %1987 = vmatmul.mubr.bf16.gmra.mrb[0].mxu0 %v1901
    %v1988 = vpop.f32.mrb[0].mxu0
    %v1989 = vadd.f32 0.0, %v1988
    %v1990 = vpop.f32.mrb[0].mxu0
    %v1991 = vpop.f32.mrb[0].mxu0
    %v1992 = vadd.f32 0.0, %v1991
    %v1993 = vpop.f32.mrb[0].mxu0
    %1994 = vmatprep.mubr.bf16.mxu0 0
    %1995 = vmatmul.mubr.bf16.gmra.mrb[0].mxu0 %v1904
    %v1996 = vpop.f32.mrb[0].mxu0
    %v1997 = vadd.f32 0.0, %v1996
    %v1998 = vpop.f32.mrb[0].mxu0
    %v1999 = vpop.f32.mrb[0].mxu0
    %v2000 = vadd.f32 0.0, %v1999
    %v2001 = vpop.f32.mrb[0].mxu0
    %2002 = vdwg.mxu0
    %v2003 = vadd.f32 %v1778, %v1941
    %v2004 = vadd.f32 %v1779, %v1944
    %v2005 = vadd.f32 %v1780, %v1949
    %v2006 = vadd.f32 %v1781, %v1952
    %v2007 = vadd.f32 %v1782, %v1957
    %v2008 = vadd.f32 %v1783, %v1960
    %v2009 = vadd.f32 %v1784, %v1965
    %v2010 = vadd.f32 %v1785, %v1968
    %v2011 = vadd.f32 %v1786, %v1973
    %v2012 = vadd.f32 %v1787, %v1976
    %v2013 = vadd.f32 %v1788, %v1981
    %v2014 = vadd.f32 %v1789, %v1984
    %v2015 = vadd.f32 %v1790, %v1989
    %v2016 = vadd.f32 %v1791, %v1992
    %v2017 = vadd.f32 %v1792, %v1997
    %v2018 = vadd.f32 %v1793, %v2000
    %s2019 = scalar_lea.vmem %s5, 96
    %v2020 = vld [vmem:[%s2019] sm:$0xf]
    %v2021 = vld [vmem:[%s2019 + $0x4] sm:$0xf]
    %v2022 = vld [vmem:[%s2019 + $0x8] sm:$0xf]
    %v2023 = vld [vmem:[%s2019 + $0xc] sm:$0xf]
    %v2024 = vld [vmem:[%s2019 + $0x10] sm:$0xf]
    %v2025 = vld [vmem:[%s2019 + $0x14] sm:$0xf]
    %v2032 = vunpack.c.l.b16 %v2020
    %v2033 = vunpack.c.l.b16 %v2021
    %v2034 = vunpack.c.l.b16 %v2022
    %v2035 = vunpack.c.l.b16 %v2023
    %v2036 = vunpack.c.l.b16 %v2024
    %v2037 = vunpack.c.l.b16 %v2025
    %v2038 = vpack.c.b16 %v2033, %v2032
    %v2039 = vpack.c.b16 %v2035, %v2034
    %v2040 = vpack.c.b16 %v2037, %v2036
    %v2044 = vsel %vm776, %v1119, 0
    %v2046 = vsel %vm776, %v1120, 0
    %v2048 = vsel %vm776, %v1121, 0
    %v2050 = vsel %vm776, %v1795, 0
    %v2052 = vsel %vm776, %v1124, 0
    %v2054 = vsel %vm776, %v1125, 0
    %v2056 = vsel %vm776, %v1126, 0
    %v2058 = vsel %vm776, %v1797, 0
    %2060 = vmatprep.subr.bf16.mxu0 0
    %2061 = vmatpush1.bf16.msra.mxu0 %v2038
    %2062 = vmatprep.subr.bf16.mxu0 0
    %2063 = vmatpush1.bf16.msra.mxu0 %v2039
    %2064 = vmatprep.subr.bf16.mxu0 0
    %2065 = vmatpush1.bf16.msra.mxu0 %v2040
    %2066 = vmatprep.subr.bf16.mxu0 0
    %2067 = vmatpush1.bf16.msra.mxu0 0
    %2068 = vmatprep.subr.bf16.mxu0 0
    %2069 = vmatpush1.bf16.msra.mxu0 0
    %2070 = vmatprep.subr.bf16.mxu0 0
    %2071 = vmatpush1.bf16.msra.mxu0 0
    %2072 = vmatprep.subr.bf16.mxu0 0
    %2073 = vmatpush1.bf16.msra.mxu0 0
    %2074 = vmatprep.subr.bf16.mxu0 0
    %2075 = vmatpush1.bf16.msra.mxu0 0
    %2076 = vmatprep.subr.bf16.mxu0 0
    %2077 = vmatpush1.bf16.msra.mxu0 0
    %2078 = vmatprep.subr.bf16.mxu0 0
    %2079 = vmatpush1.bf16.msra.mxu0 0
    %2080 = vmatprep.subr.bf16.mxu0 0
    %2081 = vmatpush1.bf16.msra.mxu0 0
    %2082 = vmatprep.subr.bf16.mxu0 0
    %2083 = vmatpush1.bf16.msra.mxu0 0
    %2084 = vmatprep.subr.bf16.mxu0 0
    %2085 = vmatpush1.bf16.msra.mxu0 0
    %2086 = vmatprep.subr.bf16.mxu0 0
    %2087 = vmatpush1.bf16.msra.mxu0 0
    %2088 = vmatprep.subr.bf16.mxu0 0
    %2089 = vmatpush1.bf16.msra.mxu0 0
    %2090 = vmatprep.subr.bf16.mxu0 0
    %2091 = vmatpush1.bf16.msra.mxu0 0
    %2092 = vmatprep.mubr.bf16.mxu0 0
    %2093 = vmatmul.mubr.bf16.gmra.mrb[0].mxu0 %v2044
    %v2094 = vpop.f32.mrb[0].mxu0
    %v2095 = vadd.f32 0.0, %v2094
    %v2096 = vpop.f32.mrb[0].mxu0
    %v2097 = vpop.f32.mrb[0].mxu0
    %v2098 = vadd.f32 0.0, %v2097
    %v2099 = vpop.f32.mrb[0].mxu0
    %2100 = vmatprep.mubr.bf16.mxu0 0
    %2101 = vmatmul.mubr.bf16.gmra.mrb[0].mxu0 %v2046
    %v2102 = vpop.f32.mrb[0].mxu0
    %v2103 = vadd.f32 0.0, %v2102
    %v2104 = vpop.f32.mrb[0].mxu0
    %v2105 = vpop.f32.mrb[0].mxu0
    %v2106 = vadd.f32 0.0, %v2105
    %v2107 = vpop.f32.mrb[0].mxu0
    %2108 = vmatprep.mubr.bf16.mxu0 0
    %2109 = vmatmul.mubr.bf16.gmra.mrb[0].mxu0 %v2048
    %v2110 = vpop.f32.mrb[0].mxu0
    %v2111 = vadd.f32 0.0, %v2110
    %v2112 = vpop.f32.mrb[0].mxu0
    %v2113 = vpop.f32.mrb[0].mxu0
    %v2114 = vadd.f32 0.0, %v2113
    %v2115 = vpop.f32.mrb[0].mxu0
    %2116 = vmatprep.mubr.bf16.mxu0 0
    %2117 = vmatmul.mubr.bf16.gmra.mrb[0].mxu0 %v2050
    %v2118 = vpop.f32.mrb[0].mxu0
    %v2119 = vadd.f32 0.0, %v2118
    %v2120 = vpop.f32.mrb[0].mxu0
    %v2121 = vpop.f32.mrb[0].mxu0
    %v2122 = vadd.f32 0.0, %v2121
    %v2123 = vpop.f32.mrb[0].mxu0
    %2124 = vmatprep.mubr.bf16.mxu0 0
    %2125 = vmatmul.mubr.bf16.gmra.mrb[0].mxu0 %v2052
    %v2126 = vpop.f32.mrb[0].mxu0
    %v2127 = vadd.f32 0.0, %v2126
    %v2128 = vpop.f32.mrb[0].mxu0
    %v2129 = vpop.f32.mrb[0].mxu0
    %v2130 = vadd.f32 0.0, %v2129
    %v2131 = vpop.f32.mrb[0].mxu0
    %2132 = vmatprep.mubr.bf16.mxu0 0
    %2133 = vmatmul.mubr.bf16.gmra.mrb[0].mxu0 %v2054
    %v2134 = vpop.f32.mrb[0].mxu0
    %v2135 = vadd.f32 0.0, %v2134
    %v2136 = vpop.f32.mrb[0].mxu0
    %v2137 = vpop.f32.mrb[0].mxu0
    %v2138 = vadd.f32 0.0, %v2137
    %v2139 = vpop.f32.mrb[0].mxu0
    %2140 = vmatprep.mubr.bf16.mxu0 0
    %2141 = vmatmul.mubr.bf16.gmra.mrb[0].mxu0 %v2056
    %v2142 = vpop.f32.mrb[0].mxu0
    %v2143 = vadd.f32 0.0, %v2142
    %v2144 = vpop.f32.mrb[0].mxu0
    %v2145 = vpop.f32.mrb[0].mxu0
    %v2146 = vadd.f32 0.0, %v2145
    %v2147 = vpop.f32.mrb[0].mxu0
    %2148 = vmatprep.mubr.bf16.mxu0 0
    %2149 = vmatmul.mubr.bf16.gmra.mrb[0].mxu0 %v2058
    %v2150 = vpop.f32.mrb[0].mxu0
    %v2151 = vadd.f32 0.0, %v2150
    %v2152 = vpop.f32.mrb[0].mxu0
    %v2153 = vpop.f32.mrb[0].mxu0
    %v2154 = vadd.f32 0.0, %v2153
    %v2155 = vpop.f32.mrb[0].mxu0
    %2156 = vdwg.mxu0
    %v2157 = vadd.f32 %v2003, %v2095
    %v2158 = vadd.f32 %v2004, %v2098
    %v2159 = vadd.f32 %v2005, %v2103
    %v2160 = vadd.f32 %v2006, %v2106
    %v2161 = vadd.f32 %v2007, %v2111
    %v2162 = vadd.f32 %v2008, %v2114
    %v2163 = vadd.f32 %v2009, %v2119
    %v2164 = vadd.f32 %v2010, %v2122
    %v2165 = vadd.f32 %v2011, %v2127
    %v2166 = vadd.f32 %v2012, %v2130
    %v2167 = vadd.f32 %v2013, %v2135
    %v2168 = vadd.f32 %v2014, %v2138
    %v2169 = vadd.f32 %v2015, %v2143
    %v2170 = vadd.f32 %v2016, %v2146
    %v2171 = vadd.f32 %v2017, %v2151
    %v2172 = vadd.f32 %v2018, %v2154
    %v2173 = vld [vmem:[#allocation2 + $0x8] sm:$0xff]
    %v2174 = vld [vmem:[#allocation2 + $0x10] sm:$0xff]
    %v2175 = vld [vmem:[#allocation2 + $0x18] sm:$0xff]
    %v2176 = vld [vmem:[#allocation2 + $0x20] sm:$0xff]
    %v2177 = vld [vmem:[#allocation2 + $0x28] sm:$0x1]
    %v2178 = vld [vmem:[#allocation2 + $0x38] sm:$0xff]
    %v2179 = vld [vmem:[#allocation2 + $0x40] sm:$0xff]
    %v2180 = vld [vmem:[#allocation2 + $0x48] sm:$0xff]
    %v2181 = vld [vmem:[#allocation2 + $0x50] sm:$0xff]
    %v2182 = vld [vmem:[#allocation2 + $0x58] sm:$0x1]
    %vm2183 = vsmask.f32 7424
    %v2185 = vshrl.u32 %v2173, 16
    %v2187 = vshll.u32 %v2173, 16
    %v2189 = vrot.slane %v2187, 1
    %v2190 = vor.u32 %v2185, %v2189
    %v2192 = vshll.u32 %v2174, 16
    %v2194 = vrot.slane %v2192, 1
    %v2195 = vsel %vm2183, %v2190, %v2194
    %v2196 = vshrl.u32 %v2174, 16
    %v2198 = vor.u32 %v2196, %v2194
    %v2200 = vshll.u32 %v2175, 16
    %v2202 = vrot.slane %v2200, 1
    %v2203 = vsel %vm2183, %v2198, %v2202
    %v2204 = vshrl.u32 %v2175, 16
    %v2206 = vor.u32 %v2204, %v2202
    %v2208 = vshll.u32 %v2176, 16
    %v2210 = vrot.slane %v2208, 1
    %v2211 = vsel %vm2183, %v2206, %v2210
    %v2212 = vshrl.u32 %v2176, 16
    %v2214 = vor.u32 %v2212, %v2210
    %v2216 = vshll.u32 %v2177, 16
    %v2218 = vrot.slane %v2216, 1
    %v2219 = vsel %vm2183, %v2214, %v2218
    %v2221 = vshrl.u32 %v2178, 16
    %v2223 = vshll.u32 %v2178, 16
    %v2225 = vrot.slane %v2223, 1
    %v2226 = vor.u32 %v2221, %v2225
    %v2228 = vshll.u32 %v2179, 16
    %v2230 = vrot.slane %v2228, 1
    %v2231 = vsel %vm2183, %v2226, %v2230
    %v2232 = vshrl.u32 %v2179, 16
    %v2234 = vor.u32 %v2232, %v2230
    %v2236 = vshll.u32 %v2180, 16
    %v2238 = vrot.slane %v2236, 1
    %v2239 = vsel %vm2183, %v2234, %v2238
    %v2240 = vshrl.u32 %v2180, 16
    %v2242 = vor.u32 %v2240, %v2238
    %v2244 = vshll.u32 %v2181, 16
    %v2246 = vrot.slane %v2244, 1
    %v2247 = vsel %vm2183, %v2242, %v2246
    %v2248 = vshrl.u32 %v2181, 16
    %v2250 = vor.u32 %v2248, %v2246
    %v2252 = vshll.u32 %v2182, 16
    %v2254 = vrot.slane %v2252, 1
    %v2255 = vsel %vm2183, %v2250, %v2254
    %v2264 = vmul.bf16 %v2195, %v1110
    %v2265 = vmul.bf16 %v2203, %v1111
    %v2266 = vmul.bf16 %v2211, %v1112
    %v2267 = vmul.bf16 %v2219, %v1113
    %v2268 = vmul.bf16 %v2231, %v1114
    %v2269 = vmul.bf16 %v2239, %v1115
    %v2270 = vmul.bf16 %v2247, %v1116
    %v2271 = vmul.bf16 %v2255, %v1117
    %s2272 = scalar_lea.vmem %s5, 120
    %v2273 = vld [vmem:[%s2272] sm:$0xf]
    %v2274 = vld [vmem:[%s2272 + $0x4] sm:$0xf]
    %v2275 = vld [vmem:[%s2272 + $0x8] sm:$0xf]
    %v2276 = vld [vmem:[%s2272 + $0xc] sm:$0xf]
    %v2277 = vld [vmem:[%s2272 + $0x10] sm:$0xf]
    %v2278 = vld [vmem:[%s2272 + $0x14] sm:$0xf]
    %v2285 = vunpack.c.l.b16 %v2273
    %v2286 = vunpack.c.l.b16 %v2274
    %v2287 = vunpack.c.l.b16 %v2275
    %v2288 = vunpack.c.l.b16 %v2276
    %v2289 = vunpack.c.l.b16 %v2277
    %v2290 = vunpack.c.l.b16 %v2278
    %v2291 = vpack.c.b16 %v2286, %v2285
    %v2292 = vpack.c.b16 %v2288, %v2287
    %v2293 = vpack.c.b16 %v2290, %v2289
    %v2298 = vsel %vm776, %v2264, 0
    %v2301 = vsel %vm776, %v2265, 0
    %v2304 = vsel %vm776, %v2266, 0
    %v2307 = vsel %vm776, %v2267, 0
    %v2310 = vsel %vm776, %v2268, 0
    %v2313 = vsel %vm776, %v2269, 0
    %v2316 = vsel %vm776, %v2270, 0
    %v2319 = vsel %vm776, %v2271, 0
    %2321 = vmatprep.subr.bf16.mxu0 0
    %2322 = vmatpush1.bf16.msra.mxu0 %v2291
    %2323 = vmatprep.subr.bf16.mxu0 0
    %2324 = vmatpush1.bf16.msra.mxu0 %v2292
    %2325 = vmatprep.subr.bf16.mxu0 0
    %2326 = vmatpush1.bf16.msra.mxu0 %v2293
    %2327 = vmatprep.subr.bf16.mxu0 0
    %2328 = vmatpush1.bf16.msra.mxu0 0
    %2329 = vmatprep.subr.bf16.mxu0 0
    %2330 = vmatpush1.bf16.msra.mxu0 0
    %2331 = vmatprep.subr.bf16.mxu0 0
    %2332 = vmatpush1.bf16.msra.mxu0 0
    %2333 = vmatprep.subr.bf16.mxu0 0
    %2334 = vmatpush1.bf16.msra.mxu0 0
    %2335 = vmatprep.subr.bf16.mxu0 0
    %2336 = vmatpush1.bf16.msra.mxu0 0
    %2337 = vmatprep.subr.bf16.mxu0 0
    %2338 = vmatpush1.bf16.msra.mxu0 0
    %2339 = vmatprep.subr.bf16.mxu0 0
    %2340 = vmatpush1.bf16.msra.mxu0 0
    %2341 = vmatprep.subr.bf16.mxu0 0
    %2342 = vmatpush1.bf16.msra.mxu0 0
    %2343 = vmatprep.subr.bf16.mxu0 0
    %2344 = vmatpush1.bf16.msra.mxu0 0
    %2345 = vmatprep.subr.bf16.mxu0 0
    %2346 = vmatpush1.bf16.msra.mxu0 0
    %2347 = vmatprep.subr.bf16.mxu0 0
    %2348 = vmatpush1.bf16.msra.mxu0 0
    %2349 = vmatprep.subr.bf16.mxu0 0
    %2350 = vmatpush1.bf16.msra.mxu0 0
    %2351 = vmatprep.subr.bf16.mxu0 0
    %2352 = vmatpush1.bf16.msra.mxu0 0
    %2353 = vmatprep.mubr.bf16.mxu0 0
    %2354 = vmatmul.mubr.bf16.gmra.mrb[0].mxu0 %v2298
    %v2355 = vpop.f32.mrb[0].mxu0
    %v2356 = vadd.f32 0.0, %v2355
    %v2357 = vpop.f32.mrb[0].mxu0
    %v2358 = vpop.f32.mrb[0].mxu0
    %v2359 = vadd.f32 0.0, %v2358
    %v2360 = vpop.f32.mrb[0].mxu0
    %2361 = vmatprep.mubr.bf16.mxu0 0
    %2362 = vmatmul.mubr.bf16.gmra.mrb[0].mxu0 %v2301
    %v2363 = vpop.f32.mrb[0].mxu0
    %v2364 = vadd.f32 0.0, %v2363
    %v2365 = vpop.f32.mrb[0].mxu0
    %v2366 = vpop.f32.mrb[0].mxu0
    %v2367 = vadd.f32 0.0, %v2366
    %v2368 = vpop.f32.mrb[0].mxu0
    %2369 = vmatprep.mubr.bf16.mxu0 0
    %2370 = vmatmul.mubr.bf16.gmra.mrb[0].mxu0 %v2304
    %v2371 = vpop.f32.mrb[0].mxu0
    %v2372 = vadd.f32 0.0, %v2371
    %v2373 = vpop.f32.mrb[0].mxu0
    %v2374 = vpop.f32.mrb[0].mxu0
    %v2375 = vadd.f32 0.0, %v2374
    %v2376 = vpop.f32.mrb[0].mxu0
    %2377 = vmatprep.mubr.bf16.mxu0 0
    %2378 = vmatmul.mubr.bf16.gmra.mrb[0].mxu0 %v2307
    %v2379 = vpop.f32.mrb[0].mxu0
    %v2380 = vadd.f32 0.0, %v2379
    %v2381 = vpop.f32.mrb[0].mxu0
    %v2382 = vpop.f32.mrb[0].mxu0
    %v2383 = vadd.f32 0.0, %v2382
    %v2384 = vpop.f32.mrb[0].mxu0
    %2385 = vmatprep.mubr.bf16.mxu0 0
    %2386 = vmatmul.mubr.bf16.gmra.mrb[0].mxu0 %v2310
    %v2387 = vpop.f32.mrb[0].mxu0
    %v2388 = vadd.f32 0.0, %v2387
    %v2389 = vpop.f32.mrb[0].mxu0
    %v2390 = vpop.f32.mrb[0].mxu0
    %v2391 = vadd.f32 0.0, %v2390
    %v2392 = vpop.f32.mrb[0].mxu0
    %2393 = vmatprep.mubr.bf16.mxu0 0
    %2394 = vmatmul.mubr.bf16.gmra.mrb[0].mxu0 %v2313
    %v2395 = vpop.f32.mrb[0].mxu0
    %v2396 = vadd.f32 0.0, %v2395
    %v2397 = vpop.f32.mrb[0].mxu0
    %v2398 = vpop.f32.mrb[0].mxu0
    %v2399 = vadd.f32 0.0, %v2398
    %v2400 = vpop.f32.mrb[0].mxu0
    %2401 = vmatprep.mubr.bf16.mxu0 0
    %2402 = vmatmul.mubr.bf16.gmra.mrb[0].mxu0 %v2316
    %v2403 = vpop.f32.mrb[0].mxu0
    %v2404 = vadd.f32 0.0, %v2403
    %v2405 = vpop.f32.mrb[0].mxu0
    %v2406 = vpop.f32.mrb[0].mxu0
    %v2407 = vadd.f32 0.0, %v2406
    %v2408 = vpop.f32.mrb[0].mxu0
    %2409 = vmatprep.mubr.bf16.mxu0 0
    %2410 = vmatmul.mubr.bf16.gmra.mrb[0].mxu0 %v2319
    %v2411 = vpop.f32.mrb[0].mxu0
    %v2412 = vadd.f32 0.0, %v2411
    %v2413 = vpop.f32.mrb[0].mxu0
    %v2414 = vpop.f32.mrb[0].mxu0
    %v2415 = vadd.f32 0.0, %v2414
    %v2416 = vpop.f32.mrb[0].mxu0
    %2417 = vdwg.mxu0
    %v2418 = vadd.f32 %v2157, %v2356
    %v2419 = vadd.f32 %v2158, %v2359
    %v2420 = vadd.f32 %v2159, %v2364
    %v2421 = vadd.f32 %v2160, %v2367
    %v2422 = vadd.f32 %v2161, %v2372
    %v2423 = vadd.f32 %v2162, %v2375
    %v2424 = vadd.f32 %v2163, %v2380
    %v2425 = vadd.f32 %v2164, %v2383
    %v2426 = vadd.f32 %v2165, %v2388
    %v2427 = vadd.f32 %v2166, %v2391
    %v2428 = vadd.f32 %v2167, %v2396
    %v2429 = vadd.f32 %v2168, %v2399
    %v2430 = vadd.f32 %v2169, %v2404
    %v2431 = vadd.f32 %v2170, %v2407
    %v2432 = vadd.f32 %v2171, %v2412
    %v2433 = vadd.f32 %v2172, %v2415
    %v2434 = vld [vmem:[#allocation2 + $0x8] sm:$0xf8]
    %v2435 = vld [vmem:[#allocation2 + $0x28] sm:$0xf]
    %v2436 = vld [vmem:[#allocation2 + $0x38] sm:$0xf8]
    %v2437 = vld [vmem:[#allocation2 + $0x58] sm:$0xf]
    %v2439 = vshrl.u32 %v2434, 16
    %v2441 = vrot.slane %v2439, 3
    %v2442 = vshll.u32 %v2434, 16
    %v2444 = vrot.slane %v2442, 4
    %v2445 = vor.u32 %v2441, %v2444
    %v2446 = vrot.slane %v2196, 3
    %v2447 = vrot.slane %v2192, 4
    %v2448 = vor.u32 %v2446, %v2447
    %v2449 = vsel %vm1128, %v2445, %v2448
    %v2450 = vrot.slane %v2204, 3
    %v2451 = vrot.slane %v2200, 4
    %v2452 = vor.u32 %v2450, %v2451
    %v2453 = vsel %vm1128, %v2448, %v2452
    %v2454 = vrot.slane %v2212, 3
    %v2455 = vrot.slane %v2208, 4
    %v2456 = vor.u32 %v2454, %v2455
    %v2457 = vsel %vm1128, %v2452, %v2456
    %v2459 = vshrl.u32 %v2435, 16
    %v2461 = vrot.slane %v2459, 3
    %v2462 = vshll.u32 %v2435, 16
    %v2464 = vrot.slane %v2462, 4
    %v2465 = vor.u32 %v2461, %v2464
    %v2466 = vsel %vm1128, %v2456, %v2465
    %v2468 = vshrl.u32 %v2436, 16
    %v2470 = vrot.slane %v2468, 3
    %v2471 = vshll.u32 %v2436, 16
    %v2473 = vrot.slane %v2471, 4
    %v2474 = vor.u32 %v2470, %v2473
    %v2475 = vrot.slane %v2232, 3
    %v2476 = vrot.slane %v2228, 4
    %v2477 = vor.u32 %v2475, %v2476
    %v2478 = vsel %vm1128, %v2474, %v2477
    %v2479 = vrot.slane %v2240, 3
    %v2480 = vrot.slane %v2236, 4
    %v2481 = vor.u32 %v2479, %v2480
    %v2482 = vsel %vm1128, %v2477, %v2481
    %v2483 = vrot.slane %v2248, 3
    %v2484 = vrot.slane %v2244, 4
    %v2485 = vor.u32 %v2483, %v2484
    %v2486 = vsel %vm1128, %v2481, %v2485
    %v2488 = vshrl.u32 %v2437, 16
    %v2490 = vrot.slane %v2488, 3
    %v2491 = vshll.u32 %v2437, 16
    %v2493 = vrot.slane %v2491, 4
    %v2494 = vor.u32 %v2490, %v2493
    %v2495 = vsel %vm1128, %v2485, %v2494
    %v2504 = vmul.bf16 %v2449, %v1054
    %v2505 = vmul.bf16 %v2453, %v1055
    %v2506 = vmul.bf16 %v2457, %v1056
    %v2507 = vmul.bf16 %v2466, %v1057
    %v2508 = vmul.bf16 %v2478, %v1058
    %v2509 = vmul.bf16 %v2482, %v1059
    %v2510 = vmul.bf16 %v2486, %v1060
    %v2511 = vmul.bf16 %v2495, %v1061
    %s2512 = scalar_lea.vmem %s5, 144
    %v2513 = vld [vmem:[%s2512] sm:$0xf]
    %v2514 = vld [vmem:[%s2512 + $0x4] sm:$0xf]
    %v2515 = vld [vmem:[%s2512 + $0x8] sm:$0xf]
    %v2516 = vld [vmem:[%s2512 + $0xc] sm:$0xf]
    %v2517 = vld [vmem:[%s2512 + $0x10] sm:$0xf]
    %v2518 = vld [vmem:[%s2512 + $0x14] sm:$0xf]
    %v2525 = vunpack.c.l.b16 %v2513
    %v2526 = vunpack.c.l.b16 %v2514
    %v2527 = vunpack.c.l.b16 %v2515
    %v2528 = vunpack.c.l.b16 %v2516
    %v2529 = vunpack.c.l.b16 %v2517
    %v2530 = vunpack.c.l.b16 %v2518
    %v2531 = vpack.c.b16 %v2526, %v2525
    %v2532 = vpack.c.b16 %v2528, %v2527
    %v2533 = vpack.c.b16 %v2530, %v2529
    %v2538 = vsel %vm776, %v2504, 0
    %v2541 = vsel %vm776, %v2505, 0
    %v2544 = vsel %vm776, %v2506, 0
    %v2547 = vsel %vm776, %v2507, 0
    %v2550 = vsel %vm776, %v2508, 0
    %v2553 = vsel %vm776, %v2509, 0
    %v2556 = vsel %vm776, %v2510, 0
    %v2559 = vsel %vm776, %v2511, 0
    %2561 = vmatprep.subr.bf16.mxu0 0
    %2562 = vmatpush1.bf16.msra.mxu0 %v2531
    %2563 = vmatprep.subr.bf16.mxu0 0
    %2564 = vmatpush1.bf16.msra.mxu0 %v2532
    %2565 = vmatprep.subr.bf16.mxu0 0
    %2566 = vmatpush1.bf16.msra.mxu0 %v2533
    %2567 = vmatprep.subr.bf16.mxu0 0
    %2568 = vmatpush1.bf16.msra.mxu0 0
    %2569 = vmatprep.subr.bf16.mxu0 0
    %2570 = vmatpush1.bf16.msra.mxu0 0
    %2571 = vmatprep.subr.bf16.mxu0 0
    %2572 = vmatpush1.bf16.msra.mxu0 0
    %2573 = vmatprep.subr.bf16.mxu0 0
    %2574 = vmatpush1.bf16.msra.mxu0 0
    %2575 = vmatprep.subr.bf16.mxu0 0
    %2576 = vmatpush1.bf16.msra.mxu0 0
    %2577 = vmatprep.subr.bf16.mxu0 0
    %2578 = vmatpush1.bf16.msra.mxu0 0
    %2579 = vmatprep.subr.bf16.mxu0 0
    %2580 = vmatpush1.bf16.msra.mxu0 0
    %2581 = vmatprep.subr.bf16.mxu0 0
    %2582 = vmatpush1.bf16.msra.mxu0 0
    %2583 = vmatprep.subr.bf16.mxu0 0
    %2584 = vmatpush1.bf16.msra.mxu0 0
    %2585 = vmatprep.subr.bf16.mxu0 0
    %2586 = vmatpush1.bf16.msra.mxu0 0
    %2587 = vmatprep.subr.bf16.mxu0 0
    %2588 = vmatpush1.bf16.msra.mxu0 0
    %2589 = vmatprep.subr.bf16.mxu0 0
    %2590 = vmatpush1.bf16.msra.mxu0 0
    %2591 = vmatprep.subr.bf16.mxu0 0
    %2592 = vmatpush1.bf16.msra.mxu0 0
    %2593 = vmatprep.mubr.bf16.mxu0 0
    %2594 = vmatmul.mubr.bf16.gmra.mrb[0].mxu0 %v2538
    %v2595 = vpop.f32.mrb[0].mxu0
    %v2596 = vadd.f32 0.0, %v2595
    %v2597 = vpop.f32.mrb[0].mxu0
    %v2598 = vpop.f32.mrb[0].mxu0
    %v2599 = vadd.f32 0.0, %v2598
    %v2600 = vpop.f32.mrb[0].mxu0
    %2601 = vmatprep.mubr.bf16.mxu0 0
    %2602 = vmatmul.mubr.bf16.gmra.mrb[0].mxu0 %v2541
    %v2603 = vpop.f32.mrb[0].mxu0
    %v2604 = vadd.f32 0.0, %v2603
    %v2605 = vpop.f32.mrb[0].mxu0
    %v2606 = vpop.f32.mrb[0].mxu0
    %v2607 = vadd.f32 0.0, %v2606
    %v2608 = vpop.f32.mrb[0].mxu0
    %2609 = vmatprep.mubr.bf16.mxu0 0
    %2610 = vmatmul.mubr.bf16.gmra.mrb[0].mxu0 %v2544
    %v2611 = vpop.f32.mrb[0].mxu0
    %v2612 = vadd.f32 0.0, %v2611
    %v2613 = vpop.f32.mrb[0].mxu0
    %v2614 = vpop.f32.mrb[0].mxu0
    %v2615 = vadd.f32 0.0, %v2614
    %v2616 = vpop.f32.mrb[0].mxu0
    %2617 = vmatprep.mubr.bf16.mxu0 0
    %2618 = vmatmul.mubr.bf16.gmra.mrb[0].mxu0 %v2547
    %v2619 = vpop.f32.mrb[0].mxu0
    %v2620 = vadd.f32 0.0, %v2619
    %v2621 = vpop.f32.mrb[0].mxu0
    %v2622 = vpop.f32.mrb[0].mxu0
    %v2623 = vadd.f32 0.0, %v2622
    %v2624 = vpop.f32.mrb[0].mxu0
    %2625 = vmatprep.mubr.bf16.mxu0 0
    %2626 = vmatmul.mubr.bf16.gmra.mrb[0].mxu0 %v2550
    %v2627 = vpop.f32.mrb[0].mxu0
    %v2628 = vadd.f32 0.0, %v2627
    %v2629 = vpop.f32.mrb[0].mxu0
    %v2630 = vpop.f32.mrb[0].mxu0
    %v2631 = vadd.f32 0.0, %v2630
    %v2632 = vpop.f32.mrb[0].mxu0
    %2633 = vmatprep.mubr.bf16.mxu0 0
    %2634 = vmatmul.mubr.bf16.gmra.mrb[0].mxu0 %v2553
    %v2635 = vpop.f32.mrb[0].mxu0
    %v2636 = vadd.f32 0.0, %v2635
    %v2637 = vpop.f32.mrb[0].mxu0
    %v2638 = vpop.f32.mrb[0].mxu0
    %v2639 = vadd.f32 0.0, %v2638
    %v2640 = vpop.f32.mrb[0].mxu0
    %2641 = vmatprep.mubr.bf16.mxu0 0
    %2642 = vmatmul.mubr.bf16.gmra.mrb[0].mxu0 %v2556
    %v2643 = vpop.f32.mrb[0].mxu0
    %v2644 = vadd.f32 0.0, %v2643
    %v2645 = vpop.f32.mrb[0].mxu0
    %v2646 = vpop.f32.mrb[0].mxu0
    %v2647 = vadd.f32 0.0, %v2646
    %v2648 = vpop.f32.mrb[0].mxu0
    %2649 = vmatprep.mubr.bf16.mxu0 0
    %2650 = vmatmul.mubr.bf16.gmra.mrb[0].mxu0 %v2559
    %v2651 = vpop.f32.mrb[0].mxu0
    %v2652 = vadd.f32 0.0, %v2651
    %v2653 = vpop.f32.mrb[0].mxu0
    %v2654 = vpop.f32.mrb[0].mxu0
    %v2655 = vadd.f32 0.0, %v2654
    %v2656 = vpop.f32.mrb[0].mxu0
    %2657 = vdwg.mxu0
    %v2658 = vadd.f32 %v2418, %v2596
    %v2659 = vadd.f32 %v2419, %v2599
    %v2660 = vadd.f32 %v2420, %v2604
    %v2661 = vadd.f32 %v2421, %v2607
    %v2662 = vadd.f32 %v2422, %v2612
    %v2663 = vadd.f32 %v2423, %v2615
    %v2664 = vadd.f32 %v2424, %v2620
    %v2665 = vadd.f32 %v2425, %v2623
    %v2666 = vadd.f32 %v2426, %v2628
    %v2667 = vadd.f32 %v2427, %v2631
    %v2668 = vadd.f32 %v2428, %v2636
    %v2669 = vadd.f32 %v2429, %v2639
    %v2670 = vadd.f32 %v2430, %v2644
    %v2671 = vadd.f32 %v2431, %v2647
    %v2672 = vadd.f32 %v2432, %v2652
    %v2673 = vadd.f32 %v2433, %v2655
    %v2674 = vld [vmem:[#allocation2 + $0x8] sm:$0xf0]
    %v2675 = vld [vmem:[#allocation2 + $0x38] sm:$0xf0]
    %v2686 = vrot.slane %v2674, 4
    %v2687 = vrot.slane %v2174, 4
    %v2688 = vsel %vm1251, %v2686, %v2687
    %v2689 = vrot.slane %v2175, 4
    %v2690 = vsel %vm1251, %v2687, %v2689
    %v2691 = vrot.slane %v2176, 4
    %v2692 = vsel %vm1251, %v2689, %v2691
    %v2693 = vrot.slane %v2435, 4
    %v2694 = vsel %vm1251, %v2691, %v2693
    %v2695 = vrot.slane %v2675, 4
    %v2696 = vrot.slane %v2179, 4
    %v2697 = vsel %vm1251, %v2695, %v2696
    %v2698 = vrot.slane %v2180, 4
    %v2699 = vsel %vm1251, %v2696, %v2698
    %v2700 = vrot.slane %v2181, 4
    %v2701 = vsel %vm1251, %v2698, %v2700
    %v2702 = vrot.slane %v2437, 4
    %v2703 = vsel %vm1251, %v2700, %v2702
    %s2704 = scalar_lea.vmem %s5, 168
    %v2705 = vld [vmem:[%s2704] sm:$0xf]
    %v2706 = vld [vmem:[%s2704 + $0x4] sm:$0xf]
    %v2707 = vld [vmem:[%s2704 + $0x8] sm:$0xf]
    %v2708 = vld [vmem:[%s2704 + $0xc] sm:$0xf]
    %v2709 = vld [vmem:[%s2704 + $0x10] sm:$0xf]
    %v2710 = vld [vmem:[%s2704 + $0x14] sm:$0xf]
    %v2717 = vunpack.c.l.b16 %v2705
    %v2718 = vunpack.c.l.b16 %v2706
    %v2719 = vunpack.c.l.b16 %v2707
    %v2720 = vunpack.c.l.b16 %v2708
    %v2721 = vunpack.c.l.b16 %v2709
    %v2722 = vunpack.c.l.b16 %v2710
    %v2723 = vpack.c.b16 %v2718, %v2717
    %v2724 = vpack.c.b16 %v2720, %v2719
    %v2725 = vpack.c.b16 %v2722, %v2721
    %v2730 = vsel %vm776, %v2688, 0
    %v2733 = vsel %vm776, %v2690, 0
    %v2736 = vsel %vm776, %v2692, 0
    %v2739 = vsel %vm776, %v2694, 0
    %v2742 = vsel %vm776, %v2697, 0
    %v2745 = vsel %vm776, %v2699, 0
    %v2748 = vsel %vm776, %v2701, 0
    %v2751 = vsel %vm776, %v2703, 0
    %2753 = vmatprep.subr.bf16.mxu0 0
    %2754 = vmatpush1.bf16.msra.mxu0 %v2723
    %2755 = vmatprep.subr.bf16.mxu0 0
    %2756 = vmatpush1.bf16.msra.mxu0 %v2724
    %2757 = vmatprep.subr.bf16.mxu0 0
    %2758 = vmatpush1.bf16.msra.mxu0 %v2725
    %2759 = vmatprep.subr.bf16.mxu0 0
    %2760 = vmatpush1.bf16.msra.mxu0 0
    %2761 = vmatprep.subr.bf16.mxu0 0
    %2762 = vmatpush1.bf16.msra.mxu0 0
    %2763 = vmatprep.subr.bf16.mxu0 0
    %2764 = vmatpush1.bf16.msra.mxu0 0
    %2765 = vmatprep.subr.bf16.mxu0 0
    %2766 = vmatpush1.bf16.msra.mxu0 0
    %2767 = vmatprep.subr.bf16.mxu0 0
    %2768 = vmatpush1.bf16.msra.mxu0 0
    %2769 = vmatprep.subr.bf16.mxu0 0
    %2770 = vmatpush1.bf16.msra.mxu0 0
    %2771 = vmatprep.subr.bf16.mxu0 0
    %2772 = vmatpush1.bf16.msra.mxu0 0
    %2773 = vmatprep.subr.bf16.mxu0 0
    %2774 = vmatpush1.bf16.msra.mxu0 0
    %2775 = vmatprep.subr.bf16.mxu0 0
    %2776 = vmatpush1.bf16.msra.mxu0 0
    %2777 = vmatprep.subr.bf16.mxu0 0
    %2778 = vmatpush1.bf16.msra.mxu0 0
    %2779 = vmatprep.subr.bf16.mxu0 0
    %2780 = vmatpush1.bf16.msra.mxu0 0
    %2781 = vmatprep.subr.bf16.mxu0 0
    %2782 = vmatpush1.bf16.msra.mxu0 0
    %2783 = vmatprep.subr.bf16.mxu0 0
    %2784 = vmatpush1.bf16.msra.mxu0 0
    %2785 = vmatprep.mubr.bf16.mxu0 0
    %2786 = vmatmul.mubr.bf16.gmra.mrb[0].mxu0 %v2730
    %v2787 = vpop.f32.mrb[0].mxu0
    %v2788 = vadd.f32 0.0, %v2787
    %v2789 = vpop.f32.mrb[0].mxu0
    %v2790 = vpop.f32.mrb[0].mxu0
    %v2791 = vadd.f32 0.0, %v2790
    %v2792 = vpop.f32.mrb[0].mxu0
    %2793 = vmatprep.mubr.bf16.mxu0 0
    %2794 = vmatmul.mubr.bf16.gmra.mrb[0].mxu0 %v2733
    %v2795 = vpop.f32.mrb[0].mxu0
    %v2796 = vadd.f32 0.0, %v2795
    %v2797 = vpop.f32.mrb[0].mxu0
    %v2798 = vpop.f32.mrb[0].mxu0
    %v2799 = vadd.f32 0.0, %v2798
    %v2800 = vpop.f32.mrb[0].mxu0
    %2801 = vmatprep.mubr.bf16.mxu0 0
    %2802 = vmatmul.mubr.bf16.gmra.mrb[0].mxu0 %v2736
    %v2803 = vpop.f32.mrb[0].mxu0
    %v2804 = vadd.f32 0.0, %v2803
    %v2805 = vpop.f32.mrb[0].mxu0
    %v2806 = vpop.f32.mrb[0].mxu0
    %v2807 = vadd.f32 0.0, %v2806
    %v2808 = vpop.f32.mrb[0].mxu0
    %2809 = vmatprep.mubr.bf16.mxu0 0
    %2810 = vmatmul.mubr.bf16.gmra.mrb[0].mxu0 %v2739
    %v2811 = vpop.f32.mrb[0].mxu0
    %v2812 = vadd.f32 0.0, %v2811
    %v2813 = vpop.f32.mrb[0].mxu0
    %v2814 = vpop.f32.mrb[0].mxu0
    %v2815 = vadd.f32 0.0, %v2814
    %v2816 = vpop.f32.mrb[0].mxu0
    %2817 = vmatprep.mubr.bf16.mxu0 0
    %2818 = vmatmul.mubr.bf16.gmra.mrb[0].mxu0 %v2742
    %v2819 = vpop.f32.mrb[0].mxu0
    %v2820 = vadd.f32 0.0, %v2819
    %v2821 = vpop.f32.mrb[0].mxu0
    %v2822 = vpop.f32.mrb[0].mxu0
    %v2823 = vadd.f32 0.0, %v2822
    %v2824 = vpop.f32.mrb[0].mxu0
    %2825 = vmatprep.mubr.bf16.mxu0 0
    %2826 = vmatmul.mubr.bf16.gmra.mrb[0].mxu0 %v2745
    %v2827 = vpop.f32.mrb[0].mxu0
    %v2828 = vadd.f32 0.0, %v2827
    %v2829 = vpop.f32.mrb[0].mxu0
    %v2830 = vpop.f32.mrb[0].mxu0
    %v2831 = vadd.f32 0.0, %v2830
    %v2832 = vpop.f32.mrb[0].mxu0
    %2833 = vmatprep.mubr.bf16.mxu0 0
    %2834 = vmatmul.mubr.bf16.gmra.mrb[0].mxu0 %v2748
    %v2835 = vpop.f32.mrb[0].mxu0
    %v2836 = vadd.f32 0.0, %v2835
    %v2837 = vpop.f32.mrb[0].mxu0
    %v2838 = vpop.f32.mrb[0].mxu0
    %v2839 = vadd.f32 0.0, %v2838
    %v2840 = vpop.f32.mrb[0].mxu0
    %2841 = vmatprep.mubr.bf16.mxu0 0
    %2842 = vmatmul.mubr.bf16.gmra.mrb[0].mxu0 %v2751
    %v2843 = vpop.f32.mrb[0].mxu0
    %v2844 = vadd.f32 0.0, %v2843
    %v2845 = vpop.f32.mrb[0].mxu0
    %v2846 = vpop.f32.mrb[0].mxu0
    %v2847 = vadd.f32 0.0, %v2846
    %v2848 = vpop.f32.mrb[0].mxu0
    %2849 = vdwg.mxu0
    %v2850 = vadd.f32 %v2658, %v2788
    %v2851 = vadd.f32 %v2659, %v2791
    %v2852 = vadd.f32 %v2660, %v2796
    %v2853 = vadd.f32 %v2661, %v2799
    %v2854 = vadd.f32 %v2662, %v2804
    %v2855 = vadd.f32 %v2663, %v2807
    %v2856 = vadd.f32 %v2664, %v2812
    %v2857 = vadd.f32 %v2665, %v2815
    %v2858 = vadd.f32 %v2666, %v2820
    %v2859 = vadd.f32 %v2667, %v2823
    %v2860 = vadd.f32 %v2668, %v2828
    %v2861 = vadd.f32 %v2669, %v2831
    %v2862 = vadd.f32 %v2670, %v2836
    %v2863 = vadd.f32 %v2671, %v2839
    %v2864 = vadd.f32 %v2672, %v2844
    %v2865 = vadd.f32 %v2673, %v2847
    %v2866 = vld [vmem:[#allocation2 + $0x28] sm:$0x1f]
    %v2867 = vld [vmem:[#allocation2 + $0x58] sm:$0x1f]
    %v2869 = vshrl.u32 %v2674, 16
    %v2871 = vrot.slane %v2869, 4
    %v2872 = vshll.u32 %v2674, 16
    %v2874 = vrot.slane %v2872, 5
    %v2875 = vor.u32 %v2871, %v2874
    %v2876 = vrot.slane %v2196, 4
    %v2877 = vrot.slane %v2192, 5
    %v2878 = vor.u32 %v2876, %v2877
    %v2879 = vsel %vm1557, %v2875, %v2878
    %v2880 = vrot.slane %v2204, 4
    %v2881 = vrot.slane %v2200, 5
    %v2882 = vor.u32 %v2880, %v2881
    %v2883 = vsel %vm1557, %v2878, %v2882
    %v2884 = vrot.slane %v2212, 4
    %v2885 = vrot.slane %v2208, 5
    %v2886 = vor.u32 %v2884, %v2885
    %v2887 = vsel %vm1557, %v2882, %v2886
    %v2889 = vshrl.u32 %v2866, 16
    %v2891 = vrot.slane %v2889, 4
    %v2892 = vshll.u32 %v2866, 16
    %v2894 = vrot.slane %v2892, 5
    %v2895 = vor.u32 %v2891, %v2894
    %v2896 = vsel %vm1557, %v2886, %v2895
    %v2898 = vshrl.u32 %v2675, 16
    %v2900 = vrot.slane %v2898, 4
    %v2901 = vshll.u32 %v2675, 16
    %v2903 = vrot.slane %v2901, 5
    %v2904 = vor.u32 %v2900, %v2903
    %v2905 = vrot.slane %v2232, 4
    %v2906 = vrot.slane %v2228, 5
    %v2907 = vor.u32 %v2905, %v2906
    %v2908 = vsel %vm1557, %v2904, %v2907
    %v2909 = vrot.slane %v2240, 4
    %v2910 = vrot.slane %v2236, 5
    %v2911 = vor.u32 %v2909, %v2910
    %v2912 = vsel %vm1557, %v2907, %v2911
    %v2913 = vrot.slane %v2248, 4
    %v2914 = vrot.slane %v2244, 5
    %v2915 = vor.u32 %v2913, %v2914
    %v2916 = vsel %vm1557, %v2911, %v2915
    %v2918 = vshrl.u32 %v2867, 16
    %v2920 = vrot.slane %v2918, 4
    %v2921 = vshll.u32 %v2867, 16
    %v2923 = vrot.slane %v2921, 5
    %v2924 = vor.u32 %v2920, %v2923
    %v2925 = vsel %vm1557, %v2915, %v2924
    %v2934 = vmul.bf16 %v2879, %v1110
    %v2935 = vmul.bf16 %v2883, %v1111
    %v2936 = vmul.bf16 %v2887, %v1112
    %v2937 = vmul.bf16 %v2896, %v1113
    %v2938 = vmul.bf16 %v2908, %v1114
    %v2939 = vmul.bf16 %v2912, %v1115
    %v2940 = vmul.bf16 %v2916, %v1116
    %v2941 = vmul.bf16 %v2925, %v1117
    %s2942 = scalar_lea.vmem %s5, 192
    %v2943 = vld [vmem:[%s2942] sm:$0xf]
    %v2944 = vld [vmem:[%s2942 + $0x4] sm:$0xf]
    %v2945 = vld [vmem:[%s2942 + $0x8] sm:$0xf]
    %v2946 = vld [vmem:[%s2942 + $0xc] sm:$0xf]
    %v2947 = vld [vmem:[%s2942 + $0x10] sm:$0xf]
    %v2948 = vld [vmem:[%s2942 + $0x14] sm:$0xf]
    %v2955 = vunpack.c.l.b16 %v2943
    %v2956 = vunpack.c.l.b16 %v2944
    %v2957 = vunpack.c.l.b16 %v2945
    %v2958 = vunpack.c.l.b16 %v2946
    %v2959 = vunpack.c.l.b16 %v2947
    %v2960 = vunpack.c.l.b16 %v2948
    %v2961 = vpack.c.b16 %v2956, %v2955
    %v2962 = vpack.c.b16 %v2958, %v2957
    %v2963 = vpack.c.b16 %v2960, %v2959
    %v2968 = vsel %vm776, %v2934, 0
    %v2971 = vsel %vm776, %v2935, 0
    %v2974 = vsel %vm776, %v2936, 0
    %v2977 = vsel %vm776, %v2937, 0
    %v2980 = vsel %vm776, %v2938, 0
    %v2983 = vsel %vm776, %v2939, 0
    %v2986 = vsel %vm776, %v2940, 0
    %v2989 = vsel %vm776, %v2941, 0
    %2991 = vmatprep.subr.bf16.mxu0 0
    %2992 = vmatpush1.bf16.msra.mxu0 %v2961
    %2993 = vmatprep.subr.bf16.mxu0 0
    %2994 = vmatpush1.bf16.msra.mxu0 %v2962
    %2995 = vmatprep.subr.bf16.mxu0 0
    %2996 = vmatpush1.bf16.msra.mxu0 %v2963
    %2997 = vmatprep.subr.bf16.mxu0 0
    %2998 = vmatpush1.bf16.msra.mxu0 0
    %2999 = vmatprep.subr.bf16.mxu0 0
    %3000 = vmatpush1.bf16.msra.mxu0 0
    %3001 = vmatprep.subr.bf16.mxu0 0
    %3002 = vmatpush1.bf16.msra.mxu0 0
    %3003 = vmatprep.subr.bf16.mxu0 0
    %3004 = vmatpush1.bf16.msra.mxu0 0
    %3005 = vmatprep.subr.bf16.mxu0 0
    %3006 = vmatpush1.bf16.msra.mxu0 0
    %3007 = vmatprep.subr.bf16.mxu0 0
    %3008 = vmatpush1.bf16.msra.mxu0 0
    %3009 = vmatprep.subr.bf16.mxu0 0
    %3010 = vmatpush1.bf16.msra.mxu0 0
    %3011 = vmatprep.subr.bf16.mxu0 0
    %3012 = vmatpush1.bf16.msra.mxu0 0
    %3013 = vmatprep.subr.bf16.mxu0 0
    %3014 = vmatpush1.bf16.msra.mxu0 0
    %3015 = vmatprep.subr.bf16.mxu0 0
    %3016 = vmatpush1.bf16.msra.mxu0 0
    %3017 = vmatprep.subr.bf16.mxu0 0
    %3018 = vmatpush1.bf16.msra.mxu0 0
    %3019 = vmatprep.subr.bf16.mxu0 0
    %3020 = vmatpush1.bf16.msra.mxu0 0
    %3021 = vmatprep.subr.bf16.mxu0 0
    %3022 = vmatpush1.bf16.msra.mxu0 0
    %3023 = vmatprep.mubr.bf16.mxu0 0
    %3024 = vmatmul.mubr.bf16.gmra.mrb[0].mxu0 %v2968
    %v3025 = vpop.f32.mrb[0].mxu0
    %v3026 = vadd.f32 0.0, %v3025
    %v3027 = vpop.f32.mrb[0].mxu0
    %v3028 = vpop.f32.mrb[0].mxu0
    %v3029 = vadd.f32 0.0, %v3028
    %v3030 = vpop.f32.mrb[0].mxu0
    %3031 = vmatprep.mubr.bf16.mxu0 0
    %3032 = vmatmul.mubr.bf16.gmra.mrb[0].mxu0 %v2971
    %v3033 = vpop.f32.mrb[0].mxu0
    %v3034 = vadd.f32 0.0, %v3033
    %v3035 = vpop.f32.mrb[0].mxu0
    %v3036 = vpop.f32.mrb[0].mxu0
    %v3037 = vadd.f32 0.0, %v3036
    %v3038 = vpop.f32.mrb[0].mxu0
    %3039 = vmatprep.mubr.bf16.mxu0 0
    %3040 = vmatmul.mubr.bf16.gmra.mrb[0].mxu0 %v2974
    %v3041 = vpop.f32.mrb[0].mxu0
    %v3042 = vadd.f32 0.0, %v3041
    %v3043 = vpop.f32.mrb[0].mxu0
    %v3044 = vpop.f32.mrb[0].mxu0
    %v3045 = vadd.f32 0.0, %v3044
    %v3046 = vpop.f32.mrb[0].mxu0
    %3047 = vmatprep.mubr.bf16.mxu0 0
    %3048 = vmatmul.mubr.bf16.gmra.mrb[0].mxu0 %v2977
    %v3049 = vpop.f32.mrb[0].mxu0
    %v3050 = vadd.f32 0.0, %v3049
    %v3051 = vpop.f32.mrb[0].mxu0
    %v3052 = vpop.f32.mrb[0].mxu0
    %v3053 = vadd.f32 0.0, %v3052
    %v3054 = vpop.f32.mrb[0].mxu0
    %3055 = vmatprep.mubr.bf16.mxu0 0
    %3056 = vmatmul.mubr.bf16.gmra.mrb[0].mxu0 %v2980
    %v3057 = vpop.f32.mrb[0].mxu0
    %v3058 = vadd.f32 0.0, %v3057
    %v3059 = vpop.f32.mrb[0].mxu0
    %v3060 = vpop.f32.mrb[0].mxu0
    %v3061 = vadd.f32 0.0, %v3060
    %v3062 = vpop.f32.mrb[0].mxu0
    %3063 = vmatprep.mubr.bf16.mxu0 0
    %3064 = vmatmul.mubr.bf16.gmra.mrb[0].mxu0 %v2983
    %v3065 = vpop.f32.mrb[0].mxu0
    %v3066 = vadd.f32 0.0, %v3065
    %v3067 = vpop.f32.mrb[0].mxu0
    %v3068 = vpop.f32.mrb[0].mxu0
    %v3069 = vadd.f32 0.0, %v3068
    %v3070 = vpop.f32.mrb[0].mxu0
    %3071 = vmatprep.mubr.bf16.mxu0 0
    %3072 = vmatmul.mubr.bf16.gmra.mrb[0].mxu0 %v2986
    %v3073 = vpop.f32.mrb[0].mxu0
    %v3074 = vadd.f32 0.0, %v3073
    %v3075 = vpop.f32.mrb[0].mxu0
    %v3076 = vpop.f32.mrb[0].mxu0
    %v3077 = vadd.f32 0.0, %v3076
    %v3078 = vpop.f32.mrb[0].mxu0
    %3079 = vmatprep.mubr.bf16.mxu0 0
    %3080 = vmatmul.mubr.bf16.gmra.mrb[0].mxu0 %v2989
    %v3081 = vpop.f32.mrb[0].mxu0
    %v3082 = vadd.f32 0.0, %v3081
    %v3083 = vpop.f32.mrb[0].mxu0
    %v3084 = vpop.f32.mrb[0].mxu0
    %v3085 = vadd.f32 0.0, %v3084
    %v3086 = vpop.f32.mrb[0].mxu0
    %3087 = vdwg.mxu0
    %v3088 = vadd.f32 %v2850, %v3026
    %v3089 = vadd.f32 %v2851, %v3029
    %v3090 = vadd.f32 %v2852, %v3034
    %v3091 = vadd.f32 %v2853, %v3037
    %v3092 = vadd.f32 %v2854, %v3042
    %v3093 = vadd.f32 %v2855, %v3045
    %v3094 = vadd.f32 %v2856, %v3050
    %v3095 = vadd.f32 %v2857, %v3053
    %v3096 = vadd.f32 %v2858, %v3058
    %v3097 = vadd.f32 %v2859, %v3061
    %v3098 = vadd.f32 %v2860, %v3066
    %v3099 = vadd.f32 %v2861, %v3069
    %v3100 = vadd.f32 %v2862, %v3074
    %v3101 = vadd.f32 %v2863, %v3077
    %v3102 = vadd.f32 %v2864, %v3082
    %v3103 = vadd.f32 %v2865, %v3085
    %v3104 = vld [vmem:[%s6] sm:$0x1]
    %v3106 = vlaneseq
    %v3107 = vshrl.u32 %v3106, 7
    %v3108 = vsub.s32 0, %v3107
    %v3109 = vrot.slane %v3104, %v3108
    %v3111 = vadd.f32 %v3088, %v3109
    %v3112 = vadd.f32 %v3089, %v3109
    %v3113 = vadd.f32 %v3090, %v3109
    %v3114 = vadd.f32 %v3091, %v3109
    %v3115 = vadd.f32 %v3092, %v3109
    %v3116 = vadd.f32 %v3093, %v3109
    %v3117 = vadd.f32 %v3094, %v3109
    %v3118 = vadd.f32 %v3095, %v3109
    %v3119 = vadd.f32 %v3096, %v3109
    %v3120 = vadd.f32 %v3097, %v3109
    %v3121 = vadd.f32 %v3098, %v3109
    %v3122 = vadd.f32 %v3099, %v3109
    %v3123 = vadd.f32 %v3100, %v3109
    %v3124 = vadd.f32 %v3101, %v3109
    %v3125 = vadd.f32 %v3102, %v3109
    %v3126 = vadd.f32 %v3103, %v3109
    %v3127 = vmax.f32 %v3111, 0.0
    %v3128 = vmax.f32 %v3112, 0.0
    %v3129 = vmax.f32 %v3113, 0.0
    %v3130 = vmax.f32 %v3114, 0.0
    %v3131 = vmax.f32 %v3115, 0.0
    %v3132 = vmax.f32 %v3116, 0.0
    %v3133 = vmax.f32 %v3117, 0.0
    %v3134 = vmax.f32 %v3118, 0.0
    %v3135 = vmax.f32 %v3119, 0.0
    %v3136 = vmax.f32 %v3120, 0.0
    %v3137 = vmax.f32 %v3121, 0.0
    %v3138 = vmax.f32 %v3122, 0.0
    %v3139 = vmax.f32 %v3123, 0.0
    %v3140 = vmax.f32 %v3124, 0.0
    %v3141 = vmax.f32 %v3125, 0.0
    %v3142 = vmax.f32 %v3126, 0.0
    %v3143 = vpack.c.bf16 %v3128, %v3127
    %v3144 = vpack.c.bf16 %v3130, %v3129
    %v3145 = vpack.c.bf16 %v3132, %v3131
    %v3146 = vpack.c.bf16 %v3134, %v3133
    %v3147 = vpack.c.bf16 %v3136, %v3135
    %v3148 = vpack.c.bf16 %v3138, %v3137
    %v3149 = vpack.c.bf16 %v3140, %v3139
    %v3150 = vpack.c.bf16 %v3142, %v3141
    %v3151 = vld [vmem:[%s7] sm:$0xff]
    %v3152 = vld [vmem:[%s7 + $0x8] sm:$0xff]
    %v3153 = vld [vmem:[%s7 + $0x10] sm:$0xff]
    %v3154 = vld [vmem:[%s7 + $0x18] sm:$0xff]
    %v3155 = vld [vmem:[%s7 + $0x20] sm:$0xff]
    %v3156 = vld [vmem:[%s7 + $0x28] sm:$0xff]
    %v3157 = vld [vmem:[%s8] sm:$0x3]
    %v3159 = vlaneseq
    %v3160 = vshrl.u32 %v3159, 7
    %v3161 = vsub.s32 0, %v3160
    %v3162 = vrot.slane %v3157, %v3161
    %v3163 = vlaneseq
    %v3164 = vshrl.u32 %v3163, 7
    %v3165 = vsub.s32 1, %v3164
    %v3166 = vrot.slane %v3157, %v3165
    %v3175 = vunpack.c.l.b16 %v3151
    %v3176 = vunpack.c.h.b16 %v3151
    %v3177 = vunpack.c.l.b16 %v3152
    %v3178 = vunpack.c.h.b16 %v3152
    %v3179 = vunpack.c.l.b16 %v3153
    %v3180 = vunpack.c.h.b16 %v3153
    %v3181 = vunpack.c.l.b16 %v3154
    %v3182 = vunpack.c.h.b16 %v3154
    %v3183 = vunpack.c.l.b16 %v3155
    %v3184 = vunpack.c.h.b16 %v3155
    %v3185 = vunpack.c.l.b16 %v3156
    %v3186 = vunpack.c.h.b16 %v3156
    %v3187 = vpack.c.b16 %v3177, %v3175
    %v3188 = vpack.c.b16 %v3178, %v3176
    %v3189 = vpack.c.b16 %v3181, %v3179
    %v3190 = vpack.c.b16 %v3182, %v3180
    %v3191 = vpack.c.b16 %v3185, %v3183
    %v3192 = vpack.c.b16 %v3186, %v3184
    %v3200 = vsel %vm776, %v3143, 0
    %v3203 = vsel %vm776, %v3144, 0
    %v3206 = vsel %vm776, %v3145, 0
    %v3209 = vsel %vm776, %v3146, 0
    %v3212 = vsel %vm776, %v3147, 0
    %v3215 = vsel %vm776, %v3148, 0
    %v3218 = vsel %vm776, %v3149, 0
    %v3221 = vsel %vm776, %v3150, 0
    %3223 = vmatprep.subr.bf16.mxu0 %v3188
    %3224 = vmatpush1.bf16.msra.mxu0 %v3187
    %3225 = vmatprep.subr.bf16.mxu0 %v3190
    %3226 = vmatpush1.bf16.msra.mxu0 %v3189
    %3227 = vmatprep.subr.bf16.mxu0 %v3192
    %3228 = vmatpush1.bf16.msra.mxu0 %v3191
    %3229 = vmatprep.subr.bf16.mxu0 0
    %3230 = vmatpush1.bf16.msra.mxu0 0
    %3231 = vmatprep.subr.bf16.mxu0 0
    %3232 = vmatpush1.bf16.msra.mxu0 0
    %3233 = vmatprep.subr.bf16.mxu0 0
    %3234 = vmatpush1.bf16.msra.mxu0 0
    %3235 = vmatprep.subr.bf16.mxu0 0
    %3236 = vmatpush1.bf16.msra.mxu0 0
    %3237 = vmatprep.subr.bf16.mxu0 0
    %3238 = vmatpush1.bf16.msra.mxu0 0
    %3239 = vmatprep.subr.bf16.mxu0 0
    %3240 = vmatpush1.bf16.msra.mxu0 0
    %3241 = vmatprep.subr.bf16.mxu0 0
    %3242 = vmatpush1.bf16.msra.mxu0 0
    %3243 = vmatprep.subr.bf16.mxu0 0
    %3244 = vmatpush1.bf16.msra.mxu0 0
    %3245 = vmatprep.subr.bf16.mxu0 0
    %3246 = vmatpush1.bf16.msra.mxu0 0
    %3247 = vmatprep.subr.bf16.mxu0 0
    %3248 = vmatpush1.bf16.msra.mxu0 0
    %3249 = vmatprep.subr.bf16.mxu0 0
    %3250 = vmatpush1.bf16.msra.mxu0 0
    %3251 = vmatprep.subr.bf16.mxu0 0
    %3252 = vmatpush1.bf16.msra.mxu0 0
    %3253 = vmatprep.subr.bf16.mxu0 0
    %3254 = vmatpush1.bf16.msra.mxu0 0
    %3255 = vmatprep.mubr.bf16.mxu0 0
    %3256 = vmatmul.mubr.bf16.gmra.mrb[0].mxu0 %v3200
    %v3257 = vpop.f32.mrb[0].mxu0
    %v3258 = vadd.f32 %v3162, %v3257
    %v3259 = vpop.f32.mrb[0].mxu0
    %v3260 = vadd.f32 %v3166, %v3259
    %v3261 = vpop.f32.mrb[0].mxu0
    %v3262 = vadd.f32 %v3162, %v3261
    %v3263 = vpop.f32.mrb[0].mxu0
    %v3264 = vadd.f32 %v3166, %v3263
    %3265 = vmatprep.mubr.bf16.mxu0 0
    %3266 = vmatmul.mubr.bf16.gmra.mrb[0].mxu0 %v3203
    %v3267 = vpop.f32.mrb[0].mxu0
    %v3268 = vadd.f32 %v3162, %v3267
    %v3269 = vpop.f32.mrb[0].mxu0
    %v3270 = vadd.f32 %v3166, %v3269
    %v3271 = vpop.f32.mrb[0].mxu0
    %v3272 = vadd.f32 %v3162, %v3271
    %v3273 = vpop.f32.mrb[0].mxu0
    %v3274 = vadd.f32 %v3166, %v3273
    %3275 = vmatprep.mubr.bf16.mxu0 0
    %3276 = vmatmul.mubr.bf16.gmra.mrb[0].mxu0 %v3206
    %v3277 = vpop.f32.mrb[0].mxu0
    %v3278 = vadd.f32 %v3162, %v3277
    %v3279 = vpop.f32.mrb[0].mxu0
    %v3280 = vadd.f32 %v3166, %v3279
    %v3281 = vpop.f32.mrb[0].mxu0
    %v3282 = vadd.f32 %v3162, %v3281
    %v3283 = vpop.f32.mrb[0].mxu0
    %v3284 = vadd.f32 %v3166, %v3283
    %3285 = vmatprep.mubr.bf16.mxu0 0
    %3286 = vmatmul.mubr.bf16.gmra.mrb[0].mxu0 %v3209
    %v3287 = vpop.f32.mrb[0].mxu0
    %v3288 = vadd.f32 %v3162, %v3287
    %v3289 = vpop.f32.mrb[0].mxu0
    %v3290 = vadd.f32 %v3166, %v3289
    %v3291 = vpop.f32.mrb[0].mxu0
    %v3292 = vadd.f32 %v3162, %v3291
    %v3293 = vpop.f32.mrb[0].mxu0
    %v3294 = vadd.f32 %v3166, %v3293
    %3295 = vmatprep.mubr.bf16.mxu0 0
    %3296 = vmatmul.mubr.bf16.gmra.mrb[0].mxu0 %v3212
    %v3297 = vpop.f32.mrb[0].mxu0
    %v3298 = vadd.f32 %v3162, %v3297
    %v3299 = vpop.f32.mrb[0].mxu0
    %v3300 = vadd.f32 %v3166, %v3299
    %v3301 = vpop.f32.mrb[0].mxu0
    %v3302 = vadd.f32 %v3162, %v3301
    %v3303 = vpop.f32.mrb[0].mxu0
    %v3304 = vadd.f32 %v3166, %v3303
    %3305 = vmatprep.mubr.bf16.mxu0 0
    %3306 = vmatmul.mubr.bf16.gmra.mrb[0].mxu0 %v3215
    %v3307 = vpop.f32.mrb[0].mxu0
    %v3308 = vadd.f32 %v3162, %v3307
    %v3309 = vpop.f32.mrb[0].mxu0
    %v3310 = vadd.f32 %v3166, %v3309
    %v3311 = vpop.f32.mrb[0].mxu0
    %v3312 = vadd.f32 %v3162, %v3311
    %v3313 = vpop.f32.mrb[0].mxu0
    %v3314 = vadd.f32 %v3166, %v3313
    %3315 = vmatprep.mubr.bf16.mxu0 0
    %3316 = vmatmul.mubr.bf16.gmra.mrb[0].mxu0 %v3218
    %v3317 = vpop.f32.mrb[0].mxu0
    %v3318 = vadd.f32 %v3162, %v3317
    %v3319 = vpop.f32.mrb[0].mxu0
    %v3320 = vadd.f32 %v3166, %v3319
    %v3321 = vpop.f32.mrb[0].mxu0
    %v3322 = vadd.f32 %v3162, %v3321
    %v3323 = vpop.f32.mrb[0].mxu0
    %v3324 = vadd.f32 %v3166, %v3323
    %3325 = vmatprep.mubr.bf16.mxu0 0
    %3326 = vmatmul.mubr.bf16.gmra.mrb[0].mxu0 %v3221
    %v3327 = vpop.f32.mrb[0].mxu0
    %v3328 = vadd.f32 %v3162, %v3327
    %v3329 = vpop.f32.mrb[0].mxu0
    %v3330 = vadd.f32 %v3166, %v3329
    %v3331 = vpop.f32.mrb[0].mxu0
    %v3332 = vadd.f32 %v3162, %v3331
    %v3333 = vpop.f32.mrb[0].mxu0
    %v3334 = vadd.f32 %v3166, %v3333
    %3335 = vdwg.mxu0
    %v3336 = vld [vmem:[%s9] sm:$0xff]
    %v3337 = vld [vmem:[%s9 + $0x8] sm:$0xff]
    %v3338 = vld [vmem:[%s9 + $0x10] sm:$0xff]
    %v3339 = vld [vmem:[%s9 + $0x18] sm:$0xff]
    %v3340 = vld [vmem:[%s10] sm:$0x3]
    %v3342 = vlaneseq
    %v3343 = vshrl.u32 %v3342, 7
    %v3344 = vsub.s32 0, %v3343
    %v3345 = vrot.slane %v3340, %v3344
    %v3346 = vlaneseq
    %v3347 = vshrl.u32 %v3346, 7
    %v3348 = vsub.s32 1, %v3347
    %v3349 = vrot.slane %v3340, %v3348
    %v3356 = vunpack.c.l.b16 %v3336
    %v3357 = vunpack.c.h.b16 %v3336
    %v3358 = vunpack.c.l.b16 %v3337
    %v3359 = vunpack.c.h.b16 %v3337
    %v3360 = vunpack.c.l.b16 %v3338
    %v3361 = vunpack.c.h.b16 %v3338
    %v3362 = vunpack.c.l.b16 %v3339
    %v3363 = vunpack.c.h.b16 %v3339
    %v3364 = vpack.c.b16 %v3358, %v3356
    %v3365 = vpack.c.b16 %v3359, %v3357
    %v3366 = vpack.c.b16 %v3362, %v3360
    %v3367 = vpack.c.b16 %v3363, %v3361
    %3372 = vmatprep.subr.bf16.mxu0 %v3365
    %3373 = vmatpush1.bf16.msra.mxu0 %v3364
    %3374 = vmatprep.subr.bf16.mxu0 %v3367
    %3375 = vmatpush1.bf16.msra.mxu0 %v3366
    %3376 = vmatprep.subr.bf16.mxu0 0
    %3377 = vmatpush1.bf16.msra.mxu0 0
    %3378 = vmatprep.subr.bf16.mxu0 0
    %3379 = vmatpush1.bf16.msra.mxu0 0
    %3380 = vmatprep.subr.bf16.mxu0 0
    %3381 = vmatpush1.bf16.msra.mxu0 0
    %3382 = vmatprep.subr.bf16.mxu0 0
    %3383 = vmatpush1.bf16.msra.mxu0 0
    %3384 = vmatprep.subr.bf16.mxu0 0
    %3385 = vmatpush1.bf16.msra.mxu0 0
    %3386 = vmatprep.subr.bf16.mxu0 0
    %3387 = vmatpush1.bf16.msra.mxu0 0
    %3388 = vmatprep.subr.bf16.mxu0 0
    %3389 = vmatpush1.bf16.msra.mxu0 0
    %3390 = vmatprep.subr.bf16.mxu0 0
    %3391 = vmatpush1.bf16.msra.mxu0 0
    %3392 = vmatprep.subr.bf16.mxu0 0
    %3393 = vmatpush1.bf16.msra.mxu0 0
    %3394 = vmatprep.subr.bf16.mxu0 0
    %3395 = vmatpush1.bf16.msra.mxu0 0
    %3396 = vmatprep.subr.bf16.mxu0 0
    %3397 = vmatpush1.bf16.msra.mxu0 0
    %3398 = vmatprep.subr.bf16.mxu0 0
    %3399 = vmatpush1.bf16.msra.mxu0 0
    %3400 = vmatprep.subr.bf16.mxu0 0
    %3401 = vmatpush1.bf16.msra.mxu0 0
    %3402 = vmatprep.subr.bf16.mxu0 0
    %3403 = vmatpush1.bf16.msra.mxu0 0
    %3404 = vmatprep.mubr.bf16.mxu0 0
    %3405 = vmatmul.mubr.bf16.gmra.mrb[0].mxu0 %v640
    %v3406 = vpop.f32.mrb[0].mxu0
    %v3407 = vadd.f32 %v3345, %v3406
    %v3408 = vpop.f32.mrb[0].mxu0
    %v3409 = vadd.f32 %v3349, %v3408
    %v3410 = vpop.f32.mrb[0].mxu0
    %v3411 = vadd.f32 %v3345, %v3410
    %v3412 = vpop.f32.mrb[0].mxu0
    %v3413 = vadd.f32 %v3349, %v3412
    %3414 = vmatprep.mubr.bf16.mxu0 0
    %3415 = vmatmul.mubr.bf16.gmra.mrb[0].mxu0 %v643
    %v3416 = vpop.f32.mrb[0].mxu0
    %v3417 = vadd.f32 %v3345, %v3416
    %v3418 = vpop.f32.mrb[0].mxu0
    %v3419 = vadd.f32 %v3349, %v3418
    %v3420 = vpop.f32.mrb[0].mxu0
    %v3421 = vadd.f32 %v3345, %v3420
    %v3422 = vpop.f32.mrb[0].mxu0
    %v3423 = vadd.f32 %v3349, %v3422
    %3424 = vmatprep.mubr.bf16.mxu0 0
    %3425 = vmatmul.mubr.bf16.gmra.mrb[0].mxu0 %v646
    %v3426 = vpop.f32.mrb[0].mxu0
    %v3427 = vadd.f32 %v3345, %v3426
    %v3428 = vpop.f32.mrb[0].mxu0
    %v3429 = vadd.f32 %v3349, %v3428
    %v3430 = vpop.f32.mrb[0].mxu0
    %v3431 = vadd.f32 %v3345, %v3430
    %v3432 = vpop.f32.mrb[0].mxu0
    %v3433 = vadd.f32 %v3349, %v3432
    %3434 = vmatprep.mubr.bf16.mxu0 0
    %3435 = vmatmul.mubr.bf16.gmra.mrb[0].mxu0 %v649
    %v3436 = vpop.f32.mrb[0].mxu0
    %v3437 = vadd.f32 %v3345, %v3436
    %v3438 = vpop.f32.mrb[0].mxu0
    %v3439 = vadd.f32 %v3349, %v3438
    %v3440 = vpop.f32.mrb[0].mxu0
    %v3441 = vadd.f32 %v3345, %v3440
    %v3442 = vpop.f32.mrb[0].mxu0
    %v3443 = vadd.f32 %v3349, %v3442
    %3444 = vmatprep.mubr.bf16.mxu0 0
    %3445 = vmatmul.mubr.bf16.gmra.mrb[0].mxu0 %v652
    %v3446 = vpop.f32.mrb[0].mxu0
    %v3447 = vadd.f32 %v3345, %v3446
    %v3448 = vpop.f32.mrb[0].mxu0
    %v3449 = vadd.f32 %v3349, %v3448
    %v3450 = vpop.f32.mrb[0].mxu0
    %v3451 = vadd.f32 %v3345, %v3450
    %v3452 = vpop.f32.mrb[0].mxu0
    %v3453 = vadd.f32 %v3349, %v3452
    %3454 = vmatprep.mubr.bf16.mxu0 0
    %3455 = vmatmul.mubr.bf16.gmra.mrb[0].mxu0 %v655
    %v3456 = vpop.f32.mrb[0].mxu0
    %v3457 = vadd.f32 %v3345, %v3456
    %v3458 = vpop.f32.mrb[0].mxu0
    %v3459 = vadd.f32 %v3349, %v3458
    %v3460 = vpop.f32.mrb[0].mxu0
    %v3461 = vadd.f32 %v3345, %v3460
    %v3462 = vpop.f32.mrb[0].mxu0
    %v3463 = vadd.f32 %v3349, %v3462
    %3464 = vmatprep.mubr.bf16.mxu0 0
    %3465 = vmatmul.mubr.bf16.gmra.mrb[0].mxu0 %v658
    %v3466 = vpop.f32.mrb[0].mxu0
    %v3467 = vadd.f32 %v3345, %v3466
    %v3468 = vpop.f32.mrb[0].mxu0
    %v3469 = vadd.f32 %v3349, %v3468
    %v3470 = vpop.f32.mrb[0].mxu0
    %v3471 = vadd.f32 %v3345, %v3470
    %v3472 = vpop.f32.mrb[0].mxu0
    %v3473 = vadd.f32 %v3349, %v3472
    %3474 = vmatprep.mubr.bf16.mxu0 0
    %3475 = vmatmul.mubr.bf16.gmra.mrb[0].mxu0 %v661
    %v3476 = vpop.f32.mrb[0].mxu0
    %v3477 = vadd.f32 %v3345, %v3476
    %v3478 = vpop.f32.mrb[0].mxu0
    %v3479 = vadd.f32 %v3349, %v3478
    %v3480 = vpop.f32.mrb[0].mxu0
    %v3481 = vadd.f32 %v3345, %v3480
    %v3482 = vpop.f32.mrb[0].mxu0
    %v3483 = vadd.f32 %v3349, %v3482
    %3484 = vdwg.mxu0
    %v3485 = vadd.f32 %v3258, %v3407
    %v3486 = vadd.f32 %v3260, %v3409
    %v3487 = vadd.f32 %v3262, %v3411
    %v3488 = vadd.f32 %v3264, %v3413
    %v3489 = vadd.f32 %v3268, %v3417
    %v3490 = vadd.f32 %v3270, %v3419
    %v3491 = vadd.f32 %v3272, %v3421
    %v3492 = vadd.f32 %v3274, %v3423
    %v3493 = vadd.f32 %v3278, %v3427
    %v3494 = vadd.f32 %v3280, %v3429
    %v3495 = vadd.f32 %v3282, %v3431
    %v3496 = vadd.f32 %v3284, %v3433
    %v3497 = vadd.f32 %v3288, %v3437
    %v3498 = vadd.f32 %v3290, %v3439
    %v3499 = vadd.f32 %v3292, %v3441
    %v3500 = vadd.f32 %v3294, %v3443
    %v3501 = vadd.f32 %v3298, %v3447
    %v3502 = vadd.f32 %v3300, %v3449
    %v3503 = vadd.f32 %v3302, %v3451
    %v3504 = vadd.f32 %v3304, %v3453
    %v3505 = vadd.f32 %v3308, %v3457
    %v3506 = vadd.f32 %v3310, %v3459
    %v3507 = vadd.f32 %v3312, %v3461
    %v3508 = vadd.f32 %v3314, %v3463
    %v3509 = vadd.f32 %v3318, %v3467
    %v3510 = vadd.f32 %v3320, %v3469
    %v3511 = vadd.f32 %v3322, %v3471
    %v3512 = vadd.f32 %v3324, %v3473
    %v3513 = vadd.f32 %v3328, %v3477
    %v3514 = vadd.f32 %v3330, %v3479
    %v3515 = vadd.f32 %v3332, %v3481
    %v3516 = vadd.f32 %v3334, %v3483
    %v3517 = vmax.f32 %v3485, 0.0
    %v3518 = vmax.f32 %v3486, 0.0
    %v3519 = vmax.f32 %v3487, 0.0
    %v3520 = vmax.f32 %v3488, 0.0
    %v3521 = vmax.f32 %v3489, 0.0
    %v3522 = vmax.f32 %v3490, 0.0
    %v3523 = vmax.f32 %v3491, 0.0
    %v3524 = vmax.f32 %v3492, 0.0
    %v3525 = vmax.f32 %v3493, 0.0
    %v3526 = vmax.f32 %v3494, 0.0
    %v3527 = vmax.f32 %v3495, 0.0
    %v3528 = vmax.f32 %v3496, 0.0
    %v3529 = vmax.f32 %v3497, 0.0
    %v3530 = vmax.f32 %v3498, 0.0
    %v3531 = vmax.f32 %v3499, 0.0
    %v3532 = vmax.f32 %v3500, 0.0
    %v3533 = vmax.f32 %v3501, 0.0
    %v3534 = vmax.f32 %v3502, 0.0
    %v3535 = vmax.f32 %v3503, 0.0
    %v3536 = vmax.f32 %v3504, 0.0
    %v3537 = vmax.f32 %v3505, 0.0
    %v3538 = vmax.f32 %v3506, 0.0
    %v3539 = vmax.f32 %v3507, 0.0
    %v3540 = vmax.f32 %v3508, 0.0
    %v3541 = vmax.f32 %v3509, 0.0
    %v3542 = vmax.f32 %v3510, 0.0
    %v3543 = vmax.f32 %v3511, 0.0
    %v3544 = vmax.f32 %v3512, 0.0
    %v3545 = vmax.f32 %v3513, 0.0
    %v3546 = vmax.f32 %v3514, 0.0
    %v3547 = vmax.f32 %v3515, 0.0
    %v3548 = vmax.f32 %v3516, 0.0
    %v3549 = vadd.f32 %v3517, %v3519
    %v3550 = vadd.f32 %v3549, %v3521
    %v3551 = vadd.f32 %v3550, %v3523
    %v3552 = vadd.f32 %v3551, %v3525
    %v3553 = vadd.f32 %v3552, %v3527
    %v3554 = vadd.f32 %v3553, %v3529
    %v3555 = vadd.f32 %v3554, %v3531
    %v3556 = vrot.slane %v3555, 4
    %v3557 = vadd.f32 %v3555, %v3556
    %v3558 = vrot.slane %v3557, 2
    %v3559 = vadd.f32 %v3557, %v3558
    %v3560 = vrot.slane %v3559, 1
    %v3561 = vadd.f32 %v3559, %v3560
    %vm3562 = vcmask 523264
    %v3563 = vsel %vm3562, %v3518, 0.0
    %v3564 = vsel %vm3562, %v3520, 0.0
    %v3565 = vadd.f32 %v3563, %v3564
    %v3566 = vsel %vm3562, %v3522, 0.0
    %v3567 = vadd.f32 %v3565, %v3566
    %v3568 = vsel %vm3562, %v3524, 0.0
    %v3569 = vadd.f32 %v3567, %v3568
    %v3570 = vsel %vm3562, %v3526, 0.0
    %v3571 = vadd.f32 %v3569, %v3570
    %v3572 = vsel %vm3562, %v3528, 0.0
    %v3573 = vadd.f32 %v3571, %v3572
    %v3574 = vsel %vm3562, %v3530, 0.0
    %v3575 = vadd.f32 %v3573, %v3574
    %v3576 = vsel %vm3562, %v3532, 0.0
    %v3577 = vadd.f32 %v3575, %v3576
    %v3578 = vrot.slane %v3577, 4
    %v3579 = vadd.f32 %v3577, %v3578
    %v3580 = vrot.slane %v3579, 2
    %v3581 = vadd.f32 %v3579, %v3580
    %v3582 = vrot.slane %v3581, 1
    %v3583 = vadd.f32 %v3581, %v3582
    %v3584 = vadd.f32 %v3533, %v3535
    %v3585 = vadd.f32 %v3584, %v3537
    %v3586 = vadd.f32 %v3585, %v3539
    %v3587 = vadd.f32 %v3586, %v3541
    %v3588 = vadd.f32 %v3587, %v3543
    %v3589 = vadd.f32 %v3588, %v3545
    %v3590 = vadd.f32 %v3589, %v3547
    %v3591 = vrot.slane %v3590, 4
    %v3592 = vadd.f32 %v3590, %v3591
    %v3593 = vrot.slane %v3592, 2
    %v3594 = vadd.f32 %v3592, %v3593
    %v3595 = vrot.slane %v3594, 1
    %v3596 = vadd.f32 %v3594, %v3595
    %v3597 = vsel %vm3562, %v3534, 0.0
    %v3598 = vsel %vm3562, %v3536, 0.0
    %v3599 = vadd.f32 %v3597, %v3598
    %v3600 = vsel %vm3562, %v3538, 0.0
    %v3601 = vadd.f32 %v3599, %v3600
    %v3602 = vsel %vm3562, %v3540, 0.0
    %v3603 = vadd.f32 %v3601, %v3602
    %v3604 = vsel %vm3562, %v3542, 0.0
    %v3605 = vadd.f32 %v3603, %v3604
    %v3606 = vsel %vm3562, %v3544, 0.0
    %v3607 = vadd.f32 %v3605, %v3606
    %v3608 = vsel %vm3562, %v3546, 0.0
    %v3609 = vadd.f32 %v3607, %v3608
    %v3610 = vsel %vm3562, %v3548, 0.0
    %v3611 = vadd.f32 %v3609, %v3610
    %v3612 = vrot.slane %v3611, 4
    %v3613 = vadd.f32 %v3611, %v3612
    %v3614 = vrot.slane %v3613, 2
    %v3615 = vadd.f32 %v3613, %v3614
    %v3616 = vrot.slane %v3615, 1
    %v3617 = vadd.f32 %v3615, %v3616
    %v3618 = vrcp.pop 64.0
    %v3619 = vmul.f32 %v3561, %v3618
    %v3620 = vmul.f32 %v3583, %v3618
    %v3621 = vmul.f32 %v3596, %v3618
    %v3622 = vmul.f32 %v3617, %v3618
    %v3623 = vld [vmem:[%s11] sm:$0x3]
    %v3625 = vlaneseq
    %v3626 = vshrl.u32 %v3625, 7
    %v3627 = vsub.s32 0, %v3626
    %v3628 = vrot.slane %v3623, %v3627
    %v3629 = vlaneseq
    %v3630 = vshrl.u32 %v3629, 7
    %v3631 = vsub.s32 1, %v3630
    %v3632 = vrot.slane %v3623, %v3631
    %v3635 = vmul.f32 %v3619, %v3628
    %v3636 = vmul.f32 %v3620, %v3632
    %v3637 = vmul.f32 %v3621, %v3628
    %v3638 = vmul.f32 %v3622, %v3632
    %v3639 = vld [vmem:[%s12] sm:$0x3]
    %v3641 = vlaneseq
    %v3642 = vshrl.u32 %v3641, 7
    %v3643 = vsub.s32 0, %v3642
    %v3644 = vrot.slane %v3639, %v3643
    %v3645 = vlaneseq
    %v3646 = vshrl.u32 %v3645, 7
    %v3647 = vsub.s32 1, %v3646
    %v3648 = vrot.slane %v3639, %v3647
    %v3651 = vadd.f32 %v3635, %v3644
    %v3652 = vadd.f32 %v3636, %v3648
    %v3653 = vadd.f32 %v3637, %v3644
    %v3654 = vadd.f32 %v3638, %v3648
    %v3659 = vcombine.low %v3651, %v3652
    %v3661 = vunpack.c.l.s4 1983009808
    %v3662 = vunpack.c.0.s8 %v3661
    %v3663 = vlaneseq
    %v3664 = vshrl.u32 %v3663, 7
    %v3665 = vsub.s32 %v3662, %v3664
    %v3666 = vrot.slane %v3659, %v3665
    %v3667 = vcombine.low %v3653, %v3654
    %v3669 = vunpack.c.l.s4 1983009808
    %v3670 = vunpack.c.0.s8 %v3669
    %v3671 = vlaneseq
    %v3672 = vshrl.u32 %v3671, 7
    %v3673 = vsub.s32 %v3670, %v3672
    %v3674 = vrot.slane %v3667, %v3673
    %vm3675 = vcmask 1044484
    %v3676 = vsel %vm3675, %v3666, %v3666
    %vm3677 = vcmask 1046534
    %v3678 = vsel %vm3677, %v3666, %v3676
    %v3679 = vrot.slane %v3674, 7
    %vm3680 = vcmask 1041409
    %v3681 = vsel %vm3680, %v3679, %v3678
    %vm3682 = vcmask 1043459
    %v3683 = vsel %vm3682, %v3679, %v3681
    %vm3684 = vcmask 1045509
    %v3685 = vsel %vm3684, %v3679, %v3683
    %vm3686 = vcmask 1047559
    %v3687 = vsel %vm3686, %v3679, %v3685
    %vm3689 = vcmask 519170
    %vm3690 = vmor %vm3689, %vm248
    %3691 = vst.msk [vmem:[#allocation3] sm:$0xf] %vm3690, %v3687
    // Predicated region
    $region54: #{reslv2_forward.1} parent=1 // pred_check
      _
    $region55: #{reslv2_forward.1} parent=1 // pred_check_branch
      %3693 = sbr.rel (0) target = $region57
    $region56: #{reslv2_forward.1} parent=1 // pred_region
      %s3695 = ssub.s32 64, 64
      %3696 = vsyncadd [#allocation4], %s3695
      %s3698 = sshll.u32 [#allocation3], 4
      %s3699 = int_to_ptr.vmem [resolvable:$true] %s3698
      %3701 = dma.vmem_to_hbm [thread:$0]  %s3699, 64, %s13, [#allocation4]
    $region57: #{reslv2_forward.1} parent=1 // pred_fallthru
      _
    // Predicated region
    $region58: #{reslv2_forward.1} parent=1 // pred_check
      _
    $region59: #{reslv2_forward.1} parent=1 // pred_check_branch
      %3703 = sbr.rel (0) target = $region61
    $region60: #{reslv2_forward.1} parent=1 // pred_region
      %3704 = dma.done [#allocation4], 64
    $region61: #{reslv2_forward.1} parent=1 // pred_fallthru
      _
    %3705 = vsyncpa [#allocation4], 1

</llo_original>
